<compile_context>
chip_gen: v7x
topology: tpu7x:2x2x1
jax: 0.10.0
libtpu: 0.0.40
codegen_flags: <defaults>
</compile_context>

<pallas_src>
import math
import numpy as np
import jax
import jax.numpy as jnp
from jax.experimental import pallas as pl
from jax.experimental.pallas import tpu as pltpu

BN_EPS = 1e-5
MM_DTYPE = jnp.bfloat16      # MXU operand dtype; accumulation stays float32
LANE = 128


def _round_up(x, m):
    return ((x + m - 1) // m) * m


# ------------------------------ Pallas kernel ------------------------------ #
def _scnn_kernel(x_ref, w1_ref, w2_ref, w3_ref, isftT_ref, sftT_ref, isftm_ref,
                 fc1w_ref, fc1b_ref, g1_ref, be1_ref,
                 fc2w_ref, fc2b_ref, g2_ref, be2_ref,
                 fc3w_ref, fc3b_ref, out_ref):
    Kp = x_ref.shape[2]
    isftT = isftT_ref[...]          # (Kp, Pp) bf16 : coeff -> grid (transposed)
    sftT = sftT_ref[...]            # (Pp, Kp) bf16 : grid  -> coeff (transposed)

    def sphconv(h3, w):
        # h3: (B, Ci, Kp) f32, w: (Co, Ci, Kp) f32 -> (B, Co, Kp) f32
        # Tiny per-coefficient channel contraction: keep it on the VPU.
        return jnp.sum(h3[:, None, :, :] * w[None, :, :, :], axis=2)

    def nonlin(h3):
        # rows (B*C) on sublanes, coeffs/grid on lanes -> two MXU matmuls.
        b, c, _ = h3.shape
        h2 = h3.reshape(b * c, Kp)
        t = jnp.dot(h2.astype(MM_DTYPE), isftT,
                    preferred_element_type=jnp.float32)      # (B*C, Pp)
        t = jnp.maximum(t, 0.0)
        g = jnp.dot(t.astype(MM_DTYPE), sftT,
                    preferred_element_type=jnp.float32)      # (B*C, Kp)
        return g.reshape(b, c, Kp)

    h = nonlin(sphconv(x_ref[...], w1_ref[...]))              # (B, 16, Kp)
    h = nonlin(sphconv(h, w2_ref[...]))                       # (B, 32, Kp)
    h = nonlin(sphconv(h, w3_ref[...]))                       # (B, 64, Kp)

    # global pooling: mean_p(isft @ h) == <h, mean_p isft>_k (mean precomputed)
    pooled = jnp.sum(h * isftm_ref[...][None, :, :], axis=-1)  # (B, 64) f32

    def bn_relu(z, gamma, beta):
        # training-mode BatchNorm1d (batch stats, biased variance), f32 on VPU
        mu = jnp.mean(z, axis=0, keepdims=True)
        var = jnp.mean((z - mu) ** 2, axis=0, keepdims=True)
        zn = (z - mu) * jax.lax.rsqrt(var + BN_EPS) * gamma + beta
        return jnp.maximum(zn, 0.0)

    z = jnp.dot(pooled.astype(MM_DTYPE), fc1w_ref[...],
                preferred_element_type=jnp.float32) + fc1b_ref[...]
    z = bn_relu(z, g1_ref[...], be1_ref[...])
    z = jnp.dot(z.astype(MM_DTYPE), fc2w_ref[...],
                preferred_element_type=jnp.float32) + fc2b_ref[...]
    z = bn_relu(z, g2_ref[...], be2_ref[...])
    z = jnp.dot(z.astype(MM_DTYPE), fc3w_ref[...],
                preferred_element_type=jnp.float32) + fc3b_ref[...]
    out_ref[...] = z                                           # (B, Np) lane-dense


def scnn_forward(x, kparams, n_out):
    Kp = kparams[0].shape[-1]          # padded coefficient width
    Np = kparams[-2].shape[-1]         # padded fc3 output width
    B, _, K = x.shape
    x_p = jnp.pad(x.astype(jnp.float32), ((0, 0), (0, 0), (0, Kp - K)))
    vmem = pl.BlockSpec(memory_space=pltpu.MemorySpace.VMEM)
    out = pl.pallas_call(
        _scnn_kernel,
        out_shape=jax.ShapeDtypeStruct((B, Np), jnp.float32),
        in_specs=[vmem] * (1 + len(kparams)),
        out_specs=vmem,
    )(x_p, *kparams)
    return out[:, :n_out]


# ------------------------------ glue / params ------------------------------ #
def make_ls(l_max):
    n_coeffs = sum(2 * l + 1 for l in range(0, l_max + 1, 2))
    ls = np.zeros(n_coeffs, dtype=np.int64)
    for l in range(0, l_max + 1, 2):
        for m in range(-l, l + 1):
            ls[int(0.5 * l * (l + 1) + m)] = l
    return ls, n_coeffs


def expand_sph_weights(w, ls):
    # w: (c_out, c_in, l_max/2 + 1) -> (c_out, c_in, K) with sqrt(pi/(2l+1)) folded in
    scale = np.sqrt(math.pi / (2.0 * ls + 1.0)).astype(np.float32)
    w_exp = np.asarray(w)[:, :, ls // 2]
    return (w_exp * scale[None, None, :]).astype(np.float32)


def init_raw_params(key, n_in, n_out, l_max, n_pts):
    ls, K = make_ls(l_max)
    nl = l_max // 2 + 1
    ks = jax.random.split(key, 11)

    def u01(k, shape):
        return jax.random.uniform(k, shape, dtype=jnp.float32)

    def lin(kw, kb, fan_in, fan_out):
        bound = 1.0 / math.sqrt(fan_in)
        w = jax.random.uniform(kw, (fan_out, fan_in), jnp.float32, -bound, bound)
        b = jax.random.uniform(kb, (fan_out,), jnp.float32, -bound, bound)
        return w, b

    w1e = jnp.asarray(expand_sph_weights(u01(ks[0], (16, n_in, nl)), ls))
    w2e = jnp.asarray(expand_sph_weights(u01(ks[1], (32, 16, nl)), ls))
    w3e = jnp.asarray(expand_sph_weights(u01(ks[2], (64, 32, nl)), ls))

    isft = jax.random.normal(ks[3], (n_pts, K), jnp.float32) / math.sqrt(K)
    sft = jax.random.normal(ks[4], (K, n_pts), jnp.float32) / math.sqrt(n_pts)

    fc1w, fc1b = lin(ks[5], ks[6], 64, 128)
    fc2w, fc2b = lin(ks[7], ks[8], 128, 128)
    fc3w, fc3b = lin(ks[9], ks[10], 128, n_out)

    raw = dict(
        w1e=w1e, w2e=w2e, w3e=w3e, isft=isft, sft=sft,
        fc1w=fc1w, fc1b=fc1b, fc2w=fc2w, fc2b=fc2b, fc3w=fc3w, fc3b=fc3b,
        g1=jnp.ones((1, 128), jnp.float32), be1=jnp.zeros((1, 128), jnp.float32),
        g2=jnp.ones((1, 128), jnp.float32), be2=jnp.zeros((1, 128), jnp.float32),
    )
    return raw, K


def prepare_kernel_params(raw, K, n_pts, n_out):
    """Pad to lane width 128, pre-transpose, and cast MXU operands to bf16."""
    Kp = _round_up(K, LANE)
    Pp = _round_up(n_pts, LANE)
    Np = _round_up(n_out, LANE)

    def pad_last(a, new_last):
        pad = [(0, 0)] * (a.ndim - 1) + [(0, new_last - a.shape[-1])]
        return jnp.pad(a, pad)

    w1e = pad_last(raw['w1e'], Kp)
    w2e = pad_last(raw['w2e'], Kp)
    w3e = pad_last(raw['w3e'], Kp)

    isftT = (jnp.zeros((Kp, Pp), jnp.float32)
             .at[:K, :n_pts].set(raw['isft'].T)).astype(MM_DTYPE)
    sftT = (jnp.zeros((Pp, Kp), jnp.float32)
            .at[:n_pts, :K].set(raw['sft'].T)).astype(MM_DTYPE)
    isft_mean = (jnp.zeros((1, Kp), jnp.float32)
                 .at[0, :K].set(jnp.mean(raw['isft'], axis=0)))

    fc1w = raw['fc1w'].T.astype(MM_DTYPE)                     # (64, 128)
    fc2w = raw['fc2w'].T.astype(MM_DTYPE)                     # (128, 128)
    fc3w = (jnp.zeros((128, Np), jnp.float32)
            .at[:, :n_out].set(raw['fc3w'].T)).astype(MM_DTYPE)
    fc1b = raw['fc1b'].reshape(1, -1)
    fc2b = raw['fc2b'].reshape(1, -1)
    fc3b = jnp.zeros((1, Np), jnp.float32).at[0, :n_out].set(raw['fc3b'])

    return (w1e, w2e, w3e, isftT, sftT, isft_mean,
            fc1w, fc1b, raw['g1'], raw['be1'],
            fc2w, fc2b, raw['g2'], raw['be2'],
            fc3w, fc3b)


# --------------------------- pure-JAX reference ---------------------------- #
def reference_forward(x, raw):
    """Mirrors the kernel numerics (bf16 MXU operands, f32 accumulation)."""
    isft, sft = raw['isft'], raw['sft']

    def mm(a, b):
        return jnp.dot(a.astype(MM_DTYPE), b.astype(MM_DTYPE),
                       preferred_element_type=jnp.float32)

    def sphconv(h, w):
        return jnp.sum(w[None, :, :, :] * h[:, None, :, :], axis=2)

    def nonlin(h):
        b, c, k = h.shape
        h2 = h.reshape(b * c, k)
        t = jnp.maximum(mm(h2, isft.T), 0.0)
        return mm(t, sft.T).reshape(b, c, k)

    h = nonlin(sphconv(x, raw['w1e']))
    h = nonlin(sphconv(h, raw['w2e']))
    h = nonlin(sphconv(h, raw['w3e']))
    pooled = jnp.sum(h * jnp.mean(isft, axis=0)[None, None, :], axis=-1)

    def bn(z, gamma, beta):
        mu = jnp.mean(z, axis=0, keepdims=True)
        var = jnp.mean((z - mu) ** 2, axis=0, keepdims=True)
        return (z - mu) * jax.lax.rsqrt(var + BN_EPS) * gamma + beta

    z = jnp.maximum(bn(mm(pooled, raw['fc1w'].T) + raw['fc1b'],
                       raw['g1'], raw['be1']), 0.0)
    z = jnp.maximum(bn(mm(z, raw['fc2w'].T) + raw['fc2b'],
                       raw['g2'], raw['be2']), 0.0)
    return mm(z, raw['fc3w'].T) + raw['fc3b']


# ---------------------------------- main ----------------------------------- #
if __name__ == "__main__":
    B, n_in, n_out, l_max, n_pts = 2, 4, 10, 4, 24   # -> K = 15 spherical coeffs

    key = jax.random.PRNGKey(0)
    kp, kx = jax.random.split(key)
    raw, K = init_raw_params(kp, n_in, n_out, l_max, n_pts)
    kparams = prepare_kernel_params(raw, K, n_pts, n_out)

    x = jax.random.normal(kx, (B, n_in, K), jnp.float32)

    out = jax.block_until_ready(scnn_forward(x, kparams, n_out))
    ref = jax.block_until_ready(reference_forward(x, raw))

    assert out.shape == (B, n_out)
    np.testing.assert_allclose(np.asarray(out), np.asarray(ref),
                               rtol=2e-3, atol=2e-3)
    print("KERNEL_OK")
</pallas_src>

<mosaic_0001>
module attributes {stable_mosaic.version = 11 : i64} {
  func.func @_scnn_kernel(%arg0: memref<2x4x128xf32, #tpu.memory_space<vmem>>, %arg1: memref<16x4x128xf32, #tpu.memory_space<vmem>>, %arg2: memref<32x16x128xf32, #tpu.memory_space<vmem>>, %arg3: memref<64x32x128xf32, #tpu.memory_space<vmem>>, %arg4: memref<128x128xbf16, #tpu.memory_space<vmem>>, %arg5: memref<128x128xbf16, #tpu.memory_space<vmem>>, %arg6: memref<1x128xf32, #tpu.memory_space<vmem>>, %arg7: memref<64x128xbf16, #tpu.memory_space<vmem>>, %arg8: memref<1x128xf32, #tpu.memory_space<vmem>>, %arg9: memref<1x128xf32, #tpu.memory_space<vmem>>, %arg10: memref<1x128xf32, #tpu.memory_space<vmem>>, %arg11: memref<128x128xbf16, #tpu.memory_space<vmem>>, %arg12: memref<1x128xf32, #tpu.memory_space<vmem>>, %arg13: memref<1x128xf32, #tpu.memory_space<vmem>>, %arg14: memref<1x128xf32, #tpu.memory_space<vmem>>, %arg15: memref<128x128xbf16, #tpu.memory_space<vmem>>, %arg16: memref<1x128xf32, #tpu.memory_space<vmem>>, %arg17: memref<2x128xf32, #tpu.memory_space<vmem>>) attributes {dimension_semantics = [], scalar_prefetch = 0 : i64, scratch_operands = 0 : i64, tpu.core_type = #tpu.core_type<tc>} {
    %c0 = arith.constant 0 : index
    %c0_0 = arith.constant 0 : index
    %0 = vector.load %arg4[%c0, %c0_0] : memref<128x128xbf16, #tpu.memory_space<vmem>>, vector<128x128xbf16>
    %c0_1 = arith.constant 0 : index
    %c0_2 = arith.constant 0 : index
    %1 = vector.load %arg5[%c0_1, %c0_2] : memref<128x128xbf16, #tpu.memory_space<vmem>>, vector<128x128xbf16>
    %c0_3 = arith.constant 0 : index
    %c0_4 = arith.constant 0 : index
    %c0_5 = arith.constant 0 : index
    %2 = vector.load %arg0[%c0_3, %c0_4, %c0_5] : memref<2x4x128xf32, #tpu.memory_space<vmem>>, vector<2x4x128xf32>
    %c0_6 = arith.constant 0 : index
    %c0_7 = arith.constant 0 : index
    %c0_8 = arith.constant 0 : index
    %3 = vector.load %arg1[%c0_6, %c0_7, %c0_8] : memref<16x4x128xf32, #tpu.memory_space<vmem>>, vector<16x4x128xf32>
    %4 = vector.shape_cast %2 : vector<2x4x128xf32> to vector<2x1x4x128xf32>
    %5 = vector.shape_cast %3 : vector<16x4x128xf32> to vector<1x16x4x128xf32>
    %6 = vector.broadcast %4 : vector<2x1x4x128xf32> to vector<2x16x4x128xf32>
    %7 = vector.broadcast %5 : vector<1x16x4x128xf32> to vector<2x16x4x128xf32>
    %8 = arith.mulf %6, %7 : vector<2x16x4x128xf32>
    %cst = arith.constant dense<0.000000e+00> : vector<2x16x128xf32>
    %9 = vector.multi_reduction <add>, %8, %cst [2] : vector<2x16x4x128xf32> to vector<2x16x128xf32>
    %10 = vector.shape_cast %9 : vector<2x16x128xf32> to vector<32x128xf32>
    %11 = arith.truncf %10 : vector<32x128xf32> to vector<32x128xbf16>
    %cst_9 = arith.constant dense<0.000000e+00> : vector<32x128xf32>
    %12 = tpu.matmul %11, %0, %cst_9 {dimension_numbers = #tpu.dot_dimension_numbers<[1], [0], [0], [1], [0, 0, 1, 1], [], []>} : vector<32x128xbf16>, vector<128x128xbf16>, vector<32x128xf32> -> vector<32x128xf32>
    %cst_10 = arith.constant 0.000000e+00 : f32
    %13 = vector.broadcast %cst_10 : f32 to vector<32x128xf32>
    %14 = arith.maximumf %12, %13 : vector<32x128xf32>
    %15 = arith.truncf %14 : vector<32x128xf32> to vector<32x128xbf16>
    %cst_11 = arith.constant dense<0.000000e+00> : vector<32x128xf32>
    %16 = tpu.matmul %15, %1, %cst_11 {dimension_numbers = #tpu.dot_dimension_numbers<[1], [0], [0], [1], [0, 0, 1, 1], [], []>} : vector<32x128xbf16>, vector<128x128xbf16>, vector<32x128xf32> -> vector<32x128xf32>
    %17 = vector.shape_cast %16 : vector<32x128xf32> to vector<2x16x128xf32>
    %c0_12 = arith.constant 0 : index
    %c0_13 = arith.constant 0 : index
    %c0_14 = arith.constant 0 : index
    %18 = vector.load %arg2[%c0_12, %c0_13, %c0_14] : memref<32x16x128xf32, #tpu.memory_space<vmem>>, vector<32x16x128xf32>
    %19 = vector.shape_cast %17 : vector<2x16x128xf32> to vector<2x1x16x128xf32>
    %20 = vector.shape_cast %18 : vector<32x16x128xf32> to vector<1x32x16x128xf32>
    %21 = vector.broadcast %19 : vector<2x1x16x128xf32> to vector<2x32x16x128xf32>
    %22 = vector.broadcast %20 : vector<1x32x16x128xf32> to vector<2x32x16x128xf32>
    %23 = arith.mulf %21, %22 : vector<2x32x16x128xf32>
    %cst_15 = arith.constant dense<0.000000e+00> : vector<2x32x128xf32>
    %24 = vector.multi_reduction <add>, %23, %cst_15 [2] : vector<2x32x16x128xf32> to vector<2x32x128xf32>
    %25 = vector.shape_cast %24 : vector<2x32x128xf32> to vector<64x128xf32>
    %26 = arith.truncf %25 : vector<64x128xf32> to vector<64x128xbf16>
    %cst_16 = arith.constant dense<0.000000e+00> : vector<64x128xf32>
    %27 = tpu.matmul %26, %0, %cst_16 {dimension_numbers = #tpu.dot_dimension_numbers<[1], [0], [0], [1], [0, 0, 1, 1], [], []>} : vector<64x128xbf16>, vector<128x128xbf16>, vector<64x128xf32> -> vector<64x128xf32>
    %cst_17 = arith.constant 0.000000e+00 : f32
    %28 = vector.broadcast %cst_17 : f32 to vector<64x128xf32>
    %29 = arith.maximumf %27, %28 : vector<64x128xf32>
    %30 = arith.truncf %29 : vector<64x128xf32> to vector<64x128xbf16>
    %cst_18 = arith.constant dense<0.000000e+00> : vector<64x128xf32>
    %31 = tpu.matmul %30, %1, %cst_18 {dimension_numbers = #tpu.dot_dimension_numbers<[1], [0], [0], [1], [0, 0, 1, 1], [], []>} : vector<64x128xbf16>, vector<128x128xbf16>, vector<64x128xf32> -> vector<64x128xf32>
    %32 = vector.shape_cast %31 : vector<64x128xf32> to vector<2x32x128xf32>
    %c0_19 = arith.constant 0 : index
    %c0_20 = arith.constant 0 : index
    %c0_21 = arith.constant 0 : index
    %33 = vector.load %arg3[%c0_19, %c0_20, %c0_21] : memref<64x32x128xf32, #tpu.memory_space<vmem>>, vector<64x32x128xf32>
    %34 = vector.shape_cast %32 : vector<2x32x128xf32> to vector<2x1x32x128xf32>
    %35 = vector.shape_cast %33 : vector<64x32x128xf32> to vector<1x64x32x128xf32>
    %36 = vector.broadcast %34 : vector<2x1x32x128xf32> to vector<2x64x32x128xf32>
    %37 = vector.broadcast %35 : vector<1x64x32x128xf32> to vector<2x64x32x128xf32>
    %38 = arith.mulf %36, %37 : vector<2x64x32x128xf32>
    %cst_22 = arith.constant dense<0.000000e+00> : vector<2x64x128xf32>
    %39 = vector.multi_reduction <add>, %38, %cst_22 [2] : vector<2x64x32x128xf32> to vector<2x64x128xf32>
    %40 = vector.shape_cast %39 : vector<2x64x128xf32> to vector<128x128xf32>
    %41 = arith.truncf %40 : vector<128x128xf32> to vector<128x128xbf16>
    %cst_23 = arith.constant dense<0.000000e+00> : vector<128x128xf32>
    %42 = tpu.matmul %41, %0, %cst_23 {dimension_numbers = #tpu.dot_dimension_numbers<[1], [0], [0], [1], [0, 0, 1, 1], [], []>} : vector<128x128xbf16>, vector<128x128xbf16>, vector<128x128xf32> -> vector<128x128xf32>
    %cst_24 = arith.constant 0.000000e+00 : f32
    %43 = vector.broadcast %cst_24 : f32 to vector<128x128xf32>
    %44 = arith.maximumf %42, %43 : vector<128x128xf32>
    %45 = arith.truncf %44 : vector<128x128xf32> to vector<128x128xbf16>
    %cst_25 = arith.constant dense<0.000000e+00> : vector<128x128xf32>
    %46 = tpu.matmul %45, %1, %cst_25 {dimension_numbers = #tpu.dot_dimension_numbers<[1], [0], [0], [1], [0, 0, 1, 1], [], []>} : vector<128x128xbf16>, vector<128x128xbf16>, vector<128x128xf32> -> vector<128x128xf32>
    %47 = vector.shape_cast %46 : vector<128x128xf32> to vector<2x64x128xf32>
    %c0_26 = arith.constant 0 : index
    %c0_27 = arith.constant 0 : index
    %48 = vector.load %arg6[%c0_26, %c0_27] : memref<1x128xf32, #tpu.memory_space<vmem>>, vector<1x128xf32>
    %49 = vector.shape_cast %48 : vector<1x128xf32> to vector<1x1x128xf32>
    %50 = vector.broadcast %49 : vector<1x1x128xf32> to vector<2x64x128xf32>
    %51 = arith.mulf %47, %50 : vector<2x64x128xf32>
    %cst_28 = arith.constant dense<0.000000e+00> : vector<2x64xf32>
    %52 = vector.multi_reduction <add>, %51, %cst_28 [2] : vector<2x64x128xf32> to vector<2x64xf32>
    %53 = arith.truncf %52 : vector<2x64xf32> to vector<2x64xbf16>
    %c0_29 = arith.constant 0 : index
    %c0_30 = arith.constant 0 : index
    %54 = vector.load %arg7[%c0_29, %c0_30] : memref<64x128xbf16, #tpu.memory_space<vmem>>, vector<64x128xbf16>
    %cst_31 = arith.constant dense<0.000000e+00> : vector<2x128xf32>
    %55 = tpu.matmul %53, %54, %cst_31 {dimension_numbers = #tpu.dot_dimension_numbers<[1], [0], [0], [1], [0, 0, 1, 1], [], []>} : vector<2x64xbf16>, vector<64x128xbf16>, vector<2x128xf32> -> vector<2x128xf32>
    %c0_32 = arith.constant 0 : index
    %c0_33 = arith.constant 0 : index
    %56 = vector.load %arg8[%c0_32, %c0_33] : memref<1x128xf32, #tpu.memory_space<vmem>>, vector<1x128xf32>
    %57 = vector.broadcast %56 : vector<1x128xf32> to vector<2x128xf32>
    %58 = arith.addf %55, %57 : vector<2x128xf32>
    %c0_34 = arith.constant 0 : index
    %c0_35 = arith.constant 0 : index
    %59 = vector.load %arg9[%c0_34, %c0_35] : memref<1x128xf32, #tpu.memory_space<vmem>>, vector<1x128xf32>
    %c0_36 = arith.constant 0 : index
    %c0_37 = arith.constant 0 : index
    %60 = vector.load %arg10[%c0_36, %c0_37] : memref<1x128xf32, #tpu.memory_space<vmem>>, vector<1x128xf32>
    %cst_38 = arith.constant dense<0.000000e+00> : vector<128xf32>
    %61 = vector.multi_reduction <add>, %58, %cst_38 [0] : vector<2x128xf32> to vector<128xf32>
    %62 = vector.shape_cast %61 : vector<128xf32> to vector<1x128xf32>
    %cst_39 = arith.constant 2.000000e+00 : f32
    %63 = vector.broadcast %cst_39 : f32 to vector<1x128xf32>
    %64 = arith.divf %62, %63 : vector<1x128xf32>
    %65 = vector.broadcast %64 : vector<1x128xf32> to vector<2x128xf32>
    %66 = arith.subf %58, %65 : vector<2x128xf32>
    %67 = arith.mulf %66, %66 : vector<2x128xf32>
    %cst_40 = arith.constant dense<0.000000e+00> : vector<128xf32>
    %68 = vector.multi_reduction <add>, %67, %cst_40 [0] : vector<2x128xf32> to vector<128xf32>
    %69 = vector.shape_cast %68 : vector<128xf32> to vector<1x128xf32>
    %cst_41 = arith.constant 2.000000e+00 : f32
    %70 = vector.broadcast %cst_41 : f32 to vector<1x128xf32>
    %71 = arith.divf %69, %70 : vector<1x128xf32>
    %72 = vector.broadcast %64 : vector<1x128xf32> to vector<2x128xf32>
    %73 = arith.subf %58, %72 : vector<2x128xf32>
    %cst_42 = arith.constant 9.99999974E-6 : f32
    %74 = vector.broadcast %cst_42 : f32 to vector<1x128xf32>
    %75 = arith.addf %71, %74 : vector<1x128xf32>
    %76 = math.rsqrt %75 : vector<1x128xf32>
    %77 = vector.broadcast %76 : vector<1x128xf32> to vector<2x128xf32>
    %78 = arith.mulf %73, %77 : vector<2x128xf32>
    %79 = vector.broadcast %59 : vector<1x128xf32> to vector<2x128xf32>
    %80 = arith.mulf %78, %79 : vector<2x128xf32>
    %81 = vector.broadcast %60 : vector<1x128xf32> to vector<2x128xf32>
    %82 = arith.addf %80, %81 : vector<2x128xf32>
    %cst_43 = arith.constant 0.000000e+00 : f32
    %83 = vector.broadcast %cst_43 : f32 to vector<2x128xf32>
    %84 = arith.maximumf %82, %83 : vector<2x128xf32>
    %85 = arith.truncf %84 : vector<2x128xf32> to vector<2x128xbf16>
    %c0_44 = arith.constant 0 : index
    %c0_45 = arith.constant 0 : index
    %86 = vector.load %arg11[%c0_44, %c0_45] : memref<128x128xbf16, #tpu.memory_space<vmem>>, vector<128x128xbf16>
    %cst_46 = arith.constant dense<0.000000e+00> : vector<2x128xf32>
    %87 = tpu.matmul %85, %86, %cst_46 {dimension_numbers = #tpu.dot_dimension_numbers<[1], [0], [0], [1], [0, 0, 1, 1], [], []>} : vector<2x128xbf16>, vector<128x128xbf16>, vector<2x128xf32> -> vector<2x128xf32>
    %c0_47 = arith.constant 0 : index
    %c0_48 = arith.constant 0 : index
    %88 = vector.load %arg12[%c0_47, %c0_48] : memref<1x128xf32, #tpu.memory_space<vmem>>, vector<1x128xf32>
    %89 = vector.broadcast %88 : vector<1x128xf32> to vector<2x128xf32>
    %90 = arith.addf %87, %89 : vector<2x128xf32>
    %c0_49 = arith.constant 0 : index
    %c0_50 = arith.constant 0 : index
    %91 = vector.load %arg13[%c0_49, %c0_50] : memref<1x128xf32, #tpu.memory_space<vmem>>, vector<1x128xf32>
    %c0_51 = arith.constant 0 : index
    %c0_52 = arith.constant 0 : index
    %92 = vector.load %arg14[%c0_51, %c0_52] : memref<1x128xf32, #tpu.memory_space<vmem>>, vector<1x128xf32>
    %cst_53 = arith.constant dense<0.000000e+00> : vector<128xf32>
    %93 = vector.multi_reduction <add>, %90, %cst_53 [0] : vector<2x128xf32> to vector<128xf32>
    %94 = vector.shape_cast %93 : vector<128xf32> to vector<1x128xf32>
    %cst_54 = arith.constant 2.000000e+00 : f32
    %95 = vector.broadcast %cst_54 : f32 to vector<1x128xf32>
    %96 = arith.divf %94, %95 : vector<1x128xf32>
    %97 = vector.broadcast %96 : vector<1x128xf32> to vector<2x128xf32>
    %98 = arith.subf %90, %97 : vector<2x128xf32>
    %99 = arith.mulf %98, %98 : vector<2x128xf32>
    %cst_55 = arith.constant dense<0.000000e+00> : vector<128xf32>
    %100 = vector.multi_reduction <add>, %99, %cst_55 [0] : vector<2x128xf32> to vector<128xf32>
    %101 = vector.shape_cast %100 : vector<128xf32> to vector<1x128xf32>
    %cst_56 = arith.constant 2.000000e+00 : f32
    %102 = vector.broadcast %cst_56 : f32 to vector<1x128xf32>
    %103 = arith.divf %101, %102 : vector<1x128xf32>
    %104 = vector.broadcast %96 : vector<1x128xf32> to vector<2x128xf32>
    %105 = arith.subf %90, %104 : vector<2x128xf32>
    %cst_57 = arith.constant 9.99999974E-6 : f32
    %106 = vector.broadcast %cst_57 : f32 to vector<1x128xf32>
    %107 = arith.addf %103, %106 : vector<1x128xf32>
    %108 = math.rsqrt %107 : vector<1x128xf32>
    %109 = vector.broadcast %108 : vector<1x128xf32> to vector<2x128xf32>
    %110 = arith.mulf %105, %109 : vector<2x128xf32>
    %111 = vector.broadcast %91 : vector<1x128xf32> to vector<2x128xf32>
    %112 = arith.mulf %110, %111 : vector<2x128xf32>
    %113 = vector.broadcast %92 : vector<1x128xf32> to vector<2x128xf32>
    %114 = arith.addf %112, %113 : vector<2x128xf32>
    %cst_58 = arith.constant 0.000000e+00 : f32
    %115 = vector.broadcast %cst_58 : f32 to vector<2x128xf32>
    %116 = arith.maximumf %114, %115 : vector<2x128xf32>
    %117 = arith.truncf %116 : vector<2x128xf32> to vector<2x128xbf16>
    %c0_59 = arith.constant 0 : index
    %c0_60 = arith.constant 0 : index
    %118 = vector.load %arg15[%c0_59, %c0_60] : memref<128x128xbf16, #tpu.memory_space<vmem>>, vector<128x128xbf16>
    %cst_61 = arith.constant dense<0.000000e+00> : vector<2x128xf32>
    %119 = tpu.matmul %117, %118, %cst_61 {dimension_numbers = #tpu.dot_dimension_numbers<[1], [0], [0], [1], [0, 0, 1, 1], [], []>} : vector<2x128xbf16>, vector<128x128xbf16>, vector<2x128xf32> -> vector<2x128xf32>
    %c0_62 = arith.constant 0 : index
    %c0_63 = arith.constant 0 : index
    %120 = vector.load %arg16[%c0_62, %c0_63] : memref<1x128xf32, #tpu.memory_space<vmem>>, vector<1x128xf32>
    %121 = vector.broadcast %120 : vector<1x128xf32> to vector<2x128xf32>
    %122 = arith.addf %119, %121 : vector<2x128xf32>
    %c0_64 = arith.constant 0 : index
    %c0_65 = arith.constant 0 : index
    %123 = vector.load %arg17[%c0_64, %c0_65] : memref<2x128xf32, #tpu.memory_space<vmem>>, vector<2x128xf32>
    tpu.vector_store %arg17[%c0_64, %c0_65], %122 {strides = array<i32>} : memref<2x128xf32, #tpu.memory_space<vmem>>, vector<2x128xf32>,
    return
  }
}

</mosaic_0001>

<llo_original>
// kernel: tpu_custom_call.1
$region0: #{tpu_custom_call.1}
  #allocation0 [shape = 'u32[]', space=smem, size = 0x4, offset = 0x4, fixed_abs, tag = 'smem constant byte address 0x4 - core index']
  #allocation1 [shape = 'u32[144,128]{1,0:T(1,128)}', space=vmem, size = 0x12000, scoped, tag = 'internal scratch']
  %s0 = inlined_call_operand.hbm [shape: f32[2,4,128], index: 0, kind: input, shape index: {}]
  %s1 = inlined_call_operand.hbm [shape: f32[16,4,128], index: 1, kind: input, shape index: {}]
  %s2 = inlined_call_operand.hbm [shape: f32[32,16,128], index: 2, kind: input, shape index: {}]
  %s3 = inlined_call_operand.hbm [shape: f32[64,32,128], index: 3, kind: input, shape index: {}]
  %s4 = inlined_call_operand.hbm [shape: bf16[128,128], index: 4, kind: input, shape index: {}]
  %s5 = inlined_call_operand.hbm [shape: bf16[128,128], index: 5, kind: input, shape index: {}]
  %s6 = inlined_call_operand.vmem [shape: f32[1,128], index: 6, kind: input, shape index: {}]
  %s7 = inlined_call_operand.hbm [shape: bf16[64,128], index: 7, kind: input, shape index: {}]
  %s8 = inlined_call_operand.vmem [shape: f32[1,128], index: 8, kind: input, shape index: {}]
  %s9 = inlined_call_operand.vmem [shape: f32[1,128], index: 9, kind: input, shape index: {}]
  %s10 = inlined_call_operand.vmem [shape: f32[1,128], index: 10, kind: input, shape index: {}]
  %s11 = inlined_call_operand.hbm [shape: bf16[128,128], index: 11, kind: input, shape index: {}]
  %s12 = inlined_call_operand.vmem [shape: f32[1,128], index: 12, kind: input, shape index: {}]
  %s13 = inlined_call_operand.vmem [shape: f32[1,128], index: 13, kind: input, shape index: {}]
  %s14 = inlined_call_operand.vmem [shape: f32[1,128], index: 14, kind: input, shape index: {}]
  %s15 = inlined_call_operand.hbm [shape: bf16[128,128], index: 15, kind: input, shape index: {}]
  %s16 = inlined_call_operand.vmem [shape: f32[1,128], index: 16, kind: input, shape index: {}]
  %s17 = inlined_call_operand.hbm [shape: f32[2,128], index: 17, kind: output, shape index: {}]
  %s18 = sld [smem:[#allocation0]]
  $region114: #{tpu_custom_call.1} parent=0
    _
  %s20 = ssub.s32 1, %s18
  %s21 = scalar_select 0, %s20, %s18
  $region1: #{tpu_custom_call.1} parent=0
    #allocation2 [shape = 'u8[4096]{0}', space=vmem, size = 0x1000, scoped, tag = 'input window, operand 0, single buffered']
    #allocation3 [shape = 's32[1]{0}', space=sflag, size = 0x4, scoped, tag = 'scoped memory for tpu_custom_call.1']
    #allocation4 [shape = 's32[1]{0}', space=sflag, size = 0x4, scoped, tag = 'scoped memory for tpu_custom_call.1']
    #allocation5 [shape = 'u8[32768]{0}', space=vmem, size = 0x8000, scoped, tag = 'input window, operand 1, single buffered']
    #allocation6 [shape = 's32[1]{0}', space=sflag, size = 0x4, scoped, tag = 'scoped memory for tpu_custom_call.1']
    #allocation7 [shape = 'u8[262144]{0}', space=vmem, size = 0x40000, scoped, tag = 'input window, operand 2, single buffered']
    #allocation8 [shape = 'u8[1048576]{0}', space=vmem, size = 0x100000, scoped, tag = 'input window, operand 3, single buffered']
    #allocation9 [shape = 's32[1]{0}', space=sflag, size = 0x4, scoped, tag = 'scoped memory for tpu_custom_call.1']
    #allocation10 [shape = 'u8[32768]{0}', space=vmem, size = 0x8000, scoped, tag = 'input window, operand 4, single buffered']
    #allocation11 [shape = 'u8[32768]{0}', space=vmem, size = 0x8000, scoped, tag = 'input window, operand 5, single buffered']
    #allocation12 [shape = 's32[1]{0}', space=sflag, size = 0x4, scoped, tag = 'scoped memory for tpu_custom_call.1']
    #allocation13 [shape = 'u8[16384]{0}', space=vmem, size = 0x4000, scoped, tag = 'input window, operand 7, single buffered']
    #allocation14 [shape = 'u8[32768]{0}', space=vmem, size = 0x8000, scoped, tag = 'input window, operand 11, single buffered']
    #allocation15 [shape = 's32[1]{0}', space=sflag, size = 0x4, scoped, tag = 'scoped memory for tpu_custom_call.1']
    #allocation16 [shape = 'u8[32768]{0}', space=vmem, size = 0x8000, scoped, tag = 'input window, operand 15, single buffered']
    #allocation17 [shape = 'u8[1024]{0}', space=vmem, size = 0x400, scoped, tag = 'output window, operand 0, single buffered']
    %22 = vsyncpa [#allocation3], 0
    %23 = vsyncpa [#allocation6], 0
    %24 = vsyncpa [#allocation9], 0
    %25 = vsyncpa [#allocation12], 0
    %26 = vsyncpa [#allocation15], 0
    %27 = vsyncpa [#allocation4], 0
    // Predicated region
    $region2: #{tpu_custom_call.1} parent=1 // pred_check
      _
    $region3: #{tpu_custom_call.1} parent=1 // pred_check_branch
      %29 = sbr.rel (0) target = $region5
    $region4: #{tpu_custom_call.1} parent=1 // pred_region
      %s31 = ssub.s32 128, 128
      %32 = vsyncadd [#allocation3], %s31
      %s33 = sshll.u32 [#allocation2], 4
      %s34 = int_to_ptr.vmem [resolvable:$true] %s33
      %39 = dma.hbm_to_vmem [thread:$0]  %s0, 128, %s34, [#allocation3], 64, 64, 4
    $region5: #{tpu_custom_call.1} parent=1 // pred_fallthru
      _
    // Predicated region
    $region6: #{tpu_custom_call.1} parent=1 // pred_check
      _
    $region7: #{tpu_custom_call.1} parent=1 // pred_check_branch
      %41 = sbr.rel (0) target = $region9
    $region8: #{tpu_custom_call.1} parent=1 // pred_region
      %s43 = ssub.s32 1024, 1024
      %44 = vsyncadd [#allocation6], %s43
      %s45 = sshll.u32 [#allocation5], 4
      %s46 = int_to_ptr.vmem [resolvable:$true] %s45
      %51 = dma.hbm_to_vmem [thread:$0]  %s1, 1024, %s46, [#allocation6], 64, 64, 4
    $region9: #{tpu_custom_call.1} parent=1 // pred_fallthru
      _
    // Predicated region
    $region10: #{tpu_custom_call.1} parent=1 // pred_check
      _
    $region11: #{tpu_custom_call.1} parent=1 // pred_check_branch
      %53 = sbr.rel (0) target = $region13
    $region12: #{tpu_custom_call.1} parent=1 // pred_region
      %s55 = ssub.s32 8192, 8192
      %56 = vsyncadd [#allocation6], %s55
      %s57 = sshll.u32 [#allocation7], 4
      %s58 = int_to_ptr.vmem [resolvable:$true] %s57
      %63 = dma.hbm_to_vmem [thread:$0]  %s2, 8192, %s58, [#allocation6], 128, 128, 8
    $region13: #{tpu_custom_call.1} parent=1 // pred_fallthru
      _
    // Predicated region
    $region14: #{tpu_custom_call.1} parent=1 // pred_check
      _
    $region15: #{tpu_custom_call.1} parent=1 // pred_check_branch
      %65 = sbr.rel (0) target = $region17
    $region16: #{tpu_custom_call.1} parent=1 // pred_region
      %s67 = ssub.s32 32768, 32768
      %68 = vsyncadd [#allocation9], %s67
      %s69 = sshll.u32 [#allocation8], 4
      %s70 = int_to_ptr.vmem [resolvable:$true] %s69
      %75 = dma.hbm_to_vmem [thread:$0]  %s3, 32768, %s70, [#allocation9], 128, 128, 8
    $region17: #{tpu_custom_call.1} parent=1 // pred_fallthru
      _
    // Predicated region
    $region18: #{tpu_custom_call.1} parent=1 // pred_check
      _
    $region19: #{tpu_custom_call.1} parent=1 // pred_check_branch
      %77 = sbr.rel (0) target = $region21
    $region20: #{tpu_custom_call.1} parent=1 // pred_region
      %s79 = ssub.s32 1024, 1024
      %80 = vsyncadd [#allocation9], %s79
      %s81 = sshll.u32 [#allocation10], 4
      %s82 = int_to_ptr.vmem [resolvable:$true] %s81
      %87 = dma.hbm_to_vmem [thread:$0]  %s4, 1024, %s82, [#allocation9], 64, 64, 4
    $region21: #{tpu_custom_call.1} parent=1 // pred_fallthru
      _
    // Predicated region
    $region22: #{tpu_custom_call.1} parent=1 // pred_check
      _
    $region23: #{tpu_custom_call.1} parent=1 // pred_check_branch
      %89 = sbr.rel (0) target = $region25
    $region24: #{tpu_custom_call.1} parent=1 // pred_region
      %s91 = ssub.s32 1024, 1024
      %92 = vsyncadd [#allocation12], %s91
      %s93 = sshll.u32 [#allocation11], 4
      %s94 = int_to_ptr.vmem [resolvable:$true] %s93
      %99 = dma.hbm_to_vmem [thread:$0]  %s5, 1024, %s94, [#allocation12], 64, 64, 4
    $region25: #{tpu_custom_call.1} parent=1 // pred_fallthru
      _
    // Predicated region
    $region26: #{tpu_custom_call.1} parent=1 // pred_check
      _
    $region27: #{tpu_custom_call.1} parent=1 // pred_check_branch
      %101 = sbr.rel (0) target = $region29
    $region28: #{tpu_custom_call.1} parent=1 // pred_region
      _
    $region29: #{tpu_custom_call.1} parent=1 // pred_fallthru
      _
    // Predicated region
    $region30: #{tpu_custom_call.1} parent=1 // pred_check
      _
    $region31: #{tpu_custom_call.1} parent=1 // pred_check_branch
      %103 = sbr.rel (0) target = $region33
    $region32: #{tpu_custom_call.1} parent=1 // pred_region
      %s105 = ssub.s32 512, 512
      %106 = vsyncadd [#allocation12], %s105
      %s107 = sshll.u32 [#allocation13], 4
      %s108 = int_to_ptr.vmem [resolvable:$true] %s107
      %113 = dma.hbm_to_vmem [thread:$0]  %s7, 512, %s108, [#allocation12], 64, 64, 4
    $region33: #{tpu_custom_call.1} parent=1 // pred_fallthru
      _
    // Predicated region
    $region34: #{tpu_custom_call.1} parent=1 // pred_check
      _
    $region35: #{tpu_custom_call.1} parent=1 // pred_check_branch
      %115 = sbr.rel (0) target = $region37
    $region36: #{tpu_custom_call.1} parent=1 // pred_region
      _
    $region37: #{tpu_custom_call.1} parent=1 // pred_fallthru
      _
    // Predicated region
    $region38: #{tpu_custom_call.1} parent=1 // pred_check
      _
    $region39: #{tpu_custom_call.1} parent=1 // pred_check_branch
      %117 = sbr.rel (0) target = $region41
    $region40: #{tpu_custom_call.1} parent=1 // pred_region
      _
    $region41: #{tpu_custom_call.1} parent=1 // pred_fallthru
      _
    // Predicated region
    $region42: #{tpu_custom_call.1} parent=1 // pred_check
      _
    $region43: #{tpu_custom_call.1} parent=1 // pred_check_branch
      %119 = sbr.rel (0) target = $region45
    $region44: #{tpu_custom_call.1} parent=1 // pred_region
      _
    $region45: #{tpu_custom_call.1} parent=1 // pred_fallthru
      _
    // Predicated region
    $region46: #{tpu_custom_call.1} parent=1 // pred_check
      _
    $region47: #{tpu_custom_call.1} parent=1 // pred_check_branch
      %121 = sbr.rel (0) target = $region49
    $region48: #{tpu_custom_call.1} parent=1 // pred_region
      %s123 = ssub.s32 1024, 1024
      %124 = vsyncadd [#allocation15], %s123
      %s125 = sshll.u32 [#allocation14], 4
      %s126 = int_to_ptr.vmem [resolvable:$true] %s125
      %131 = dma.hbm_to_vmem [thread:$0]  %s11, 1024, %s126, [#allocation15], 64, 64, 4
    $region49: #{tpu_custom_call.1} parent=1 // pred_fallthru
      _
    // Predicated region
    $region50: #{tpu_custom_call.1} parent=1 // pred_check
      _
    $region51: #{tpu_custom_call.1} parent=1 // pred_check_branch
      %133 = sbr.rel (0) target = $region53
    $region52: #{tpu_custom_call.1} parent=1 // pred_region
      _
    $region53: #{tpu_custom_call.1} parent=1 // pred_fallthru
      _
    // Predicated region
    $region54: #{tpu_custom_call.1} parent=1 // pred_check
      _
    $region55: #{tpu_custom_call.1} parent=1 // pred_check_branch
      %135 = sbr.rel (0) target = $region57
    $region56: #{tpu_custom_call.1} parent=1 // pred_region
      _
    $region57: #{tpu_custom_call.1} parent=1 // pred_fallthru
      _
    // Predicated region
    $region58: #{tpu_custom_call.1} parent=1 // pred_check
      _
    $region59: #{tpu_custom_call.1} parent=1 // pred_check_branch
      %137 = sbr.rel (0) target = $region61
    $region60: #{tpu_custom_call.1} parent=1 // pred_region
      _
    $region61: #{tpu_custom_call.1} parent=1 // pred_fallthru
      _
    // Predicated region
    $region62: #{tpu_custom_call.1} parent=1 // pred_check
      _
    $region63: #{tpu_custom_call.1} parent=1 // pred_check_branch
      %139 = sbr.rel (0) target = $region65
    $region64: #{tpu_custom_call.1} parent=1 // pred_region
      %s141 = ssub.s32 1024, 1024
      %142 = vsyncadd [#allocation15], %s141
      %s143 = sshll.u32 [#allocation16], 4
      %s144 = int_to_ptr.vmem [resolvable:$true] %s143
      %149 = dma.hbm_to_vmem [thread:$0]  %s15, 1024, %s144, [#allocation15], 64, 64, 4
    $region65: #{tpu_custom_call.1} parent=1 // pred_fallthru
      _
    // Predicated region
    $region66: #{tpu_custom_call.1} parent=1 // pred_check
      _
    $region67: #{tpu_custom_call.1} parent=1 // pred_check_branch
      %151 = sbr.rel (0) target = $region69
    $region68: #{tpu_custom_call.1} parent=1 // pred_region
      _
    $region69: #{tpu_custom_call.1} parent=1 // pred_fallthru
      _
    // Predicated region
    $region70: #{tpu_custom_call.1} parent=1 // pred_check
      _
    $region71: #{tpu_custom_call.1} parent=1 // pred_check_branch
      %153 = sbr.rel (0) target = $region73
    $region72: #{tpu_custom_call.1} parent=1 // pred_region
      %154 = dma.done [#allocation3], 128
    $region73: #{tpu_custom_call.1} parent=1 // pred_fallthru
      _
    // Predicated region
    $region74: #{tpu_custom_call.1} parent=1 // pred_check
      _
    $region75: #{tpu_custom_call.1} parent=1 // pred_check_branch
      %156 = sbr.rel (0) target = $region77
    $region76: #{tpu_custom_call.1} parent=1 // pred_region
      %157 = dma.done [#allocation6], 1024
    $region77: #{tpu_custom_call.1} parent=1 // pred_fallthru
      _
    // Predicated region
    $region78: #{tpu_custom_call.1} parent=1 // pred_check
      _
    $region79: #{tpu_custom_call.1} parent=1 // pred_check_branch
      %159 = sbr.rel (0) target = $region81
    $region80: #{tpu_custom_call.1} parent=1 // pred_region
      %160 = dma.done [#allocation6], 8192
    $region81: #{tpu_custom_call.1} parent=1 // pred_fallthru
      _
    // Predicated region
    $region82: #{tpu_custom_call.1} parent=1 // pred_check
      _
    $region83: #{tpu_custom_call.1} parent=1 // pred_check_branch
      %162 = sbr.rel (0) target = $region85
    $region84: #{tpu_custom_call.1} parent=1 // pred_region
      %163 = dma.done [#allocation9], 32768
    $region85: #{tpu_custom_call.1} parent=1 // pred_fallthru
      _
    // Predicated region
    $region86: #{tpu_custom_call.1} parent=1 // pred_check
      _
    $region87: #{tpu_custom_call.1} parent=1 // pred_check_branch
      %165 = sbr.rel (0) target = $region89
    $region88: #{tpu_custom_call.1} parent=1 // pred_region
      %166 = dma.done [#allocation9], 1024
    $region89: #{tpu_custom_call.1} parent=1 // pred_fallthru
      _
    // Predicated region
    $region90: #{tpu_custom_call.1} parent=1 // pred_check
      _
    $region91: #{tpu_custom_call.1} parent=1 // pred_check_branch
      %168 = sbr.rel (0) target = $region93
    $region92: #{tpu_custom_call.1} parent=1 // pred_region
      %169 = dma.done [#allocation12], 1024
    $region93: #{tpu_custom_call.1} parent=1 // pred_fallthru
      _
    // Predicated region
    $region94: #{tpu_custom_call.1} parent=1 // pred_check
      _
    $region95: #{tpu_custom_call.1} parent=1 // pred_check_branch
      %171 = sbr.rel (0) target = $region97
    $region96: #{tpu_custom_call.1} parent=1 // pred_region
      %172 = dma.done [#allocation12], 512
    $region97: #{tpu_custom_call.1} parent=1 // pred_fallthru
      _
    // Predicated region
    $region98: #{tpu_custom_call.1} parent=1 // pred_check
      _
    $region99: #{tpu_custom_call.1} parent=1 // pred_check_branch
      %174 = sbr.rel (0) target = $region101
    $region100: #{tpu_custom_call.1} parent=1 // pred_region
      %175 = dma.done [#allocation15], 1024
    $region101: #{tpu_custom_call.1} parent=1 // pred_fallthru
      _
    // Predicated region
    $region102: #{tpu_custom_call.1} parent=1 // pred_check
      _
    $region103: #{tpu_custom_call.1} parent=1 // pred_check_branch
      %177 = sbr.rel (0) target = $region105
    $region104: #{tpu_custom_call.1} parent=1 // pred_region
      %178 = dma.done [#allocation15], 1024
    $region105: #{tpu_custom_call.1} parent=1 // pred_fallthru
      _
    %v180 = vld [vmem:[#allocation10] sm:$0xf]
    %v181 = vld [vmem:[#allocation10 + $0x4] sm:$0xf]
    %v182 = vld [vmem:[#allocation10 + $0x8] sm:$0xf]
    %v183 = vld [vmem:[#allocation10 + $0xc] sm:$0xf]
    %v184 = vld [vmem:[#allocation10 + $0x10] sm:$0xf]
    %v185 = vld [vmem:[#allocation10 + $0x14] sm:$0xf]
    %v186 = vld [vmem:[#allocation10 + $0x18] sm:$0xf]
    %v187 = vld [vmem:[#allocation10 + $0x1c] sm:$0xf]
    %v188 = vld [vmem:[#allocation10 + $0x20] sm:$0xf]
    %v189 = vld [vmem:[#allocation10 + $0x24] sm:$0xf]
    %v190 = vld [vmem:[#allocation10 + $0x28] sm:$0xf]
    %v191 = vld [vmem:[#allocation10 + $0x2c] sm:$0xf]
    %v192 = vld [vmem:[#allocation10 + $0x30] sm:$0xf]
    %v193 = vld [vmem:[#allocation10 + $0x34] sm:$0xf]
    %v194 = vld [vmem:[#allocation10 + $0x38] sm:$0xf]
    %v195 = vld [vmem:[#allocation10 + $0x3c] sm:$0xf]
    %v196 = vld [vmem:[#allocation11] sm:$0xf]
    %v197 = vld [vmem:[#allocation11 + $0x4] sm:$0xf]
    %v198 = vld [vmem:[#allocation11 + $0x8] sm:$0xf]
    %v199 = vld [vmem:[#allocation11 + $0xc] sm:$0xf]
    %v200 = vld [vmem:[#allocation11 + $0x10] sm:$0xf]
    %v201 = vld [vmem:[#allocation11 + $0x14] sm:$0xf]
    %v202 = vld [vmem:[#allocation11 + $0x18] sm:$0xf]
    %v203 = vld [vmem:[#allocation11 + $0x1c] sm:$0xf]
    %v204 = vld [vmem:[#allocation11 + $0x20] sm:$0xf]
    %v205 = vld [vmem:[#allocation11 + $0x24] sm:$0xf]
    %v206 = vld [vmem:[#allocation11 + $0x28] sm:$0xf]
    %v207 = vld [vmem:[#allocation11 + $0x2c] sm:$0xf]
    %v208 = vld [vmem:[#allocation11 + $0x30] sm:$0xf]
    %v209 = vld [vmem:[#allocation11 + $0x34] sm:$0xf]
    %v210 = vld [vmem:[#allocation11 + $0x38] sm:$0xf]
    %v211 = vld [vmem:[#allocation11 + $0x3c] sm:$0xf]
    %v212 = vld [vmem:[#allocation2] sm:$0xf]
    %v213 = vld [vmem:[#allocation2 + $0x4] sm:$0xf]
    %v214 = vld [vmem:[#allocation5] sm:$0xf]
    %v215 = vld [vmem:[#allocation5 + $0x4] sm:$0xf]
    %v216 = vld [vmem:[#allocation5 + $0x8] sm:$0xf]
    %v217 = vld [vmem:[#allocation5 + $0xc] sm:$0xf]
    %v218 = vld [vmem:[#allocation5 + $0x10] sm:$0xf]
    %v219 = vld [vmem:[#allocation5 + $0x14] sm:$0xf]
    %v220 = vld [vmem:[#allocation5 + $0x18] sm:$0xf]
    %v221 = vld [vmem:[#allocation5 + $0x1c] sm:$0xf]
    %v222 = vld [vmem:[#allocation5 + $0x20] sm:$0xf]
    %v223 = vld [vmem:[#allocation5 + $0x24] sm:$0xf]
    %v224 = vld [vmem:[#allocation5 + $0x28] sm:$0xf]
    %v225 = vld [vmem:[#allocation5 + $0x2c] sm:$0xf]
    %v226 = vld [vmem:[#allocation5 + $0x30] sm:$0xf]
    %v227 = vld [vmem:[#allocation5 + $0x34] sm:$0xf]
    %v228 = vld [vmem:[#allocation5 + $0x38] sm:$0xf]
    %v229 = vld [vmem:[#allocation5 + $0x3c] sm:$0xf]
    %v230 = vmul.f32 %v212, %v214
    %v231 = vmul.f32 %v212, %v215
    %v232 = vmul.f32 %v212, %v216
    %v233 = vmul.f32 %v212, %v217
    %v234 = vmul.f32 %v212, %v218
    %v235 = vmul.f32 %v212, %v219
    %v236 = vmul.f32 %v212, %v220
    %v237 = vmul.f32 %v212, %v221
    %v238 = vmul.f32 %v212, %v222
    %v239 = vmul.f32 %v212, %v223
    %v240 = vmul.f32 %v212, %v224
    %v241 = vmul.f32 %v212, %v225
    %v242 = vmul.f32 %v212, %v226
    %v243 = vmul.f32 %v212, %v227
    %v244 = vmul.f32 %v212, %v228
    %v245 = vmul.f32 %v212, %v229
    %v246 = vmul.f32 %v213, %v214
    %v247 = vmul.f32 %v213, %v215
    %v248 = vmul.f32 %v213, %v216
    %v249 = vmul.f32 %v213, %v217
    %v250 = vmul.f32 %v213, %v218
    %v251 = vmul.f32 %v213, %v219
    %v252 = vmul.f32 %v213, %v220
    %v253 = vmul.f32 %v213, %v221
    %v254 = vmul.f32 %v213, %v222
    %v255 = vmul.f32 %v213, %v223
    %v256 = vmul.f32 %v213, %v224
    %v257 = vmul.f32 %v213, %v225
    %v258 = vmul.f32 %v213, %v226
    %v259 = vmul.f32 %v213, %v227
    %v260 = vmul.f32 %v213, %v228
    %v261 = vmul.f32 %v213, %v229
    %vm262 = vcmask 1043456
    %v263 = vsel %vm262, %v230, 0.0
    %v264 = vrot.slane %v263, 4
    %v265 = vadd.f32 %v263, %v264
    %v266 = vrot.slane %v265, 2
    %v267 = vadd.f32 %v265, %v266
    %v268 = vrot.slane %v267, 1
    %v269 = vadd.f32 %v267, %v268
    %v270 = vsel %vm262, %v231, 0.0
    %v271 = vrot.slane %v270, 4
    %v272 = vadd.f32 %v270, %v271
    %v273 = vrot.slane %v272, 2
    %v274 = vadd.f32 %v272, %v273
    %v275 = vrot.slane %v274, 1
    %v276 = vadd.f32 %v274, %v275
    %v277 = vsel %vm262, %v232, 0.0
    %v278 = vrot.slane %v277, 4
    %v279 = vadd.f32 %v277, %v278
    %v280 = vrot.slane %v279, 2
    %v281 = vadd.f32 %v279, %v280
    %v282 = vrot.slane %v281, 1
    %v283 = vadd.f32 %v281, %v282
    %v284 = vsel %vm262, %v233, 0.0
    %v285 = vrot.slane %v284, 4
    %v286 = vadd.f32 %v284, %v285
    %v287 = vrot.slane %v286, 2
    %v288 = vadd.f32 %v286, %v287
    %v289 = vrot.slane %v288, 1
    %v290 = vadd.f32 %v288, %v289
    %v291 = vsel %vm262, %v234, 0.0
    %v292 = vrot.slane %v291, 4
    %v293 = vadd.f32 %v291, %v292
    %v294 = vrot.slane %v293, 2
    %v295 = vadd.f32 %v293, %v294
    %v296 = vrot.slane %v295, 1
    %v297 = vadd.f32 %v295, %v296
    %v298 = vsel %vm262, %v235, 0.0
    %v299 = vrot.slane %v298, 4
    %v300 = vadd.f32 %v298, %v299
    %v301 = vrot.slane %v300, 2
    %v302 = vadd.f32 %v300, %v301
    %v303 = vrot.slane %v302, 1
    %v304 = vadd.f32 %v302, %v303
    %v305 = vsel %vm262, %v236, 0.0
    %v306 = vrot.slane %v305, 4
    %v307 = vadd.f32 %v305, %v306
    %v308 = vrot.slane %v307, 2
    %v309 = vadd.f32 %v307, %v308
    %v310 = vrot.slane %v309, 1
    %v311 = vadd.f32 %v309, %v310
    %v312 = vsel %vm262, %v237, 0.0
    %v313 = vrot.slane %v312, 4
    %v314 = vadd.f32 %v312, %v313
    %v315 = vrot.slane %v314, 2
    %v316 = vadd.f32 %v314, %v315
    %v317 = vrot.slane %v316, 1
    %v318 = vadd.f32 %v316, %v317
    %v319 = vsel %vm262, %v238, 0.0
    %v320 = vrot.slane %v319, 4
    %v321 = vadd.f32 %v319, %v320
    %v322 = vrot.slane %v321, 2
    %v323 = vadd.f32 %v321, %v322
    %v324 = vrot.slane %v323, 1
    %v325 = vadd.f32 %v323, %v324
    %v326 = vsel %vm262, %v239, 0.0
    %v327 = vrot.slane %v326, 4
    %v328 = vadd.f32 %v326, %v327
    %v329 = vrot.slane %v328, 2
    %v330 = vadd.f32 %v328, %v329
    %v331 = vrot.slane %v330, 1
    %v332 = vadd.f32 %v330, %v331
    %v333 = vsel %vm262, %v240, 0.0
    %v334 = vrot.slane %v333, 4
    %v335 = vadd.f32 %v333, %v334
    %v336 = vrot.slane %v335, 2
    %v337 = vadd.f32 %v335, %v336
    %v338 = vrot.slane %v337, 1
    %v339 = vadd.f32 %v337, %v338
    %v340 = vsel %vm262, %v241, 0.0
    %v341 = vrot.slane %v340, 4
    %v342 = vadd.f32 %v340, %v341
    %v343 = vrot.slane %v342, 2
    %v344 = vadd.f32 %v342, %v343
    %v345 = vrot.slane %v344, 1
    %v346 = vadd.f32 %v344, %v345
    %v347 = vsel %vm262, %v242, 0.0
    %v348 = vrot.slane %v347, 4
    %v349 = vadd.f32 %v347, %v348
    %v350 = vrot.slane %v349, 2
    %v351 = vadd.f32 %v349, %v350
    %v352 = vrot.slane %v351, 1
    %v353 = vadd.f32 %v351, %v352
    %v354 = vsel %vm262, %v243, 0.0
    %v355 = vrot.slane %v354, 4
    %v356 = vadd.f32 %v354, %v355
    %v357 = vrot.slane %v356, 2
    %v358 = vadd.f32 %v356, %v357
    %v359 = vrot.slane %v358, 1
    %v360 = vadd.f32 %v358, %v359
    %v361 = vsel %vm262, %v244, 0.0
    %v362 = vrot.slane %v361, 4
    %v363 = vadd.f32 %v361, %v362
    %v364 = vrot.slane %v363, 2
    %v365 = vadd.f32 %v363, %v364
    %v366 = vrot.slane %v365, 1
    %v367 = vadd.f32 %v365, %v366
    %v368 = vsel %vm262, %v245, 0.0
    %v369 = vrot.slane %v368, 4
    %v370 = vadd.f32 %v368, %v369
    %v371 = vrot.slane %v370, 2
    %v372 = vadd.f32 %v370, %v371
    %v373 = vrot.slane %v372, 1
    %v374 = vadd.f32 %v372, %v373
    %v375 = vsel %vm262, %v246, 0.0
    %v376 = vrot.slane %v375, 4
    %v377 = vadd.f32 %v375, %v376
    %v378 = vrot.slane %v377, 2
    %v379 = vadd.f32 %v377, %v378
    %v380 = vrot.slane %v379, 1
    %v381 = vadd.f32 %v379, %v380
    %v382 = vsel %vm262, %v247, 0.0
    %v383 = vrot.slane %v382, 4
    %v384 = vadd.f32 %v382, %v383
    %v385 = vrot.slane %v384, 2
    %v386 = vadd.f32 %v384, %v385
    %v387 = vrot.slane %v386, 1
    %v388 = vadd.f32 %v386, %v387
    %v389 = vsel %vm262, %v248, 0.0
    %v390 = vrot.slane %v389, 4
    %v391 = vadd.f32 %v389, %v390
    %v392 = vrot.slane %v391, 2
    %v393 = vadd.f32 %v391, %v392
    %v394 = vrot.slane %v393, 1
    %v395 = vadd.f32 %v393, %v394
    %v396 = vsel %vm262, %v249, 0.0
    %v397 = vrot.slane %v396, 4
    %v398 = vadd.f32 %v396, %v397
    %v399 = vrot.slane %v398, 2
    %v400 = vadd.f32 %v398, %v399
    %v401 = vrot.slane %v400, 1
    %v402 = vadd.f32 %v400, %v401
    %v403 = vsel %vm262, %v250, 0.0
    %v404 = vrot.slane %v403, 4
    %v405 = vadd.f32 %v403, %v404
    %v406 = vrot.slane %v405, 2
    %v407 = vadd.f32 %v405, %v406
    %v408 = vrot.slane %v407, 1
    %v409 = vadd.f32 %v407, %v408
    %v410 = vsel %vm262, %v251, 0.0
    %v411 = vrot.slane %v410, 4
    %v412 = vadd.f32 %v410, %v411
    %v413 = vrot.slane %v412, 2
    %v414 = vadd.f32 %v412, %v413
    %v415 = vrot.slane %v414, 1
    %v416 = vadd.f32 %v414, %v415
    %v417 = vsel %vm262, %v252, 0.0
    %v418 = vrot.slane %v417, 4
    %v419 = vadd.f32 %v417, %v418
    %v420 = vrot.slane %v419, 2
    %v421 = vadd.f32 %v419, %v420
    %v422 = vrot.slane %v421, 1
    %v423 = vadd.f32 %v421, %v422
    %v424 = vsel %vm262, %v253, 0.0
    %v425 = vrot.slane %v424, 4
    %v426 = vadd.f32 %v424, %v425
    %v427 = vrot.slane %v426, 2
    %v428 = vadd.f32 %v426, %v427
    %v429 = vrot.slane %v428, 1
    %v430 = vadd.f32 %v428, %v429
    %v431 = vsel %vm262, %v254, 0.0
    %v432 = vrot.slane %v431, 4
    %v433 = vadd.f32 %v431, %v432
    %v434 = vrot.slane %v433, 2
    %v435 = vadd.f32 %v433, %v434
    %v436 = vrot.slane %v435, 1
    %v437 = vadd.f32 %v435, %v436
    %v438 = vsel %vm262, %v255, 0.0
    %v439 = vrot.slane %v438, 4
    %v440 = vadd.f32 %v438, %v439
    %v441 = vrot.slane %v440, 2
    %v442 = vadd.f32 %v440, %v441
    %v443 = vrot.slane %v442, 1
    %v444 = vadd.f32 %v442, %v443
    %v445 = vsel %vm262, %v256, 0.0
    %v446 = vrot.slane %v445, 4
    %v447 = vadd.f32 %v445, %v446
    %v448 = vrot.slane %v447, 2
    %v449 = vadd.f32 %v447, %v448
    %v450 = vrot.slane %v449, 1
    %v451 = vadd.f32 %v449, %v450
    %v452 = vsel %vm262, %v257, 0.0
    %v453 = vrot.slane %v452, 4
    %v454 = vadd.f32 %v452, %v453
    %v455 = vrot.slane %v454, 2
    %v456 = vadd.f32 %v454, %v455
    %v457 = vrot.slane %v456, 1
    %v458 = vadd.f32 %v456, %v457
    %v459 = vsel %vm262, %v258, 0.0
    %v460 = vrot.slane %v459, 4
    %v461 = vadd.f32 %v459, %v460
    %v462 = vrot.slane %v461, 2
    %v463 = vadd.f32 %v461, %v462
    %v464 = vrot.slane %v463, 1
    %v465 = vadd.f32 %v463, %v464
    %v466 = vsel %vm262, %v259, 0.0
    %v467 = vrot.slane %v466, 4
    %v468 = vadd.f32 %v466, %v467
    %v469 = vrot.slane %v468, 2
    %v470 = vadd.f32 %v468, %v469
    %v471 = vrot.slane %v470, 1
    %v472 = vadd.f32 %v470, %v471
    %v473 = vsel %vm262, %v260, 0.0
    %v474 = vrot.slane %v473, 4
    %v475 = vadd.f32 %v473, %v474
    %v476 = vrot.slane %v475, 2
    %v477 = vadd.f32 %v475, %v476
    %v478 = vrot.slane %v477, 1
    %v479 = vadd.f32 %v477, %v478
    %v480 = vsel %vm262, %v261, 0.0
    %v481 = vrot.slane %v480, 4
    %v482 = vadd.f32 %v480, %v481
    %v483 = vrot.slane %v482, 2
    %v484 = vadd.f32 %v482, %v483
    %v485 = vrot.slane %v484, 1
    %v486 = vadd.f32 %v484, %v485
    %v487 = vpack.c.bf16 %v269, %v269
    %v488 = vpack.c.bf16 %v276, %v276
    %v489 = vpack.c.bf16 %v283, %v283
    %v490 = vpack.c.bf16 %v290, %v290
    %v491 = vpack.c.bf16 %v297, %v297
    %v492 = vpack.c.bf16 %v304, %v304
    %v493 = vpack.c.bf16 %v311, %v311
    %v494 = vpack.c.bf16 %v318, %v318
    %v495 = vpack.c.bf16 %v325, %v325
    %v496 = vpack.c.bf16 %v332, %v332
    %v497 = vpack.c.bf16 %v339, %v339
    %v498 = vpack.c.bf16 %v346, %v346
    %v499 = vpack.c.bf16 %v353, %v353
    %v500 = vpack.c.bf16 %v360, %v360
    %v501 = vpack.c.bf16 %v367, %v367
    %v502 = vpack.c.bf16 %v374, %v374
    %v503 = vpack.c.bf16 %v381, %v381
    %v504 = vpack.c.bf16 %v388, %v388
    %v505 = vpack.c.bf16 %v395, %v395
    %v506 = vpack.c.bf16 %v402, %v402
    %v507 = vpack.c.bf16 %v409, %v409
    %v508 = vpack.c.bf16 %v416, %v416
    %v509 = vpack.c.bf16 %v423, %v423
    %v510 = vpack.c.bf16 %v430, %v430
    %v511 = vpack.c.bf16 %v437, %v437
    %v512 = vpack.c.bf16 %v444, %v444
    %v513 = vpack.c.bf16 %v451, %v451
    %v514 = vpack.c.bf16 %v458, %v458
    %v515 = vpack.c.bf16 %v465, %v465
    %v516 = vpack.c.bf16 %v472, %v472
    %v517 = vpack.c.bf16 %v479, %v479
    %v518 = vpack.c.bf16 %v486, %v486
    %v551 = vunpack.c.l.b16 %v487
    %v552 = vunpack.c.l.b16 %v488
    %v553 = vunpack.c.l.b16 %v489
    %v554 = vunpack.c.l.b16 %v490
    %v555 = vunpack.c.l.b16 %v491
    %v556 = vunpack.c.l.b16 %v492
    %v557 = vunpack.c.l.b16 %v493
    %v558 = vunpack.c.l.b16 %v494
    %v559 = vunpack.c.l.b16 %v495
    %v560 = vunpack.c.l.b16 %v496
    %v561 = vunpack.c.l.b16 %v497
    %v562 = vunpack.c.l.b16 %v498
    %v563 = vunpack.c.l.b16 %v499
    %v564 = vunpack.c.l.b16 %v500
    %v565 = vunpack.c.l.b16 %v501
    %v566 = vunpack.c.l.b16 %v502
    %v567 = vunpack.c.l.b16 %v503
    %v568 = vunpack.c.l.b16 %v504
    %v569 = vunpack.c.l.b16 %v505
    %v570 = vunpack.c.l.b16 %v506
    %v571 = vunpack.c.l.b16 %v507
    %v572 = vunpack.c.l.b16 %v508
    %v573 = vunpack.c.l.b16 %v509
    %v574 = vunpack.c.l.b16 %v510
    %v575 = vunpack.c.l.b16 %v511
    %v576 = vunpack.c.l.b16 %v512
    %v577 = vunpack.c.l.b16 %v513
    %v578 = vunpack.c.l.b16 %v514
    %v579 = vunpack.c.l.b16 %v515
    %v580 = vunpack.c.l.b16 %v516
    %v581 = vunpack.c.l.b16 %v517
    %v582 = vunpack.c.l.b16 %v518
    %vm583 = vcmask 1041409
    %v584 = vsel %vm583, %v552, %v551
    %vm585 = vcmask 1042434
    %v586 = vsel %vm585, %v553, %v584
    %vm587 = vcmask 1043459
    %v588 = vsel %vm587, %v554, %v586
    %vm589 = vcmask 1044484
    %v590 = vsel %vm589, %v555, %v588
    %vm591 = vcmask 1045509
    %v592 = vsel %vm591, %v556, %v590
    %vm593 = vcmask 1046534
    %v594 = vsel %vm593, %v557, %v592
    %vm595 = vcmask 1047559
    %v596 = vsel %vm595, %v558, %v594
    %v597 = vsel %vm583, %v560, %v559
    %v598 = vsel %vm585, %v561, %v597
    %v599 = vsel %vm587, %v562, %v598
    %v600 = vsel %vm589, %v563, %v599
    %v601 = vsel %vm591, %v564, %v600
    %v602 = vsel %vm593, %v565, %v601
    %v603 = vsel %vm595, %v566, %v602
    %v604 = vsel %vm583, %v568, %v567
    %v605 = vsel %vm585, %v569, %v604
    %v606 = vsel %vm587, %v570, %v605
    %v607 = vsel %vm589, %v571, %v606
    %v608 = vsel %vm591, %v572, %v607
    %v609 = vsel %vm593, %v573, %v608
    %v610 = vsel %vm595, %v574, %v609
    %v611 = vsel %vm583, %v576, %v575
    %v612 = vsel %vm585, %v577, %v611
    %v613 = vsel %vm587, %v578, %v612
    %v614 = vsel %vm589, %v579, %v613
    %v615 = vsel %vm591, %v580, %v614
    %v616 = vsel %vm593, %v581, %v615
    %v617 = vsel %vm595, %v582, %v616
    %v618 = vpack.c.b16 %v603, %v596
    %v619 = vpack.c.b16 %v617, %v610
    %v638 = vunpack.c.l.b16 %v180
    %v639 = vunpack.c.l.b16 %v181
    %v640 = vunpack.c.l.b16 %v182
    %v641 = vunpack.c.l.b16 %v183
    %v642 = vunpack.c.l.b16 %v184
    %v643 = vunpack.c.l.b16 %v185
    %v644 = vunpack.c.l.b16 %v186
    %v645 = vunpack.c.l.b16 %v187
    %v646 = vunpack.c.l.b16 %v188
    %v647 = vunpack.c.l.b16 %v189
    %v648 = vunpack.c.l.b16 %v190
    %v649 = vunpack.c.l.b16 %v191
    %v650 = vunpack.c.l.b16 %v192
    %v651 = vunpack.c.l.b16 %v193
    %v652 = vunpack.c.l.b16 %v194
    %v653 = vunpack.c.l.b16 %v195
    %v654 = vpack.c.b16 %v639, %v638
    %v655 = vpack.c.b16 %v641, %v640
    %v656 = vpack.c.b16 %v643, %v642
    %v657 = vpack.c.b16 %v645, %v644
    %v658 = vpack.c.b16 %v647, %v646
    %v659 = vpack.c.b16 %v649, %v648
    %v660 = vpack.c.b16 %v651, %v650
    %v661 = vpack.c.b16 %v653, %v652
    %670 = vmatprep.subr.bf16.mxu0 0
    %671 = vmatpush1.bf16.msra.mxu0 %v654
    %672 = vmatprep.subr.bf16.mxu0 0
    %673 = vmatpush1.bf16.msra.mxu0 %v655
    %674 = vmatprep.subr.bf16.mxu0 0
    %675 = vmatpush1.bf16.msra.mxu0 %v656
    %676 = vmatprep.subr.bf16.mxu0 0
    %677 = vmatpush1.bf16.msra.mxu0 %v657
    %678 = vmatprep.subr.bf16.mxu0 0
    %679 = vmatpush1.bf16.msra.mxu0 %v658
    %680 = vmatprep.subr.bf16.mxu0 0
    %681 = vmatpush1.bf16.msra.mxu0 %v659
    %682 = vmatprep.subr.bf16.mxu0 0
    %683 = vmatpush1.bf16.msra.mxu0 %v660
    %684 = vmatprep.subr.bf16.mxu0 0
    %685 = vmatpush1.bf16.msra.mxu0 %v661
    %686 = vmatprep.subr.bf16.mxu0 0
    %687 = vmatpush1.bf16.msra.mxu0 0
    %688 = vmatprep.subr.bf16.mxu0 0
    %689 = vmatpush1.bf16.msra.mxu0 0
    %690 = vmatprep.subr.bf16.mxu0 0
    %691 = vmatpush1.bf16.msra.mxu0 0
    %692 = vmatprep.subr.bf16.mxu0 0
    %693 = vmatpush1.bf16.msra.mxu0 0
    %694 = vmatprep.subr.bf16.mxu0 0
    %695 = vmatpush1.bf16.msra.mxu0 0
    %696 = vmatprep.subr.bf16.mxu0 0
    %697 = vmatpush1.bf16.msra.mxu0 0
    %698 = vmatprep.subr.bf16.mxu0 0
    %699 = vmatpush1.bf16.msra.mxu0 0
    %700 = vmatprep.subr.bf16.mxu0 0
    %701 = vmatpush1.bf16.msra.mxu0 0
    %702 = vmatprep.mubr.bf16.mxu0 0
    %703 = vmatmul.mubr.bf16.gmra.mrb[0].mxu0 %v618
    %v704 = vpop.f32.mrb[0].mxu0
    %v705 = vadd.f32 0.0, %v704
    %v706 = vpop.f32.mrb[0].mxu0
    %v707 = vpop.f32.mrb[0].mxu0
    %v708 = vadd.f32 0.0, %v707
    %v709 = vpop.f32.mrb[0].mxu0
    %710 = vmatprep.mubr.bf16.mxu0 0
    %711 = vmatmul.mubr.bf16.gmra.mrb[0].mxu0 %v619
    %v712 = vpop.f32.mrb[0].mxu0
    %v713 = vadd.f32 0.0, %v712
    %v714 = vpop.f32.mrb[0].mxu0
    %v715 = vpop.f32.mrb[0].mxu0
    %v716 = vadd.f32 0.0, %v715
    %v717 = vpop.f32.mrb[0].mxu0
    %718 = vdwg.mxu0
    %v719 = vmax.f32 %v705, 0.0
    %v720 = vmax.f32 %v708, 0.0
    %v721 = vmax.f32 %v713, 0.0
    %v722 = vmax.f32 %v716, 0.0
    %v723 = vpack.c.bf16 %v720, %v719
    %v724 = vpack.c.bf16 %v722, %v721
    %v741 = vunpack.c.l.b16 %v196
    %v742 = vunpack.c.l.b16 %v197
    %v743 = vunpack.c.l.b16 %v198
    %v744 = vunpack.c.l.b16 %v199
    %v745 = vunpack.c.l.b16 %v200
    %v746 = vunpack.c.l.b16 %v201
    %v747 = vunpack.c.l.b16 %v202
    %v748 = vunpack.c.l.b16 %v203
    %v749 = vunpack.c.l.b16 %v204
    %v750 = vunpack.c.l.b16 %v205
    %v751 = vunpack.c.l.b16 %v206
    %v752 = vunpack.c.l.b16 %v207
    %v753 = vunpack.c.l.b16 %v208
    %v754 = vunpack.c.l.b16 %v209
    %v755 = vunpack.c.l.b16 %v210
    %v756 = vunpack.c.l.b16 %v211
    %v757 = vpack.c.b16 %v742, %v741
    %v758 = vpack.c.b16 %v744, %v743
    %v759 = vpack.c.b16 %v746, %v745
    %v760 = vpack.c.b16 %v748, %v747
    %v761 = vpack.c.b16 %v750, %v749
    %v762 = vpack.c.b16 %v752, %v751
    %v763 = vpack.c.b16 %v754, %v753
    %v764 = vpack.c.b16 %v756, %v755
    %773 = vmatprep.subr.bf16.mxu0 0
    %774 = vmatpush1.bf16.msra.mxu0 %v757
    %775 = vmatprep.subr.bf16.mxu0 0
    %776 = vmatpush1.bf16.msra.mxu0 %v758
    %777 = vmatprep.subr.bf16.mxu0 0
    %778 = vmatpush1.bf16.msra.mxu0 %v759
    %779 = vmatprep.subr.bf16.mxu0 0
    %780 = vmatpush1.bf16.msra.mxu0 %v760
    %781 = vmatprep.subr.bf16.mxu0 0
    %782 = vmatpush1.bf16.msra.mxu0 %v761
    %783 = vmatprep.subr.bf16.mxu0 0
    %784 = vmatpush1.bf16.msra.mxu0 %v762
    %785 = vmatprep.subr.bf16.mxu0 0
    %786 = vmatpush1.bf16.msra.mxu0 %v763
    %787 = vmatprep.subr.bf16.mxu0 0
    %788 = vmatpush1.bf16.msra.mxu0 %v764
    %789 = vmatprep.subr.bf16.mxu0 0
    %790 = vmatpush1.bf16.msra.mxu0 0
    %791 = vmatprep.subr.bf16.mxu0 0
    %792 = vmatpush1.bf16.msra.mxu0 0
    %793 = vmatprep.subr.bf16.mxu0 0
    %794 = vmatpush1.bf16.msra.mxu0 0
    %795 = vmatprep.subr.bf16.mxu0 0
    %796 = vmatpush1.bf16.msra.mxu0 0
    %797 = vmatprep.subr.bf16.mxu0 0
    %798 = vmatpush1.bf16.msra.mxu0 0
    %799 = vmatprep.subr.bf16.mxu0 0
    %800 = vmatpush1.bf16.msra.mxu0 0
    %801 = vmatprep.subr.bf16.mxu0 0
    %802 = vmatpush1.bf16.msra.mxu0 0
    %803 = vmatprep.subr.bf16.mxu0 0
    %804 = vmatpush1.bf16.msra.mxu0 0
    %805 = vmatprep.mubr.bf16.mxu0 0
    %806 = vmatmul.mubr.bf16.gmra.mrb[0].mxu0 %v723
    %v807 = vpop.f32.mrb[0].mxu0
    %v808 = vadd.f32 0.0, %v807
    %v809 = vpop.f32.mrb[0].mxu0
    %v810 = vpop.f32.mrb[0].mxu0
    %v811 = vadd.f32 0.0, %v810
    %v812 = vpop.f32.mrb[0].mxu0
    %813 = vmatprep.mubr.bf16.mxu0 0
    %814 = vmatmul.mubr.bf16.gmra.mrb[0].mxu0 %v724
    %v815 = vpop.f32.mrb[0].mxu0
    %v816 = vadd.f32 0.0, %v815
    %v817 = vpop.f32.mrb[0].mxu0
    %v818 = vpop.f32.mrb[0].mxu0
    %v819 = vadd.f32 0.0, %v818
    %v820 = vpop.f32.mrb[0].mxu0
    %821 = vdwg.mxu0
    %v822 = vld [vmem:[#allocation7] sm:$0xff]
    %v823 = vld [vmem:[#allocation7 + $0x8] sm:$0xff]
    %v824 = vld [vmem:[#allocation7 + $0x10] sm:$0xff]
    %v825 = vld [vmem:[#allocation7 + $0x18] sm:$0xff]
    %v826 = vld [vmem:[#allocation7 + $0x20] sm:$0xff]
    %v827 = vld [vmem:[#allocation7 + $0x28] sm:$0xff]
    %v828 = vld [vmem:[#allocation7 + $0x30] sm:$0xff]
    %v829 = vld [vmem:[#allocation7 + $0x38] sm:$0xff]
    %v830 = vld [vmem:[#allocation7 + $0x40] sm:$0xff]
    %v831 = vld [vmem:[#allocation7 + $0x48] sm:$0xff]
    %v832 = vld [vmem:[#allocation7 + $0x50] sm:$0xff]
    %v833 = vld [vmem:[#allocation7 + $0x58] sm:$0xff]
    %v834 = vld [vmem:[#allocation7 + $0x60] sm:$0xff]
    %v835 = vld [vmem:[#allocation7 + $0x68] sm:$0xff]
    %v836 = vld [vmem:[#allocation7 + $0x70] sm:$0xff]
    %v837 = vld [vmem:[#allocation7 + $0x78] sm:$0xff]
    %v838 = vld [vmem:[#allocation7 + $0x80] sm:$0xff]
    %v839 = vld [vmem:[#allocation7 + $0x88] sm:$0xff]
    %v840 = vld [vmem:[#allocation7 + $0x90] sm:$0xff]
    %v841 = vld [vmem:[#allocation7 + $0x98] sm:$0xff]
    %v842 = vld [vmem:[#allocation7 + $0xa0] sm:$0xff]
    %v843 = vld [vmem:[#allocation7 + $0xa8] sm:$0xff]
    %v844 = vld [vmem:[#allocation7 + $0xb0] sm:$0xff]
    %v845 = vld [vmem:[#allocation7 + $0xb8] sm:$0xff]
    %v846 = vld [vmem:[#allocation7 + $0xc0] sm:$0xff]
    %v847 = vld [vmem:[#allocation7 + $0xc8] sm:$0xff]
    %v848 = vld [vmem:[#allocation7 + $0xd0] sm:$0xff]
    %v849 = vld [vmem:[#allocation7 + $0xd8] sm:$0xff]
    %v850 = vld [vmem:[#allocation7 + $0xe0] sm:$0xff]
    %v851 = vld [vmem:[#allocation7 + $0xe8] sm:$0xff]
    %v852 = vld [vmem:[#allocation7 + $0xf0] sm:$0xff]
    %v853 = vld [vmem:[#allocation7 + $0xf8] sm:$0xff]
    %v854 = vld [vmem:[#allocation7 + $0x100] sm:$0xff]
    %v855 = vld [vmem:[#allocation7 + $0x108] sm:$0xff]
    %v856 = vld [vmem:[#allocation7 + $0x110] sm:$0xff]
    %v857 = vld [vmem:[#allocation7 + $0x118] sm:$0xff]
    %v858 = vld [vmem:[#allocation7 + $0x120] sm:$0xff]
    %v859 = vld [vmem:[#allocation7 + $0x128] sm:$0xff]
    %v860 = vld [vmem:[#allocation7 + $0x130] sm:$0xff]
    %v861 = vld [vmem:[#allocation7 + $0x138] sm:$0xff]
    %v862 = vld [vmem:[#allocation7 + $0x140] sm:$0xff]
    %v863 = vld [vmem:[#allocation7 + $0x148] sm:$0xff]
    %v864 = vld [vmem:[#allocation7 + $0x150] sm:$0xff]
    %v865 = vld [vmem:[#allocation7 + $0x158] sm:$0xff]
    %v866 = vld [vmem:[#allocation7 + $0x160] sm:$0xff]
    %v867 = vld [vmem:[#allocation7 + $0x168] sm:$0xff]
    %v868 = vld [vmem:[#allocation7 + $0x170] sm:$0xff]
    %v869 = vld [vmem:[#allocation7 + $0x178] sm:$0xff]
    %v870 = vld [vmem:[#allocation7 + $0x180] sm:$0xff]
    %v871 = vld [vmem:[#allocation7 + $0x188] sm:$0xff]
    %v872 = vld [vmem:[#allocation7 + $0x190] sm:$0xff]
    %v873 = vld [vmem:[#allocation7 + $0x198] sm:$0xff]
    %v874 = vld [vmem:[#allocation7 + $0x1a0] sm:$0xff]
    %v875 = vld [vmem:[#allocation7 + $0x1a8] sm:$0xff]
    %v876 = vld [vmem:[#allocation7 + $0x1b0] sm:$0xff]
    %v877 = vld [vmem:[#allocation7 + $0x1b8] sm:$0xff]
    %v878 = vld [vmem:[#allocation7 + $0x1c0] sm:$0xff]
    %v879 = vld [vmem:[#allocation7 + $0x1c8] sm:$0xff]
    %v880 = vld [vmem:[#allocation7 + $0x1d0] sm:$0xff]
    %v881 = vld [vmem:[#allocation7 + $0x1d8] sm:$0xff]
    %v882 = vld [vmem:[#allocation7 + $0x1e0] sm:$0xff]
    %v883 = vld [vmem:[#allocation7 + $0x1e8] sm:$0xff]
    %v884 = vld [vmem:[#allocation7 + $0x1f0] sm:$0xff]
    %v885 = vld [vmem:[#allocation7 + $0x1f8] sm:$0xff]
    %v886 = vmul.f32 %v808, %v822
    %v887 = vmul.f32 %v811, %v823
    %v888 = vmul.f32 %v808, %v824
    %v889 = vmul.f32 %v811, %v825
    %v890 = vmul.f32 %v808, %v826
    %v891 = vmul.f32 %v811, %v827
    %v892 = vmul.f32 %v808, %v828
    %v893 = vmul.f32 %v811, %v829
    %v894 = vmul.f32 %v808, %v830
    %v895 = vmul.f32 %v811, %v831
    %v896 = vmul.f32 %v808, %v832
    %v897 = vmul.f32 %v811, %v833
    %v898 = vmul.f32 %v808, %v834
    %v899 = vmul.f32 %v811, %v835
    %v900 = vmul.f32 %v808, %v836
    %v901 = vmul.f32 %v811, %v837
    %v902 = vmul.f32 %v808, %v838
    %v903 = vmul.f32 %v811, %v839
    %v904 = vmul.f32 %v808, %v840
    %v905 = vmul.f32 %v811, %v841
    %v906 = vmul.f32 %v808, %v842
    %v907 = vmul.f32 %v811, %v843
    %v908 = vmul.f32 %v808, %v844
    %v909 = vmul.f32 %v811, %v845
    %v910 = vmul.f32 %v808, %v846
    %v911 = vmul.f32 %v811, %v847
    %v912 = vmul.f32 %v808, %v848
    %v913 = vmul.f32 %v811, %v849
    %v914 = vmul.f32 %v808, %v850
    %v915 = vmul.f32 %v811, %v851
    %v916 = vmul.f32 %v808, %v852
    %v917 = vmul.f32 %v811, %v853
    %v918 = vmul.f32 %v808, %v854
    %v919 = vmul.f32 %v811, %v855
    %v920 = vmul.f32 %v808, %v856
    %v921 = vmul.f32 %v811, %v857
    %v922 = vmul.f32 %v808, %v858
    %v923 = vmul.f32 %v811, %v859
    %v924 = vmul.f32 %v808, %v860
    %v925 = vmul.f32 %v811, %v861
    %v926 = vmul.f32 %v808, %v862
    %v927 = vmul.f32 %v811, %v863
    %v928 = vmul.f32 %v808, %v864
    %v929 = vmul.f32 %v811, %v865
    %v930 = vmul.f32 %v808, %v866
    %v931 = vmul.f32 %v811, %v867
    %v932 = vmul.f32 %v808, %v868
    %v933 = vmul.f32 %v811, %v869
    %v934 = vmul.f32 %v808, %v870
    %v935 = vmul.f32 %v811, %v871
    %v936 = vmul.f32 %v808, %v872
    %v937 = vmul.f32 %v811, %v873
    %v938 = vmul.f32 %v808, %v874
    %v939 = vmul.f32 %v811, %v875
    %v940 = vmul.f32 %v808, %v876
    %v941 = vmul.f32 %v811, %v877
    %v942 = vmul.f32 %v808, %v878
    %v943 = vmul.f32 %v811, %v879
    %v944 = vmul.f32 %v808, %v880
    %v945 = vmul.f32 %v811, %v881
    %v946 = vmul.f32 %v808, %v882
    %v947 = vmul.f32 %v811, %v883
    %v948 = vmul.f32 %v808, %v884
    %v949 = vmul.f32 %v811, %v885
    %v950 = vmul.f32 %v816, %v822
    %v951 = vmul.f32 %v819, %v823
    %v952 = vmul.f32 %v816, %v824
    %v953 = vmul.f32 %v819, %v825
    %v954 = vmul.f32 %v816, %v826
    %v955 = vmul.f32 %v819, %v827
    %v956 = vmul.f32 %v816, %v828
    %v957 = vmul.f32 %v819, %v829
    %v958 = vmul.f32 %v816, %v830
    %v959 = vmul.f32 %v819, %v831
    %v960 = vmul.f32 %v816, %v832
    %v961 = vmul.f32 %v819, %v833
    %v962 = vmul.f32 %v816, %v834
    %v963 = vmul.f32 %v819, %v835
    %v964 = vmul.f32 %v816, %v836
    %v965 = vmul.f32 %v819, %v837
    %v966 = vmul.f32 %v816, %v838
    %v967 = vmul.f32 %v819, %v839
    %v968 = vmul.f32 %v816, %v840
    %v969 = vmul.f32 %v819, %v841
    %v970 = vmul.f32 %v816, %v842
    %v971 = vmul.f32 %v819, %v843
    %v972 = vmul.f32 %v816, %v844
    %v973 = vmul.f32 %v819, %v845
    %v974 = vmul.f32 %v816, %v846
    %v975 = vmul.f32 %v819, %v847
    %v976 = vmul.f32 %v816, %v848
    %v977 = vmul.f32 %v819, %v849
    %v978 = vmul.f32 %v816, %v850
    %v979 = vmul.f32 %v819, %v851
    %v980 = vmul.f32 %v816, %v852
    %v981 = vmul.f32 %v819, %v853
    %v982 = vmul.f32 %v816, %v854
    %v983 = vmul.f32 %v819, %v855
    %v984 = vmul.f32 %v816, %v856
    %v985 = vmul.f32 %v819, %v857
    %v986 = vmul.f32 %v816, %v858
    %v987 = vmul.f32 %v819, %v859
    %v988 = vmul.f32 %v816, %v860
    %v989 = vmul.f32 %v819, %v861
    %v990 = vmul.f32 %v816, %v862
    %v991 = vmul.f32 %v819, %v863
    %v992 = vmul.f32 %v816, %v864
    %v993 = vmul.f32 %v819, %v865
    %v994 = vmul.f32 %v816, %v866
    %v995 = vmul.f32 %v819, %v867
    %v996 = vmul.f32 %v816, %v868
    %v997 = vmul.f32 %v819, %v869
    %v998 = vmul.f32 %v816, %v870
    %v999 = vmul.f32 %v819, %v871
    %v1000 = vmul.f32 %v816, %v872
    %v1001 = vmul.f32 %v819, %v873
    %v1002 = vmul.f32 %v816, %v874
    %v1003 = vmul.f32 %v819, %v875
    %v1004 = vmul.f32 %v816, %v876
    %v1005 = vmul.f32 %v819, %v877
    %v1006 = vmul.f32 %v816, %v878
    %v1007 = vmul.f32 %v819, %v879
    %v1008 = vmul.f32 %v816, %v880
    %v1009 = vmul.f32 %v819, %v881
    %v1010 = vmul.f32 %v816, %v882
    %v1011 = vmul.f32 %v819, %v883
    %v1012 = vmul.f32 %v816, %v884
    %v1013 = vmul.f32 %v819, %v885
    %v1014 = vadd.f32 %v886, %v887
    %v1015 = vrot.slane %v1014, 4
    %v1016 = vadd.f32 %v1014, %v1015
    %v1017 = vrot.slane %v1016, 2
    %v1018 = vadd.f32 %v1016, %v1017
    %v1019 = vrot.slane %v1018, 1
    %v1020 = vadd.f32 %v1018, %v1019
    %v1021 = vadd.f32 %v888, %v889
    %v1022 = vrot.slane %v1021, 4
    %v1023 = vadd.f32 %v1021, %v1022
    %v1024 = vrot.slane %v1023, 2
    %v1025 = vadd.f32 %v1023, %v1024
    %v1026 = vrot.slane %v1025, 1
    %v1027 = vadd.f32 %v1025, %v1026
    %v1028 = vadd.f32 %v890, %v891
    %v1029 = vrot.slane %v1028, 4
    %v1030 = vadd.f32 %v1028, %v1029
    %v1031 = vrot.slane %v1030, 2
    %v1032 = vadd.f32 %v1030, %v1031
    %v1033 = vrot.slane %v1032, 1
    %v1034 = vadd.f32 %v1032, %v1033
    %v1035 = vadd.f32 %v892, %v893
    %v1036 = vrot.slane %v1035, 4
    %v1037 = vadd.f32 %v1035, %v1036
    %v1038 = vrot.slane %v1037, 2
    %v1039 = vadd.f32 %v1037, %v1038
    %v1040 = vrot.slane %v1039, 1
    %v1041 = vadd.f32 %v1039, %v1040
    %v1042 = vadd.f32 %v894, %v895
    %v1043 = vrot.slane %v1042, 4
    %v1044 = vadd.f32 %v1042, %v1043
    %v1045 = vrot.slane %v1044, 2
    %v1046 = vadd.f32 %v1044, %v1045
    %v1047 = vrot.slane %v1046, 1
    %v1048 = vadd.f32 %v1046, %v1047
    %v1049 = vadd.f32 %v896, %v897
    %v1050 = vrot.slane %v1049, 4
    %v1051 = vadd.f32 %v1049, %v1050
    %v1052 = vrot.slane %v1051, 2
    %v1053 = vadd.f32 %v1051, %v1052
    %v1054 = vrot.slane %v1053, 1
    %v1055 = vadd.f32 %v1053, %v1054
    %v1056 = vadd.f32 %v898, %v899
    %v1057 = vrot.slane %v1056, 4
    %v1058 = vadd.f32 %v1056, %v1057
    %v1059 = vrot.slane %v1058, 2
    %v1060 = vadd.f32 %v1058, %v1059
    %v1061 = vrot.slane %v1060, 1
    %v1062 = vadd.f32 %v1060, %v1061
    %v1063 = vadd.f32 %v900, %v901
    %v1064 = vrot.slane %v1063, 4
    %v1065 = vadd.f32 %v1063, %v1064
    %v1066 = vrot.slane %v1065, 2
    %v1067 = vadd.f32 %v1065, %v1066
    %v1068 = vrot.slane %v1067, 1
    %v1069 = vadd.f32 %v1067, %v1068
    %v1070 = vadd.f32 %v902, %v903
    %v1071 = vrot.slane %v1070, 4
    %v1072 = vadd.f32 %v1070, %v1071
    %v1073 = vrot.slane %v1072, 2
    %v1074 = vadd.f32 %v1072, %v1073
    %v1075 = vrot.slane %v1074, 1
    %v1076 = vadd.f32 %v1074, %v1075
    %v1077 = vadd.f32 %v904, %v905
    %v1078 = vrot.slane %v1077, 4
    %v1079 = vadd.f32 %v1077, %v1078
    %v1080 = vrot.slane %v1079, 2
    %v1081 = vadd.f32 %v1079, %v1080
    %v1082 = vrot.slane %v1081, 1
    %v1083 = vadd.f32 %v1081, %v1082
    %v1084 = vadd.f32 %v906, %v907
    %v1085 = vrot.slane %v1084, 4
    %v1086 = vadd.f32 %v1084, %v1085
    %v1087 = vrot.slane %v1086, 2
    %v1088 = vadd.f32 %v1086, %v1087
    %v1089 = vrot.slane %v1088, 1
    %v1090 = vadd.f32 %v1088, %v1089
    %v1091 = vadd.f32 %v908, %v909
    %v1092 = vrot.slane %v1091, 4
    %v1093 = vadd.f32 %v1091, %v1092
    %v1094 = vrot.slane %v1093, 2
    %v1095 = vadd.f32 %v1093, %v1094
    %v1096 = vrot.slane %v1095, 1
    %v1097 = vadd.f32 %v1095, %v1096
    %v1098 = vadd.f32 %v910, %v911
    %v1099 = vrot.slane %v1098, 4
    %v1100 = vadd.f32 %v1098, %v1099
    %v1101 = vrot.slane %v1100, 2
    %v1102 = vadd.f32 %v1100, %v1101
    %v1103 = vrot.slane %v1102, 1
    %v1104 = vadd.f32 %v1102, %v1103
    %v1105 = vadd.f32 %v912, %v913
    %v1106 = vrot.slane %v1105, 4
    %v1107 = vadd.f32 %v1105, %v1106
    %v1108 = vrot.slane %v1107, 2
    %v1109 = vadd.f32 %v1107, %v1108
    %v1110 = vrot.slane %v1109, 1
    %v1111 = vadd.f32 %v1109, %v1110
    %v1112 = vadd.f32 %v914, %v915
    %v1113 = vrot.slane %v1112, 4
    %v1114 = vadd.f32 %v1112, %v1113
    %v1115 = vrot.slane %v1114, 2
    %v1116 = vadd.f32 %v1114, %v1115
    %v1117 = vrot.slane %v1116, 1
    %v1118 = vadd.f32 %v1116, %v1117
    %v1119 = vadd.f32 %v916, %v917
    %v1120 = vrot.slane %v1119, 4
    %v1121 = vadd.f32 %v1119, %v1120
    %v1122 = vrot.slane %v1121, 2
    %v1123 = vadd.f32 %v1121, %v1122
    %v1124 = vrot.slane %v1123, 1
    %v1125 = vadd.f32 %v1123, %v1124
    %v1126 = vadd.f32 %v918, %v919
    %v1127 = vrot.slane %v1126, 4
    %v1128 = vadd.f32 %v1126, %v1127
    %v1129 = vrot.slane %v1128, 2
    %v1130 = vadd.f32 %v1128, %v1129
    %v1131 = vrot.slane %v1130, 1
    %v1132 = vadd.f32 %v1130, %v1131
    %v1133 = vadd.f32 %v920, %v921
    %v1134 = vrot.slane %v1133, 4
    %v1135 = vadd.f32 %v1133, %v1134
    %v1136 = vrot.slane %v1135, 2
    %v1137 = vadd.f32 %v1135, %v1136
    %v1138 = vrot.slane %v1137, 1
    %v1139 = vadd.f32 %v1137, %v1138
    %v1140 = vadd.f32 %v922, %v923
    %v1141 = vrot.slane %v1140, 4
    %v1142 = vadd.f32 %v1140, %v1141
    %v1143 = vrot.slane %v1142, 2
    %v1144 = vadd.f32 %v1142, %v1143
    %v1145 = vrot.slane %v1144, 1
    %v1146 = vadd.f32 %v1144, %v1145
    %v1147 = vadd.f32 %v924, %v925
    %v1148 = vrot.slane %v1147, 4
    %v1149 = vadd.f32 %v1147, %v1148
    %v1150 = vrot.slane %v1149, 2
    %v1151 = vadd.f32 %v1149, %v1150
    %v1152 = vrot.slane %v1151, 1
    %v1153 = vadd.f32 %v1151, %v1152
    %v1154 = vadd.f32 %v926, %v927
    %v1155 = vrot.slane %v1154, 4
    %v1156 = vadd.f32 %v1154, %v1155
    %v1157 = vrot.slane %v1156, 2
    %v1158 = vadd.f32 %v1156, %v1157
    %v1159 = vrot.slane %v1158, 1
    %v1160 = vadd.f32 %v1158, %v1159
    %v1161 = vadd.f32 %v928, %v929
    %v1162 = vrot.slane %v1161, 4
    %v1163 = vadd.f32 %v1161, %v1162
    %v1164 = vrot.slane %v1163, 2
    %v1165 = vadd.f32 %v1163, %v1164
    %v1166 = vrot.slane %v1165, 1
    %v1167 = vadd.f32 %v1165, %v1166
    %v1168 = vadd.f32 %v930, %v931
    %v1169 = vrot.slane %v1168, 4
    %v1170 = vadd.f32 %v1168, %v1169
    %v1171 = vrot.slane %v1170, 2
    %v1172 = vadd.f32 %v1170, %v1171
    %v1173 = vrot.slane %v1172, 1
    %v1174 = vadd.f32 %v1172, %v1173
    %v1175 = vadd.f32 %v932, %v933
    %v1176 = vrot.slane %v1175, 4
    %v1177 = vadd.f32 %v1175, %v1176
    %v1178 = vrot.slane %v1177, 2
    %v1179 = vadd.f32 %v1177, %v1178
    %v1180 = vrot.slane %v1179, 1
    %v1181 = vadd.f32 %v1179, %v1180
    %v1182 = vadd.f32 %v934, %v935
    %v1183 = vrot.slane %v1182, 4
    %v1184 = vadd.f32 %v1182, %v1183
    %v1185 = vrot.slane %v1184, 2
    %v1186 = vadd.f32 %v1184, %v1185
    %v1187 = vrot.slane %v1186, 1
    %v1188 = vadd.f32 %v1186, %v1187
    %v1189 = vadd.f32 %v936, %v937
    %v1190 = vrot.slane %v1189, 4
    %v1191 = vadd.f32 %v1189, %v1190
    %v1192 = vrot.slane %v1191, 2
    %v1193 = vadd.f32 %v1191, %v1192
    %v1194 = vrot.slane %v1193, 1
    %v1195 = vadd.f32 %v1193, %v1194
    %v1196 = vadd.f32 %v938, %v939
    %v1197 = vrot.slane %v1196, 4
    %v1198 = vadd.f32 %v1196, %v1197
    %v1199 = vrot.slane %v1198, 2
    %v1200 = vadd.f32 %v1198, %v1199
    %v1201 = vrot.slane %v1200, 1
    %v1202 = vadd.f32 %v1200, %v1201
    %v1203 = vadd.f32 %v940, %v941
    %v1204 = vrot.slane %v1203, 4
    %v1205 = vadd.f32 %v1203, %v1204
    %v1206 = vrot.slane %v1205, 2
    %v1207 = vadd.f32 %v1205, %v1206
    %v1208 = vrot.slane %v1207, 1
    %v1209 = vadd.f32 %v1207, %v1208
    %v1210 = vadd.f32 %v942, %v943
    %v1211 = vrot.slane %v1210, 4
    %v1212 = vadd.f32 %v1210, %v1211
    %v1213 = vrot.slane %v1212, 2
    %v1214 = vadd.f32 %v1212, %v1213
    %v1215 = vrot.slane %v1214, 1
    %v1216 = vadd.f32 %v1214, %v1215
    %v1217 = vadd.f32 %v944, %v945
    %v1218 = vrot.slane %v1217, 4
    %v1219 = vadd.f32 %v1217, %v1218
    %v1220 = vrot.slane %v1219, 2
    %v1221 = vadd.f32 %v1219, %v1220
    %v1222 = vrot.slane %v1221, 1
    %v1223 = vadd.f32 %v1221, %v1222
    %v1224 = vadd.f32 %v946, %v947
    %v1225 = vrot.slane %v1224, 4
    %v1226 = vadd.f32 %v1224, %v1225
    %v1227 = vrot.slane %v1226, 2
    %v1228 = vadd.f32 %v1226, %v1227
    %v1229 = vrot.slane %v1228, 1
    %v1230 = vadd.f32 %v1228, %v1229
    %v1231 = vadd.f32 %v948, %v949
    %v1232 = vrot.slane %v1231, 4
    %v1233 = vadd.f32 %v1231, %v1232
    %v1234 = vrot.slane %v1233, 2
    %v1235 = vadd.f32 %v1233, %v1234
    %v1236 = vrot.slane %v1235, 1
    %v1237 = vadd.f32 %v1235, %v1236
    %v1238 = vadd.f32 %v950, %v951
    %v1239 = vrot.slane %v1238, 4
    %v1240 = vadd.f32 %v1238, %v1239
    %v1241 = vrot.slane %v1240, 2
    %v1242 = vadd.f32 %v1240, %v1241
    %v1243 = vrot.slane %v1242, 1
    %v1244 = vadd.f32 %v1242, %v1243
    %v1245 = vadd.f32 %v952, %v953
    %v1246 = vrot.slane %v1245, 4
    %v1247 = vadd.f32 %v1245, %v1246
    %v1248 = vrot.slane %v1247, 2
    %v1249 = vadd.f32 %v1247, %v1248
    %v1250 = vrot.slane %v1249, 1
    %v1251 = vadd.f32 %v1249, %v1250
    %v1252 = vadd.f32 %v954, %v955
    %v1253 = vrot.slane %v1252, 4
    %v1254 = vadd.f32 %v1252, %v1253
    %v1255 = vrot.slane %v1254, 2
    %v1256 = vadd.f32 %v1254, %v1255
    %v1257 = vrot.slane %v1256, 1
    %v1258 = vadd.f32 %v1256, %v1257
    %v1259 = vadd.f32 %v956, %v957
    %v1260 = vrot.slane %v1259, 4
    %v1261 = vadd.f32 %v1259, %v1260
    %v1262 = vrot.slane %v1261, 2
    %v1263 = vadd.f32 %v1261, %v1262
    %v1264 = vrot.slane %v1263, 1
    %v1265 = vadd.f32 %v1263, %v1264
    %v1266 = vadd.f32 %v958, %v959
    %v1267 = vrot.slane %v1266, 4
    %v1268 = vadd.f32 %v1266, %v1267
    %v1269 = vrot.slane %v1268, 2
    %v1270 = vadd.f32 %v1268, %v1269
    %v1271 = vrot.slane %v1270, 1
    %v1272 = vadd.f32 %v1270, %v1271
    %v1273 = vadd.f32 %v960, %v961
    %v1274 = vrot.slane %v1273, 4
    %v1275 = vadd.f32 %v1273, %v1274
    %v1276 = vrot.slane %v1275, 2
    %v1277 = vadd.f32 %v1275, %v1276
    %v1278 = vrot.slane %v1277, 1
    %v1279 = vadd.f32 %v1277, %v1278
    %v1280 = vadd.f32 %v962, %v963
    %v1281 = vrot.slane %v1280, 4
    %v1282 = vadd.f32 %v1280, %v1281
    %v1283 = vrot.slane %v1282, 2
    %v1284 = vadd.f32 %v1282, %v1283
    %v1285 = vrot.slane %v1284, 1
    %v1286 = vadd.f32 %v1284, %v1285
    %v1287 = vadd.f32 %v964, %v965
    %v1288 = vrot.slane %v1287, 4
    %v1289 = vadd.f32 %v1287, %v1288
    %v1290 = vrot.slane %v1289, 2
    %v1291 = vadd.f32 %v1289, %v1290
    %v1292 = vrot.slane %v1291, 1
    %v1293 = vadd.f32 %v1291, %v1292
    %v1294 = vadd.f32 %v966, %v967
    %v1295 = vrot.slane %v1294, 4
    %v1296 = vadd.f32 %v1294, %v1295
    %v1297 = vrot.slane %v1296, 2
    %v1298 = vadd.f32 %v1296, %v1297
    %v1299 = vrot.slane %v1298, 1
    %v1300 = vadd.f32 %v1298, %v1299
    %v1301 = vadd.f32 %v968, %v969
    %v1302 = vrot.slane %v1301, 4
    %v1303 = vadd.f32 %v1301, %v1302
    %v1304 = vrot.slane %v1303, 2
    %v1305 = vadd.f32 %v1303, %v1304
    %v1306 = vrot.slane %v1305, 1
    %v1307 = vadd.f32 %v1305, %v1306
    %v1308 = vadd.f32 %v970, %v971
    %v1309 = vrot.slane %v1308, 4
    %v1310 = vadd.f32 %v1308, %v1309
    %v1311 = vrot.slane %v1310, 2
    %v1312 = vadd.f32 %v1310, %v1311
    %v1313 = vrot.slane %v1312, 1
    %v1314 = vadd.f32 %v1312, %v1313
    %v1315 = vadd.f32 %v972, %v973
    %v1316 = vrot.slane %v1315, 4
    %v1317 = vadd.f32 %v1315, %v1316
    %v1318 = vrot.slane %v1317, 2
    %v1319 = vadd.f32 %v1317, %v1318
    %v1320 = vrot.slane %v1319, 1
    %v1321 = vadd.f32 %v1319, %v1320
    %v1322 = vadd.f32 %v974, %v975
    %v1323 = vrot.slane %v1322, 4
    %v1324 = vadd.f32 %v1322, %v1323
    %v1325 = vrot.slane %v1324, 2
    %v1326 = vadd.f32 %v1324, %v1325
    %v1327 = vrot.slane %v1326, 1
    %v1328 = vadd.f32 %v1326, %v1327
    %v1329 = vadd.f32 %v976, %v977
    %v1330 = vrot.slane %v1329, 4
    %v1331 = vadd.f32 %v1329, %v1330
    %v1332 = vrot.slane %v1331, 2
    %v1333 = vadd.f32 %v1331, %v1332
    %v1334 = vrot.slane %v1333, 1
    %v1335 = vadd.f32 %v1333, %v1334
    %v1336 = vadd.f32 %v978, %v979
    %v1337 = vrot.slane %v1336, 4
    %v1338 = vadd.f32 %v1336, %v1337
    %v1339 = vrot.slane %v1338, 2
    %v1340 = vadd.f32 %v1338, %v1339
    %v1341 = vrot.slane %v1340, 1
    %v1342 = vadd.f32 %v1340, %v1341
    %v1343 = vadd.f32 %v980, %v981
    %v1344 = vrot.slane %v1343, 4
    %v1345 = vadd.f32 %v1343, %v1344
    %v1346 = vrot.slane %v1345, 2
    %v1347 = vadd.f32 %v1345, %v1346
    %v1348 = vrot.slane %v1347, 1
    %v1349 = vadd.f32 %v1347, %v1348
    %v1350 = vadd.f32 %v982, %v983
    %v1351 = vrot.slane %v1350, 4
    %v1352 = vadd.f32 %v1350, %v1351
    %v1353 = vrot.slane %v1352, 2
    %v1354 = vadd.f32 %v1352, %v1353
    %v1355 = vrot.slane %v1354, 1
    %v1356 = vadd.f32 %v1354, %v1355
    %v1357 = vadd.f32 %v984, %v985
    %v1358 = vrot.slane %v1357, 4
    %v1359 = vadd.f32 %v1357, %v1358
    %v1360 = vrot.slane %v1359, 2
    %v1361 = vadd.f32 %v1359, %v1360
    %v1362 = vrot.slane %v1361, 1
    %v1363 = vadd.f32 %v1361, %v1362
    %v1364 = vadd.f32 %v986, %v987
    %v1365 = vrot.slane %v1364, 4
    %v1366 = vadd.f32 %v1364, %v1365
    %v1367 = vrot.slane %v1366, 2
    %v1368 = vadd.f32 %v1366, %v1367
    %v1369 = vrot.slane %v1368, 1
    %v1370 = vadd.f32 %v1368, %v1369
    %v1371 = vadd.f32 %v988, %v989
    %v1372 = vrot.slane %v1371, 4
    %v1373 = vadd.f32 %v1371, %v1372
    %v1374 = vrot.slane %v1373, 2
    %v1375 = vadd.f32 %v1373, %v1374
    %v1376 = vrot.slane %v1375, 1
    %v1377 = vadd.f32 %v1375, %v1376
    %v1378 = vadd.f32 %v990, %v991
    %v1379 = vrot.slane %v1378, 4
    %v1380 = vadd.f32 %v1378, %v1379
    %v1381 = vrot.slane %v1380, 2
    %v1382 = vadd.f32 %v1380, %v1381
    %v1383 = vrot.slane %v1382, 1
    %v1384 = vadd.f32 %v1382, %v1383
    %v1385 = vadd.f32 %v992, %v993
    %v1386 = vrot.slane %v1385, 4
    %v1387 = vadd.f32 %v1385, %v1386
    %v1388 = vrot.slane %v1387, 2
    %v1389 = vadd.f32 %v1387, %v1388
    %v1390 = vrot.slane %v1389, 1
    %v1391 = vadd.f32 %v1389, %v1390
    %v1392 = vadd.f32 %v994, %v995
    %v1393 = vrot.slane %v1392, 4
    %v1394 = vadd.f32 %v1392, %v1393
    %v1395 = vrot.slane %v1394, 2
    %v1396 = vadd.f32 %v1394, %v1395
    %v1397 = vrot.slane %v1396, 1
    %v1398 = vadd.f32 %v1396, %v1397
    %v1399 = vadd.f32 %v996, %v997
    %v1400 = vrot.slane %v1399, 4
    %v1401 = vadd.f32 %v1399, %v1400
    %v1402 = vrot.slane %v1401, 2
    %v1403 = vadd.f32 %v1401, %v1402
    %v1404 = vrot.slane %v1403, 1
    %v1405 = vadd.f32 %v1403, %v1404
    %v1406 = vadd.f32 %v998, %v999
    %v1407 = vrot.slane %v1406, 4
    %v1408 = vadd.f32 %v1406, %v1407
    %v1409 = vrot.slane %v1408, 2
    %v1410 = vadd.f32 %v1408, %v1409
    %v1411 = vrot.slane %v1410, 1
    %v1412 = vadd.f32 %v1410, %v1411
    %v1413 = vadd.f32 %v1000, %v1001
    %v1414 = vrot.slane %v1413, 4
    %v1415 = vadd.f32 %v1413, %v1414
    %v1416 = vrot.slane %v1415, 2
    %v1417 = vadd.f32 %v1415, %v1416
    %v1418 = vrot.slane %v1417, 1
    %v1419 = vadd.f32 %v1417, %v1418
    %v1420 = vadd.f32 %v1002, %v1003
    %v1421 = vrot.slane %v1420, 4
    %v1422 = vadd.f32 %v1420, %v1421
    %v1423 = vrot.slane %v1422, 2
    %v1424 = vadd.f32 %v1422, %v1423
    %v1425 = vrot.slane %v1424, 1
    %v1426 = vadd.f32 %v1424, %v1425
    %v1427 = vadd.f32 %v1004, %v1005
    %v1428 = vrot.slane %v1427, 4
    %v1429 = vadd.f32 %v1427, %v1428
    %v1430 = vrot.slane %v1429, 2
    %v1431 = vadd.f32 %v1429, %v1430
    %v1432 = vrot.slane %v1431, 1
    %v1433 = vadd.f32 %v1431, %v1432
    %v1434 = vadd.f32 %v1006, %v1007
    %v1435 = vrot.slane %v1434, 4
    %v1436 = vadd.f32 %v1434, %v1435
    %v1437 = vrot.slane %v1436, 2
    %v1438 = vadd.f32 %v1436, %v1437
    %v1439 = vrot.slane %v1438, 1
    %v1440 = vadd.f32 %v1438, %v1439
    %v1441 = vadd.f32 %v1008, %v1009
    %v1442 = vrot.slane %v1441, 4
    %v1443 = vadd.f32 %v1441, %v1442
    %v1444 = vrot.slane %v1443, 2
    %v1445 = vadd.f32 %v1443, %v1444
    %v1446 = vrot.slane %v1445, 1
    %v1447 = vadd.f32 %v1445, %v1446
    %v1448 = vadd.f32 %v1010, %v1011
    %v1449 = vrot.slane %v1448, 4
    %v1450 = vadd.f32 %v1448, %v1449
    %v1451 = vrot.slane %v1450, 2
    %v1452 = vadd.f32 %v1450, %v1451
    %v1453 = vrot.slane %v1452, 1
    %v1454 = vadd.f32 %v1452, %v1453
    %v1455 = vadd.f32 %v1012, %v1013
    %v1456 = vrot.slane %v1455, 4
    %v1457 = vadd.f32 %v1455, %v1456
    %v1458 = vrot.slane %v1457, 2
    %v1459 = vadd.f32 %v1457, %v1458
    %v1460 = vrot.slane %v1459, 1
    %v1461 = vadd.f32 %v1459, %v1460
    %v1462 = vpack.c.bf16 %v1020, %v1020
    %v1463 = vpack.c.bf16 %v1027, %v1027
    %v1464 = vpack.c.bf16 %v1034, %v1034
    %v1465 = vpack.c.bf16 %v1041, %v1041
    %v1466 = vpack.c.bf16 %v1048, %v1048
    %v1467 = vpack.c.bf16 %v1055, %v1055
    %v1468 = vpack.c.bf16 %v1062, %v1062
    %v1469 = vpack.c.bf16 %v1069, %v1069
    %v1470 = vpack.c.bf16 %v1076, %v1076
    %v1471 = vpack.c.bf16 %v1083, %v1083
    %v1472 = vpack.c.bf16 %v1090, %v1090
    %v1473 = vpack.c.bf16 %v1097, %v1097
    %v1474 = vpack.c.bf16 %v1104, %v1104
    %v1475 = vpack.c.bf16 %v1111, %v1111
    %v1476 = vpack.c.bf16 %v1118, %v1118
    %v1477 = vpack.c.bf16 %v1125, %v1125
    %v1478 = vpack.c.bf16 %v1132, %v1132
    %v1479 = vpack.c.bf16 %v1139, %v1139
    %v1480 = vpack.c.bf16 %v1146, %v1146
    %v1481 = vpack.c.bf16 %v1153, %v1153
    %v1482 = vpack.c.bf16 %v1160, %v1160
    %v1483 = vpack.c.bf16 %v1167, %v1167
    %v1484 = vpack.c.bf16 %v1174, %v1174
    %v1485 = vpack.c.bf16 %v1181, %v1181
    %v1486 = vpack.c.bf16 %v1188, %v1188
    %v1487 = vpack.c.bf16 %v1195, %v1195
    %v1488 = vpack.c.bf16 %v1202, %v1202
    %v1489 = vpack.c.bf16 %v1209, %v1209
    %v1490 = vpack.c.bf16 %v1216, %v1216
    %v1491 = vpack.c.bf16 %v1223, %v1223
    %v1492 = vpack.c.bf16 %v1230, %v1230
    %v1493 = vpack.c.bf16 %v1237, %v1237
    %v1494 = vpack.c.bf16 %v1244, %v1244
    %v1495 = vpack.c.bf16 %v1251, %v1251
    %v1496 = vpack.c.bf16 %v1258, %v1258
    %v1497 = vpack.c.bf16 %v1265, %v1265
    %v1498 = vpack.c.bf16 %v1272, %v1272
    %v1499 = vpack.c.bf16 %v1279, %v1279
    %v1500 = vpack.c.bf16 %v1286, %v1286
    %v1501 = vpack.c.bf16 %v1293, %v1293
    %v1502 = vpack.c.bf16 %v1300, %v1300
    %v1503 = vpack.c.bf16 %v1307, %v1307
    %v1504 = vpack.c.bf16 %v1314, %v1314
    %v1505 = vpack.c.bf16 %v1321, %v1321
    %v1506 = vpack.c.bf16 %v1328, %v1328
    %v1507 = vpack.c.bf16 %v1335, %v1335
    %v1508 = vpack.c.bf16 %v1342, %v1342
    %v1509 = vpack.c.bf16 %v1349, %v1349
    %v1510 = vpack.c.bf16 %v1356, %v1356
    %v1511 = vpack.c.bf16 %v1363, %v1363
    %v1512 = vpack.c.bf16 %v1370, %v1370
    %v1513 = vpack.c.bf16 %v1377, %v1377
    %v1514 = vpack.c.bf16 %v1384, %v1384
    %v1515 = vpack.c.bf16 %v1391, %v1391
    %v1516 = vpack.c.bf16 %v1398, %v1398
    %v1517 = vpack.c.bf16 %v1405, %v1405
    %v1518 = vpack.c.bf16 %v1412, %v1412
    %v1519 = vpack.c.bf16 %v1419, %v1419
    %v1520 = vpack.c.bf16 %v1426, %v1426
    %v1521 = vpack.c.bf16 %v1433, %v1433
    %v1522 = vpack.c.bf16 %v1440, %v1440
    %v1523 = vpack.c.bf16 %v1447, %v1447
    %v1524 = vpack.c.bf16 %v1454, %v1454
    %v1525 = vpack.c.bf16 %v1461, %v1461
    %v1590 = vunpack.c.l.b16 %v1462
    %v1591 = vunpack.c.l.b16 %v1463
    %v1592 = vunpack.c.l.b16 %v1464
    %v1593 = vunpack.c.l.b16 %v1465
    %v1594 = vunpack.c.l.b16 %v1466
    %v1595 = vunpack.c.l.b16 %v1467
    %v1596 = vunpack.c.l.b16 %v1468
    %v1597 = vunpack.c.l.b16 %v1469
    %v1598 = vunpack.c.l.b16 %v1470
    %v1599 = vunpack.c.l.b16 %v1471
    %v1600 = vunpack.c.l.b16 %v1472
    %v1601 = vunpack.c.l.b16 %v1473
    %v1602 = vunpack.c.l.b16 %v1474
    %v1603 = vunpack.c.l.b16 %v1475
    %v1604 = vunpack.c.l.b16 %v1476
    %v1605 = vunpack.c.l.b16 %v1477
    %v1606 = vunpack.c.l.b16 %v1478
    %v1607 = vunpack.c.l.b16 %v1479
    %v1608 = vunpack.c.l.b16 %v1480
    %v1609 = vunpack.c.l.b16 %v1481
    %v1610 = vunpack.c.l.b16 %v1482
    %v1611 = vunpack.c.l.b16 %v1483
    %v1612 = vunpack.c.l.b16 %v1484
    %v1613 = vunpack.c.l.b16 %v1485
    %v1614 = vunpack.c.l.b16 %v1486
    %v1615 = vunpack.c.l.b16 %v1487
    %v1616 = vunpack.c.l.b16 %v1488
    %v1617 = vunpack.c.l.b16 %v1489
    %v1618 = vunpack.c.l.b16 %v1490
    %v1619 = vunpack.c.l.b16 %v1491
    %v1620 = vunpack.c.l.b16 %v1492
    %v1621 = vunpack.c.l.b16 %v1493
    %v1622 = vunpack.c.l.b16 %v1494
    %v1623 = vunpack.c.l.b16 %v1495
    %v1624 = vunpack.c.l.b16 %v1496
    %v1625 = vunpack.c.l.b16 %v1497
    %v1626 = vunpack.c.l.b16 %v1498
    %v1627 = vunpack.c.l.b16 %v1499
    %v1628 = vunpack.c.l.b16 %v1500
    %v1629 = vunpack.c.l.b16 %v1501
    %v1630 = vunpack.c.l.b16 %v1502
    %v1631 = vunpack.c.l.b16 %v1503
    %v1632 = vunpack.c.l.b16 %v1504
    %v1633 = vunpack.c.l.b16 %v1505
    %v1634 = vunpack.c.l.b16 %v1506
    %v1635 = vunpack.c.l.b16 %v1507
    %v1636 = vunpack.c.l.b16 %v1508
    %v1637 = vunpack.c.l.b16 %v1509
    %v1638 = vunpack.c.l.b16 %v1510
    %v1639 = vunpack.c.l.b16 %v1511
    %v1640 = vunpack.c.l.b16 %v1512
    %v1641 = vunpack.c.l.b16 %v1513
    %v1642 = vunpack.c.l.b16 %v1514
    %v1643 = vunpack.c.l.b16 %v1515
    %v1644 = vunpack.c.l.b16 %v1516
    %v1645 = vunpack.c.l.b16 %v1517
    %v1646 = vunpack.c.l.b16 %v1518
    %v1647 = vunpack.c.l.b16 %v1519
    %v1648 = vunpack.c.l.b16 %v1520
    %v1649 = vunpack.c.l.b16 %v1521
    %v1650 = vunpack.c.l.b16 %v1522
    %v1651 = vunpack.c.l.b16 %v1523
    %v1652 = vunpack.c.l.b16 %v1524
    %v1653 = vunpack.c.l.b16 %v1525
    %v1654 = vsel %vm583, %v1591, %v1590
    %v1655 = vsel %vm585, %v1592, %v1654
    %v1656 = vsel %vm587, %v1593, %v1655
    %v1657 = vsel %vm589, %v1594, %v1656
    %v1658 = vsel %vm591, %v1595, %v1657
    %v1659 = vsel %vm593, %v1596, %v1658
    %v1660 = vsel %vm595, %v1597, %v1659
    %v1661 = vsel %vm583, %v1599, %v1598
    %v1662 = vsel %vm585, %v1600, %v1661
    %v1663 = vsel %vm587, %v1601, %v1662
    %v1664 = vsel %vm589, %v1602, %v1663
    %v1665 = vsel %vm591, %v1603, %v1664
    %v1666 = vsel %vm593, %v1604, %v1665
    %v1667 = vsel %vm595, %v1605, %v1666
    %v1668 = vsel %vm583, %v1607, %v1606
    %v1669 = vsel %vm585, %v1608, %v1668
    %v1670 = vsel %vm587, %v1609, %v1669
    %v1671 = vsel %vm589, %v1610, %v1670
    %v1672 = vsel %vm591, %v1611, %v1671
    %v1673 = vsel %vm593, %v1612, %v1672
    %v1674 = vsel %vm595, %v1613, %v1673
    %v1675 = vsel %vm583, %v1615, %v1614
    %v1676 = vsel %vm585, %v1616, %v1675
    %v1677 = vsel %vm587, %v1617, %v1676
    %v1678 = vsel %vm589, %v1618, %v1677
    %v1679 = vsel %vm591, %v1619, %v1678
    %v1680 = vsel %vm593, %v1620, %v1679
    %v1681 = vsel %vm595, %v1621, %v1680
    %v1682 = vsel %vm583, %v1623, %v1622
    %v1683 = vsel %vm585, %v1624, %v1682
    %v1684 = vsel %vm587, %v1625, %v1683
    %v1685 = vsel %vm589, %v1626, %v1684
    %v1686 = vsel %vm591, %v1627, %v1685
    %v1687 = vsel %vm593, %v1628, %v1686
    %v1688 = vsel %vm595, %v1629, %v1687
    %v1689 = vsel %vm583, %v1631, %v1630
    %v1690 = vsel %vm585, %v1632, %v1689
    %v1691 = vsel %vm587, %v1633, %v1690
    %v1692 = vsel %vm589, %v1634, %v1691
    %v1693 = vsel %vm591, %v1635, %v1692
    %v1694 = vsel %vm593, %v1636, %v1693
    %v1695 = vsel %vm595, %v1637, %v1694
    %v1696 = vsel %vm583, %v1639, %v1638
    %v1697 = vsel %vm585, %v1640, %v1696
    %v1698 = vsel %vm587, %v1641, %v1697
    %v1699 = vsel %vm589, %v1642, %v1698
    %v1700 = vsel %vm591, %v1643, %v1699
    %v1701 = vsel %vm593, %v1644, %v1700
    %v1702 = vsel %vm595, %v1645, %v1701
    %v1703 = vsel %vm583, %v1647, %v1646
    %v1704 = vsel %vm585, %v1648, %v1703
    %v1705 = vsel %vm587, %v1649, %v1704
    %v1706 = vsel %vm589, %v1650, %v1705
    %v1707 = vsel %vm591, %v1651, %v1706
    %v1708 = vsel %vm593, %v1652, %v1707
    %v1709 = vsel %vm595, %v1653, %v1708
    %v1710 = vpack.c.b16 %v1667, %v1660
    %v1711 = vpack.c.b16 %v1681, %v1674
    %v1712 = vpack.c.b16 %v1695, %v1688
    %v1713 = vpack.c.b16 %v1709, %v1702
    %1718 = vmatprep.subr.bf16.mxu0 0
    %1719 = vmatpush1.bf16.msra.mxu0 %v654
    %1720 = vmatprep.subr.bf16.mxu0 0
    %1721 = vmatpush1.bf16.msra.mxu0 %v655
    %1722 = vmatprep.subr.bf16.mxu0 0
    %1723 = vmatpush1.bf16.msra.mxu0 %v656
    %1724 = vmatprep.subr.bf16.mxu0 0
    %1725 = vmatpush1.bf16.msra.mxu0 %v657
    %1726 = vmatprep.subr.bf16.mxu0 0
    %1727 = vmatpush1.bf16.msra.mxu0 %v658
    %1728 = vmatprep.subr.bf16.mxu0 0
    %1729 = vmatpush1.bf16.msra.mxu0 %v659
    %1730 = vmatprep.subr.bf16.mxu0 0
    %1731 = vmatpush1.bf16.msra.mxu0 %v660
    %1732 = vmatprep.subr.bf16.mxu0 0
    %1733 = vmatpush1.bf16.msra.mxu0 %v661
    %1734 = vmatprep.subr.bf16.mxu0 0
    %1735 = vmatpush1.bf16.msra.mxu0 0
    %1736 = vmatprep.subr.bf16.mxu0 0
    %1737 = vmatpush1.bf16.msra.mxu0 0
    %1738 = vmatprep.subr.bf16.mxu0 0
    %1739 = vmatpush1.bf16.msra.mxu0 0
    %1740 = vmatprep.subr.bf16.mxu0 0
    %1741 = vmatpush1.bf16.msra.mxu0 0
    %1742 = vmatprep.subr.bf16.mxu0 0
    %1743 = vmatpush1.bf16.msra.mxu0 0
    %1744 = vmatprep.subr.bf16.mxu0 0
    %1745 = vmatpush1.bf16.msra.mxu0 0
    %1746 = vmatprep.subr.bf16.mxu0 0
    %1747 = vmatpush1.bf16.msra.mxu0 0
    %1748 = vmatprep.subr.bf16.mxu0 0
    %1749 = vmatpush1.bf16.msra.mxu0 0
    %1750 = vmatprep.mubr.bf16.mxu0 0
    %1751 = vmatmul.mubr.bf16.gmra.mrb[0].mxu0 %v1710
    %v1752 = vpop.f32.mrb[0].mxu0
    %v1753 = vadd.f32 0.0, %v1752
    %v1754 = vpop.f32.mrb[0].mxu0
    %v1755 = vpop.f32.mrb[0].mxu0
    %v1756 = vadd.f32 0.0, %v1755
    %v1757 = vpop.f32.mrb[0].mxu0
    %1758 = vmatprep.mubr.bf16.mxu0 0
    %1759 = vmatmul.mubr.bf16.gmra.mrb[0].mxu0 %v1711
    %v1760 = vpop.f32.mrb[0].mxu0
    %v1761 = vadd.f32 0.0, %v1760
    %v1762 = vpop.f32.mrb[0].mxu0
    %v1763 = vpop.f32.mrb[0].mxu0
    %v1764 = vadd.f32 0.0, %v1763
    %v1765 = vpop.f32.mrb[0].mxu0
    %1766 = vmatprep.mubr.bf16.mxu0 0
    %1767 = vmatmul.mubr.bf16.gmra.mrb[0].mxu0 %v1712
    %v1768 = vpop.f32.mrb[0].mxu0
    %v1769 = vadd.f32 0.0, %v1768
    %v1770 = vpop.f32.mrb[0].mxu0
    %v1771 = vpop.f32.mrb[0].mxu0
    %v1772 = vadd.f32 0.0, %v1771
    %v1773 = vpop.f32.mrb[0].mxu0
    %1774 = vmatprep.mubr.bf16.mxu0 0
    %1775 = vmatmul.mubr.bf16.gmra.mrb[0].mxu0 %v1713
    %v1776 = vpop.f32.mrb[0].mxu0
    %v1777 = vadd.f32 0.0, %v1776
    %v1778 = vpop.f32.mrb[0].mxu0
    %v1779 = vpop.f32.mrb[0].mxu0
    %v1780 = vadd.f32 0.0, %v1779
    %v1781 = vpop.f32.mrb[0].mxu0
    %1782 = vdwg.mxu0
    %v1783 = vmax.f32 %v1753, 0.0
    %v1784 = vmax.f32 %v1756, 0.0
    %v1785 = vmax.f32 %v1761, 0.0
    %v1786 = vmax.f32 %v1764, 0.0
    %v1787 = vmax.f32 %v1769, 0.0
    %v1788 = vmax.f32 %v1772, 0.0
    %v1789 = vmax.f32 %v1777, 0.0
    %v1790 = vmax.f32 %v1780, 0.0
    %v1791 = vpack.c.bf16 %v1784, %v1783
    %v1792 = vpack.c.bf16 %v1786, %v1785
    %v1793 = vpack.c.bf16 %v1788, %v1787
    %v1794 = vpack.c.bf16 %v1790, %v1789
    %1795 = vmatprep.subr.bf16.mxu0 0
    %1796 = vmatpush1.bf16.msra.mxu0 %v757
    %1797 = vmatprep.subr.bf16.mxu0 0
    %1798 = vmatpush1.bf16.msra.mxu0 %v758
    %1799 = vmatprep.subr.bf16.mxu0 0
    %1800 = vmatpush1.bf16.msra.mxu0 %v759
    %1801 = vmatprep.subr.bf16.mxu0 0
    %1802 = vmatpush1.bf16.msra.mxu0 %v760
    %1803 = vmatprep.subr.bf16.mxu0 0
    %1804 = vmatpush1.bf16.msra.mxu0 %v761
    %1805 = vmatprep.subr.bf16.mxu0 0
    %1806 = vmatpush1.bf16.msra.mxu0 %v762
    %1807 = vmatprep.subr.bf16.mxu0 0
    %1808 = vmatpush1.bf16.msra.mxu0 %v763
    %1809 = vmatprep.subr.bf16.mxu0 0
    %1810 = vmatpush1.bf16.msra.mxu0 %v764
    %1811 = vmatprep.subr.bf16.mxu0 0
    %1812 = vmatpush1.bf16.msra.mxu0 0
    %1813 = vmatprep.subr.bf16.mxu0 0
    %1814 = vmatpush1.bf16.msra.mxu0 0
    %1815 = vmatprep.subr.bf16.mxu0 0
    %1816 = vmatpush1.bf16.msra.mxu0 0
    %1817 = vmatprep.subr.bf16.mxu0 0
    %1818 = vmatpush1.bf16.msra.mxu0 0
    %1819 = vmatprep.subr.bf16.mxu0 0
    %1820 = vmatpush1.bf16.msra.mxu0 0
    %1821 = vmatprep.subr.bf16.mxu0 0
    %1822 = vmatpush1.bf16.msra.mxu0 0
    %1823 = vmatprep.subr.bf16.mxu0 0
    %1824 = vmatpush1.bf16.msra.mxu0 0
    %1825 = vmatprep.subr.bf16.mxu0 0
    %1826 = vmatpush1.bf16.msra.mxu0 0
    %1827 = vmatprep.mubr.bf16.mxu0 0
    %1828 = vmatmul.mubr.bf16.gmra.mrb[0].mxu0 %v1791
    %v1829 = vpop.f32.mrb[0].mxu0
    %v1830 = vadd.f32 0.0, %v1829
    %v1831 = vpop.f32.mrb[0].mxu0
    %v1832 = vpop.f32.mrb[0].mxu0
    %v1833 = vadd.f32 0.0, %v1832
    %v1834 = vpop.f32.mrb[0].mxu0
    %1835 = vmatprep.mubr.bf16.mxu0 0
    %1836 = vmatmul.mubr.bf16.gmra.mrb[0].mxu0 %v1792
    %v1837 = vpop.f32.mrb[0].mxu0
    %v1838 = vadd.f32 0.0, %v1837
    %v1839 = vpop.f32.mrb[0].mxu0
    %v1840 = vpop.f32.mrb[0].mxu0
    %v1841 = vadd.f32 0.0, %v1840
    %v1842 = vpop.f32.mrb[0].mxu0
    %1843 = vmatprep.mubr.bf16.mxu0 0
    %1844 = vmatmul.mubr.bf16.gmra.mrb[0].mxu0 %v1793
    %v1845 = vpop.f32.mrb[0].mxu0
    %v1846 = vadd.f32 0.0, %v1845
    %v1847 = vpop.f32.mrb[0].mxu0
    %v1848 = vpop.f32.mrb[0].mxu0
    %v1849 = vadd.f32 0.0, %v1848
    %v1850 = vpop.f32.mrb[0].mxu0
    %1851 = vmatprep.mubr.bf16.mxu0 0
    %1852 = vmatmul.mubr.bf16.gmra.mrb[0].mxu0 %v1794
    %v1853 = vpop.f32.mrb[0].mxu0
    %v1854 = vadd.f32 0.0, %v1853
    %v1855 = vpop.f32.mrb[0].mxu0
    %v1856 = vpop.f32.mrb[0].mxu0
    %v1857 = vadd.f32 0.0, %v1856
    %v1858 = vpop.f32.mrb[0].mxu0
    %1859 = vdwg.mxu0
    %v1860 = vld [vmem:[#allocation8] sm:$0xff]
    %v1861 = vld [vmem:[#allocation8 + $0x8] sm:$0xff]
    %v1862 = vld [vmem:[#allocation8 + $0x10] sm:$0xff]
    %v1863 = vld [vmem:[#allocation8 + $0x18] sm:$0xff]
    %v1864 = vld [vmem:[#allocation8 + $0x20] sm:$0xff]
    %v1865 = vld [vmem:[#allocation8 + $0x28] sm:$0xff]
    %v1866 = vld [vmem:[#allocation8 + $0x30] sm:$0xff]
    %v1867 = vld [vmem:[#allocation8 + $0x38] sm:$0xff]
    %v1868 = vld [vmem:[#allocation8 + $0x40] sm:$0xff]
    %v1869 = vld [vmem:[#allocation8 + $0x48] sm:$0xff]
    %v1870 = vld [vmem:[#allocation8 + $0x50] sm:$0xff]
    %v1871 = vld [vmem:[#allocation8 + $0x58] sm:$0xff]
    %v1872 = vld [vmem:[#allocation8 + $0x60] sm:$0xff]
    %v1873 = vld [vmem:[#allocation8 + $0x68] sm:$0xff]
    %v1874 = vld [vmem:[#allocation8 + $0x70] sm:$0xff]
    %v1875 = vld [vmem:[#allocation8 + $0x78] sm:$0xff]
    %v1876 = vld [vmem:[#allocation8 + $0x80] sm:$0xff]
    %v1877 = vld [vmem:[#allocation8 + $0x88] sm:$0xff]
    %v1878 = vld [vmem:[#allocation8 + $0x90] sm:$0xff]
    %v1879 = vld [vmem:[#allocation8 + $0x98] sm:$0xff]
    %v1880 = vld [vmem:[#allocation8 + $0xa0] sm:$0xff]
    %v1881 = vld [vmem:[#allocation8 + $0xa8] sm:$0xff]
    %v1882 = vld [vmem:[#allocation8 + $0xb0] sm:$0xff]
    %v1883 = vld [vmem:[#allocation8 + $0xb8] sm:$0xff]
    %v1884 = vld [vmem:[#allocation8 + $0xc0] sm:$0xff]
    %v1885 = vld [vmem:[#allocation8 + $0xc8] sm:$0xff]
    %v1886 = vld [vmem:[#allocation8 + $0xd0] sm:$0xff]
    %v1887 = vld [vmem:[#allocation8 + $0xd8] sm:$0xff]
    %v1888 = vld [vmem:[#allocation8 + $0xe0] sm:$0xff]
    %v1889 = vld [vmem:[#allocation8 + $0xe8] sm:$0xff]
    %v1890 = vld [vmem:[#allocation8 + $0xf0] sm:$0xff]
    %v1891 = vld [vmem:[#allocation8 + $0xf8] sm:$0xff]
    %v1892 = vld [vmem:[#allocation8 + $0x100] sm:$0xff]
    %v1893 = vld [vmem:[#allocation8 + $0x108] sm:$0xff]
    %v1894 = vld [vmem:[#allocation8 + $0x110] sm:$0xff]
    %v1895 = vld [vmem:[#allocation8 + $0x118] sm:$0xff]
    %v1896 = vld [vmem:[#allocation8 + $0x120] sm:$0xff]
    %v1897 = vld [vmem:[#allocation8 + $0x128] sm:$0xff]
    %v1898 = vld [vmem:[#allocation8 + $0x130] sm:$0xff]
    %v1899 = vld [vmem:[#allocation8 + $0x138] sm:$0xff]
    %v1900 = vld [vmem:[#allocation8 + $0x140] sm:$0xff]
    %v1901 = vld [vmem:[#allocation8 + $0x148] sm:$0xff]
    %v1902 = vld [vmem:[#allocation8 + $0x150] sm:$0xff]
    %v1903 = vld [vmem:[#allocation8 + $0x158] sm:$0xff]
    %v1904 = vld [vmem:[#allocation8 + $0x160] sm:$0xff]
    %v1905 = vld [vmem:[#allocation8 + $0x168] sm:$0xff]
    %v1906 = vld [vmem:[#allocation8 + $0x170] sm:$0xff]
    %v1907 = vld [vmem:[#allocation8 + $0x178] sm:$0xff]
    %v1908 = vld [vmem:[#allocation8 + $0x180] sm:$0xff]
    %v1909 = vld [vmem:[#allocation8 + $0x188] sm:$0xff]
    %v1910 = vld [vmem:[#allocation8 + $0x190] sm:$0xff]
    %v1911 = vld [vmem:[#allocation8 + $0x198] sm:$0xff]
    %v1912 = vld [vmem:[#allocation8 + $0x1a0] sm:$0xff]
    %v1913 = vld [vmem:[#allocation8 + $0x1a8] sm:$0xff]
    %v1914 = vld [vmem:[#allocation8 + $0x1b0] sm:$0xff]
    %v1915 = vld [vmem:[#allocation8 + $0x1b8] sm:$0xff]
    %v1916 = vld [vmem:[#allocation8 + $0x1c0] sm:$0xff]
    %v1917 = vld [vmem:[#allocation8 + $0x1c8] sm:$0xff]
    %v1918 = vld [vmem:[#allocation8 + $0x1d0] sm:$0xff]
    %v1919 = vld [vmem:[#allocation8 + $0x1d8] sm:$0xff]
    %v1920 = vld [vmem:[#allocation8 + $0x1e0] sm:$0xff]
    %v1921 = vld [vmem:[#allocation8 + $0x1e8] sm:$0xff]
    %v1922 = vld [vmem:[#allocation8 + $0x1f0] sm:$0xff]
    %v1923 = vld [vmem:[#allocation8 + $0x1f8] sm:$0xff]
    %v1924 = vld [vmem:[#allocation8 + $0x200] sm:$0xff]
    %v1925 = vld [vmem:[#allocation8 + $0x208] sm:$0xff]
    %v1926 = vld [vmem:[#allocation8 + $0x210] sm:$0xff]
    %v1927 = vld [vmem:[#allocation8 + $0x218] sm:$0xff]
    %v1928 = vld [vmem:[#allocation8 + $0x220] sm:$0xff]
    %v1929 = vld [vmem:[#allocation8 + $0x228] sm:$0xff]
    %v1930 = vld [vmem:[#allocation8 + $0x230] sm:$0xff]
    %v1931 = vld [vmem:[#allocation8 + $0x238] sm:$0xff]
    %v1932 = vld [vmem:[#allocation8 + $0x240] sm:$0xff]
    %v1933 = vld [vmem:[#allocation8 + $0x248] sm:$0xff]
    %v1934 = vld [vmem:[#allocation8 + $0x250] sm:$0xff]
    %v1935 = vld [vmem:[#allocation8 + $0x258] sm:$0xff]
    %v1936 = vld [vmem:[#allocation8 + $0x260] sm:$0xff]
    %v1937 = vld [vmem:[#allocation8 + $0x268] sm:$0xff]
    %v1938 = vld [vmem:[#allocation8 + $0x270] sm:$0xff]
    %v1939 = vld [vmem:[#allocation8 + $0x278] sm:$0xff]
    %v1940 = vld [vmem:[#allocation8 + $0x280] sm:$0xff]
    %v1941 = vld [vmem:[#allocation8 + $0x288] sm:$0xff]
    %v1942 = vld [vmem:[#allocation8 + $0x290] sm:$0xff]
    %v1943 = vld [vmem:[#allocation8 + $0x298] sm:$0xff]
    %v1944 = vld [vmem:[#allocation8 + $0x2a0] sm:$0xff]
    %v1945 = vld [vmem:[#allocation8 + $0x2a8] sm:$0xff]
    %v1946 = vld [vmem:[#allocation8 + $0x2b0] sm:$0xff]
    %v1947 = vld [vmem:[#allocation8 + $0x2b8] sm:$0xff]
    %v1948 = vld [vmem:[#allocation8 + $0x2c0] sm:$0xff]
    %v1949 = vld [vmem:[#allocation8 + $0x2c8] sm:$0xff]
    %v1950 = vld [vmem:[#allocation8 + $0x2d0] sm:$0xff]
    %v1951 = vld [vmem:[#allocation8 + $0x2d8] sm:$0xff]
    %v1952 = vld [vmem:[#allocation8 + $0x2e0] sm:$0xff]
    %v1953 = vld [vmem:[#allocation8 + $0x2e8] sm:$0xff]
    %v1954 = vld [vmem:[#allocation8 + $0x2f0] sm:$0xff]
    %v1955 = vld [vmem:[#allocation8 + $0x2f8] sm:$0xff]
    %v1956 = vld [vmem:[#allocation8 + $0x300] sm:$0xff]
    %v1957 = vld [vmem:[#allocation8 + $0x308] sm:$0xff]
    %v1958 = vld [vmem:[#allocation8 + $0x310] sm:$0xff]
    %v1959 = vld [vmem:[#allocation8 + $0x318] sm:$0xff]
    %v1960 = vld [vmem:[#allocation8 + $0x320] sm:$0xff]
    %v1961 = vld [vmem:[#allocation8 + $0x328] sm:$0xff]
    %v1962 = vld [vmem:[#allocation8 + $0x330] sm:$0xff]
    %v1963 = vld [vmem:[#allocation8 + $0x338] sm:$0xff]
    %v1964 = vld [vmem:[#allocation8 + $0x340] sm:$0xff]
    %v1965 = vld [vmem:[#allocation8 + $0x348] sm:$0xff]
    %v1966 = vld [vmem:[#allocation8 + $0x350] sm:$0xff]
    %v1967 = vld [vmem:[#allocation8 + $0x358] sm:$0xff]
    %v1968 = vld [vmem:[#allocation8 + $0x360] sm:$0xff]
    %v1969 = vld [vmem:[#allocation8 + $0x368] sm:$0xff]
    %v1970 = vld [vmem:[#allocation8 + $0x370] sm:$0xff]
    %v1971 = vld [vmem:[#allocation8 + $0x378] sm:$0xff]
    %v1972 = vld [vmem:[#allocation8 + $0x380] sm:$0xff]
    %v1973 = vld [vmem:[#allocation8 + $0x388] sm:$0xff]
    %v1974 = vld [vmem:[#allocation8 + $0x390] sm:$0xff]
    %v1975 = vld [vmem:[#allocation8 + $0x398] sm:$0xff]
    %v1976 = vld [vmem:[#allocation8 + $0x3a0] sm:$0xff]
    %v1977 = vld [vmem:[#allocation8 + $0x3a8] sm:$0xff]
    %v1978 = vld [vmem:[#allocation8 + $0x3b0] sm:$0xff]
    %v1979 = vld [vmem:[#allocation8 + $0x3b8] sm:$0xff]
    %v1980 = vld [vmem:[#allocation8 + $0x3c0] sm:$0xff]
    %v1981 = vld [vmem:[#allocation8 + $0x3c8] sm:$0xff]
    %v1982 = vld [vmem:[#allocation8 + $0x3d0] sm:$0xff]
    %v1983 = vld [vmem:[#allocation8 + $0x3d8] sm:$0xff]
    %v1984 = vld [vmem:[#allocation8 + $0x3e0] sm:$0xff]
    %v1985 = vld [vmem:[#allocation8 + $0x3e8] sm:$0xff]
    %v1986 = vld [vmem:[#allocation8 + $0x3f0] sm:$0xff]
    %v1987 = vld [vmem:[#allocation8 + $0x3f8] sm:$0xff]
    %v1988 = vld [vmem:[#allocation8 + $0x400] sm:$0xff]
    %v1989 = vld [vmem:[#allocation8 + $0x408] sm:$0xff]
    %v1990 = vld [vmem:[#allocation8 + $0x410] sm:$0xff]
    %v1991 = vld [vmem:[#allocation8 + $0x418] sm:$0xff]
    %v1992 = vld [vmem:[#allocation8 + $0x420] sm:$0xff]
    %v1993 = vld [vmem:[#allocation8 + $0x428] sm:$0xff]
    %v1994 = vld [vmem:[#allocation8 + $0x430] sm:$0xff]
    %v1995 = vld [vmem:[#allocation8 + $0x438] sm:$0xff]
    %v1996 = vld [vmem:[#allocation8 + $0x440] sm:$0xff]
    %v1997 = vld [vmem:[#allocation8 + $0x448] sm:$0xff]
    %v1998 = vld [vmem:[#allocation8 + $0x450] sm:$0xff]
    %v1999 = vld [vmem:[#allocation8 + $0x458] sm:$0xff]
    %v2000 = vld [vmem:[#allocation8 + $0x460] sm:$0xff]
    %v2001 = vld [vmem:[#allocation8 + $0x468] sm:$0xff]
    %v2002 = vld [vmem:[#allocation8 + $0x470] sm:$0xff]
    %v2003 = vld [vmem:[#allocation8 + $0x478] sm:$0xff]
    %v2004 = vld [vmem:[#allocation8 + $0x480] sm:$0xff]
    %v2005 = vld [vmem:[#allocation8 + $0x488] sm:$0xff]
    %v2006 = vld [vmem:[#allocation8 + $0x490] sm:$0xff]
    %v2007 = vld [vmem:[#allocation8 + $0x498] sm:$0xff]
    %v2008 = vld [vmem:[#allocation8 + $0x4a0] sm:$0xff]
    %v2009 = vld [vmem:[#allocation8 + $0x4a8] sm:$0xff]
    %v2010 = vld [vmem:[#allocation8 + $0x4b0] sm:$0xff]
    %v2011 = vld [vmem:[#allocation8 + $0x4b8] sm:$0xff]
    %v2012 = vld [vmem:[#allocation8 + $0x4c0] sm:$0xff]
    %v2013 = vld [vmem:[#allocation8 + $0x4c8] sm:$0xff]
    %v2014 = vld [vmem:[#allocation8 + $0x4d0] sm:$0xff]
    %v2015 = vld [vmem:[#allocation8 + $0x4d8] sm:$0xff]
    %v2016 = vld [vmem:[#allocation8 + $0x4e0] sm:$0xff]
    %v2017 = vld [vmem:[#allocation8 + $0x4e8] sm:$0xff]
    %v2018 = vld [vmem:[#allocation8 + $0x4f0] sm:$0xff]
    %v2019 = vld [vmem:[#allocation8 + $0x4f8] sm:$0xff]
    %v2020 = vld [vmem:[#allocation8 + $0x500] sm:$0xff]
    %v2021 = vld [vmem:[#allocation8 + $0x508] sm:$0xff]
    %v2022 = vld [vmem:[#allocation8 + $0x510] sm:$0xff]
    %v2023 = vld [vmem:[#allocation8 + $0x518] sm:$0xff]
    %v2024 = vld [vmem:[#allocation8 + $0x520] sm:$0xff]
    %v2025 = vld [vmem:[#allocation8 + $0x528] sm:$0xff]
    %v2026 = vld [vmem:[#allocation8 + $0x530] sm:$0xff]
    %v2027 = vld [vmem:[#allocation8 + $0x538] sm:$0xff]
    %v2028 = vld [vmem:[#allocation8 + $0x540] sm:$0xff]
    %v2029 = vld [vmem:[#allocation8 + $0x548] sm:$0xff]
    %v2030 = vld [vmem:[#allocation8 + $0x550] sm:$0xff]
    %v2031 = vld [vmem:[#allocation8 + $0x558] sm:$0xff]
    %v2032 = vld [vmem:[#allocation8 + $0x560] sm:$0xff]
    %v2033 = vld [vmem:[#allocation8 + $0x568] sm:$0xff]
    %v2034 = vld [vmem:[#allocation8 + $0x570] sm:$0xff]
    %v2035 = vld [vmem:[#allocation8 + $0x578] sm:$0xff]
    %v2036 = vld [vmem:[#allocation8 + $0x580] sm:$0xff]
    %v2037 = vld [vmem:[#allocation8 + $0x588] sm:$0xff]
    %v2038 = vld [vmem:[#allocation8 + $0x590] sm:$0xff]
    %v2039 = vld [vmem:[#allocation8 + $0x598] sm:$0xff]
    %v2040 = vld [vmem:[#allocation8 + $0x5a0] sm:$0xff]
    %v2041 = vld [vmem:[#allocation8 + $0x5a8] sm:$0xff]
    %v2042 = vld [vmem:[#allocation8 + $0x5b0] sm:$0xff]
    %v2043 = vld [vmem:[#allocation8 + $0x5b8] sm:$0xff]
    %v2044 = vld [vmem:[#allocation8 + $0x5c0] sm:$0xff]
    %v2045 = vld [vmem:[#allocation8 + $0x5c8] sm:$0xff]
    %v2046 = vld [vmem:[#allocation8 + $0x5d0] sm:$0xff]
    %v2047 = vld [vmem:[#allocation8 + $0x5d8] sm:$0xff]
    %v2048 = vld [vmem:[#allocation8 + $0x5e0] sm:$0xff]
    %v2049 = vld [vmem:[#allocation8 + $0x5e8] sm:$0xff]
    %v2050 = vld [vmem:[#allocation8 + $0x5f0] sm:$0xff]
    %v2051 = vld [vmem:[#allocation8 + $0x5f8] sm:$0xff]
    %v2052 = vld [vmem:[#allocation8 + $0x600] sm:$0xff]
    %v2053 = vld [vmem:[#allocation8 + $0x608] sm:$0xff]
    %v2054 = vld [vmem:[#allocation8 + $0x610] sm:$0xff]
    %v2055 = vld [vmem:[#allocation8 + $0x618] sm:$0xff]
    %v2056 = vld [vmem:[#allocation8 + $0x620] sm:$0xff]
    %v2057 = vld [vmem:[#allocation8 + $0x628] sm:$0xff]
    %v2058 = vld [vmem:[#allocation8 + $0x630] sm:$0xff]
    %v2059 = vld [vmem:[#allocation8 + $0x638] sm:$0xff]
    %v2060 = vld [vmem:[#allocation8 + $0x640] sm:$0xff]
    %v2061 = vld [vmem:[#allocation8 + $0x648] sm:$0xff]
    %v2062 = vld [vmem:[#allocation8 + $0x650] sm:$0xff]
    %v2063 = vld [vmem:[#allocation8 + $0x658] sm:$0xff]
    %v2064 = vld [vmem:[#allocation8 + $0x660] sm:$0xff]
    %v2065 = vld [vmem:[#allocation8 + $0x668] sm:$0xff]
    %v2066 = vld [vmem:[#allocation8 + $0x670] sm:$0xff]
    %v2067 = vld [vmem:[#allocation8 + $0x678] sm:$0xff]
    %v2068 = vld [vmem:[#allocation8 + $0x680] sm:$0xff]
    %v2069 = vld [vmem:[#allocation8 + $0x688] sm:$0xff]
    %v2070 = vld [vmem:[#allocation8 + $0x690] sm:$0xff]
    %v2071 = vld [vmem:[#allocation8 + $0x698] sm:$0xff]
    %v2072 = vld [vmem:[#allocation8 + $0x6a0] sm:$0xff]
    %v2073 = vld [vmem:[#allocation8 + $0x6a8] sm:$0xff]
    %v2074 = vld [vmem:[#allocation8 + $0x6b0] sm:$0xff]
    %v2075 = vld [vmem:[#allocation8 + $0x6b8] sm:$0xff]
    %v2076 = vld [vmem:[#allocation8 + $0x6c0] sm:$0xff]
    %v2077 = vld [vmem:[#allocation8 + $0x6c8] sm:$0xff]
    %v2078 = vld [vmem:[#allocation8 + $0x6d0] sm:$0xff]
    %v2079 = vld [vmem:[#allocation8 + $0x6d8] sm:$0xff]
    %v2080 = vld [vmem:[#allocation8 + $0x6e0] sm:$0xff]
    %v2081 = vld [vmem:[#allocation8 + $0x6e8] sm:$0xff]
    %v2082 = vld [vmem:[#allocation8 + $0x6f0] sm:$0xff]
    %v2083 = vld [vmem:[#allocation8 + $0x6f8] sm:$0xff]
    %v2084 = vld [vmem:[#allocation8 + $0x700] sm:$0xff]
    %v2085 = vld [vmem:[#allocation8 + $0x708] sm:$0xff]
    %v2086 = vld [vmem:[#allocation8 + $0x710] sm:$0xff]
    %v2087 = vld [vmem:[#allocation8 + $0x718] sm:$0xff]
    %v2088 = vld [vmem:[#allocation8 + $0x720] sm:$0xff]
    %v2089 = vld [vmem:[#allocation8 + $0x728] sm:$0xff]
    %v2090 = vld [vmem:[#allocation8 + $0x730] sm:$0xff]
    %v2091 = vld [vmem:[#allocation8 + $0x738] sm:$0xff]
    %v2092 = vld [vmem:[#allocation8 + $0x740] sm:$0xff]
    %v2093 = vld [vmem:[#allocation8 + $0x748] sm:$0xff]
    %v2094 = vld [vmem:[#allocation8 + $0x750] sm:$0xff]
    %v2095 = vld [vmem:[#allocation8 + $0x758] sm:$0xff]
    %v2096 = vld [vmem:[#allocation8 + $0x760] sm:$0xff]
    %v2097 = vld [vmem:[#allocation8 + $0x768] sm:$0xff]
    %v2098 = vld [vmem:[#allocation8 + $0x770] sm:$0xff]
    %v2099 = vld [vmem:[#allocation8 + $0x778] sm:$0xff]
    %v2100 = vld [vmem:[#allocation8 + $0x780] sm:$0xff]
    %v2101 = vld [vmem:[#allocation8 + $0x788] sm:$0xff]
    %v2102 = vld [vmem:[#allocation8 + $0x790] sm:$0xff]
    %v2103 = vld [vmem:[#allocation8 + $0x798] sm:$0xff]
    %v2104 = vld [vmem:[#allocation8 + $0x7a0] sm:$0xff]
    %v2105 = vld [vmem:[#allocation8 + $0x7a8] sm:$0xff]
    %v2106 = vld [vmem:[#allocation8 + $0x7b0] sm:$0xff]
    %v2107 = vld [vmem:[#allocation8 + $0x7b8] sm:$0xff]
    %v2108 = vld [vmem:[#allocation8 + $0x7c0] sm:$0xff]
    %v2109 = vld [vmem:[#allocation8 + $0x7c8] sm:$0xff]
    %v2110 = vld [vmem:[#allocation8 + $0x7d0] sm:$0xff]
    %v2111 = vld [vmem:[#allocation8 + $0x7d8] sm:$0xff]
    %v2112 = vld [vmem:[#allocation8 + $0x7e0] sm:$0xff]
    %v2113 = vld [vmem:[#allocation8 + $0x7e8] sm:$0xff]
    %v2114 = vld [vmem:[#allocation8 + $0x7f0] sm:$0xff]
    %v2115 = vld [vmem:[#allocation8 + $0x7f8] sm:$0xff]
    %v2116 = vmul.f32 %v1830, %v1860
    %v2117 = vmul.f32 %v1833, %v1861
    %v2118 = vmul.f32 %v1838, %v1862
    %v2119 = vmul.f32 %v1841, %v1863
    %v2120 = vmul.f32 %v1830, %v1864
    %v2121 = vmul.f32 %v1833, %v1865
    %v2122 = vmul.f32 %v1838, %v1866
    %v2123 = vmul.f32 %v1841, %v1867
    %v2124 = vmul.f32 %v1830, %v1868
    %v2125 = vmul.f32 %v1833, %v1869
    %v2126 = vmul.f32 %v1838, %v1870
    %v2127 = vmul.f32 %v1841, %v1871
    %v2128 = vmul.f32 %v1830, %v1872
    %v2129 = vmul.f32 %v1833, %v1873
    %v2130 = vmul.f32 %v1838, %v1874
    %v2131 = vmul.f32 %v1841, %v1875
    %v2132 = vmul.f32 %v1830, %v1876
    %v2133 = vmul.f32 %v1833, %v1877
    %v2134 = vmul.f32 %v1838, %v1878
    %v2135 = vmul.f32 %v1841, %v1879
    %v2136 = vmul.f32 %v1830, %v1880
    %v2137 = vmul.f32 %v1833, %v1881
    %v2138 = vmul.f32 %v1838, %v1882
    %v2139 = vmul.f32 %v1841, %v1883
    %v2140 = vmul.f32 %v1830, %v1884
    %v2141 = vmul.f32 %v1833, %v1885
    %v2142 = vmul.f32 %v1838, %v1886
    %v2143 = vmul.f32 %v1841, %v1887
    %v2144 = vmul.f32 %v1830, %v1888
    %v2145 = vmul.f32 %v1833, %v1889
    %v2146 = vmul.f32 %v1838, %v1890
    %v2147 = vmul.f32 %v1841, %v1891
    %v2148 = vmul.f32 %v1830, %v1892
    %v2149 = vmul.f32 %v1833, %v1893
    %v2150 = vmul.f32 %v1838, %v1894
    %v2151 = vmul.f32 %v1841, %v1895
    %v2152 = vmul.f32 %v1830, %v1896
    %v2153 = vmul.f32 %v1833, %v1897
    %v2154 = vmul.f32 %v1838, %v1898
    %v2155 = vmul.f32 %v1841, %v1899
    %v2156 = vmul.f32 %v1830, %v1900
    %v2157 = vmul.f32 %v1833, %v1901
    %v2158 = vmul.f32 %v1838, %v1902
    %v2159 = vmul.f32 %v1841, %v1903
    %v2160 = vmul.f32 %v1830, %v1904
    %v2161 = vmul.f32 %v1833, %v1905
    %v2162 = vmul.f32 %v1838, %v1906
    %v2163 = vmul.f32 %v1841, %v1907
    %v2164 = vmul.f32 %v1830, %v1908
    %v2165 = vmul.f32 %v1833, %v1909
    %v2166 = vmul.f32 %v1838, %v1910
    %v2167 = vmul.f32 %v1841, %v1911
    %v2168 = vmul.f32 %v1830, %v1912
    %v2169 = vmul.f32 %v1833, %v1913
    %v2170 = vmul.f32 %v1838, %v1914
    %v2171 = vmul.f32 %v1841, %v1915
    %v2172 = vmul.f32 %v1830, %v1916
    %v2173 = vmul.f32 %v1833, %v1917
    %v2174 = vmul.f32 %v1838, %v1918
    %v2175 = vmul.f32 %v1841, %v1919
    %v2176 = vmul.f32 %v1830, %v1920
    %v2177 = vmul.f32 %v1833, %v1921
    %v2178 = vmul.f32 %v1838, %v1922
    %v2179 = vmul.f32 %v1841, %v1923
    %v2180 = vmul.f32 %v1830, %v1924
    %v2181 = vmul.f32 %v1833, %v1925
    %v2182 = vmul.f32 %v1838, %v1926
    %v2183 = vmul.f32 %v1841, %v1927
    %v2184 = vmul.f32 %v1830, %v1928
    %v2185 = vmul.f32 %v1833, %v1929
    %v2186 = vmul.f32 %v1838, %v1930
    %v2187 = vmul.f32 %v1841, %v1931
    %v2188 = vmul.f32 %v1830, %v1932
    %v2189 = vmul.f32 %v1833, %v1933
    %v2190 = vmul.f32 %v1838, %v1934
    %v2191 = vmul.f32 %v1841, %v1935
    %v2192 = vmul.f32 %v1830, %v1936
    %v2193 = vmul.f32 %v1833, %v1937
    %v2194 = vmul.f32 %v1838, %v1938
    %v2195 = vmul.f32 %v1841, %v1939
    %v2196 = vmul.f32 %v1830, %v1940
    %v2197 = vmul.f32 %v1833, %v1941
    %v2198 = vmul.f32 %v1838, %v1942
    %v2199 = vmul.f32 %v1841, %v1943
    %v2200 = vmul.f32 %v1830, %v1944
    %v2201 = vmul.f32 %v1833, %v1945
    %v2202 = vmul.f32 %v1838, %v1946
    %v2203 = vmul.f32 %v1841, %v1947
    %v2204 = vmul.f32 %v1830, %v1948
    %v2205 = vmul.f32 %v1833, %v1949
    %v2206 = vmul.f32 %v1838, %v1950
    %v2207 = vmul.f32 %v1841, %v1951
    %v2208 = vmul.f32 %v1830, %v1952
    %v2209 = vmul.f32 %v1833, %v1953
    %v2210 = vmul.f32 %v1838, %v1954
    %v2211 = vmul.f32 %v1841, %v1955
    %v2212 = vmul.f32 %v1830, %v1956
    %v2213 = vmul.f32 %v1833, %v1957
    %v2214 = vmul.f32 %v1838, %v1958
    %v2215 = vmul.f32 %v1841, %v1959
    %v2216 = vmul.f32 %v1830, %v1960
    %v2217 = vmul.f32 %v1833, %v1961
    %v2218 = vmul.f32 %v1838, %v1962
    %v2219 = vmul.f32 %v1841, %v1963
    %v2220 = vmul.f32 %v1830, %v1964
    %v2221 = vmul.f32 %v1833, %v1965
    %v2222 = vmul.f32 %v1838, %v1966
    %v2223 = vmul.f32 %v1841, %v1967
    %v2224 = vmul.f32 %v1830, %v1968
    %v2225 = vmul.f32 %v1833, %v1969
    %v2226 = vmul.f32 %v1838, %v1970
    %v2227 = vmul.f32 %v1841, %v1971
    %v2228 = vmul.f32 %v1830, %v1972
    %v2229 = vmul.f32 %v1833, %v1973
    %v2230 = vmul.f32 %v1838, %v1974
    %v2231 = vmul.f32 %v1841, %v1975
    %v2232 = vmul.f32 %v1830, %v1976
    %v2233 = vmul.f32 %v1833, %v1977
    %v2234 = vmul.f32 %v1838, %v1978
    %v2235 = vmul.f32 %v1841, %v1979
    %v2236 = vmul.f32 %v1830, %v1980
    %v2237 = vmul.f32 %v1833, %v1981
    %v2238 = vmul.f32 %v1838, %v1982
    %v2239 = vmul.f32 %v1841, %v1983
    %v2240 = vmul.f32 %v1830, %v1984
    %v2241 = vmul.f32 %v1833, %v1985
    %v2242 = vmul.f32 %v1838, %v1986
    %v2243 = vmul.f32 %v1841, %v1987
    %v2244 = vmul.f32 %v1830, %v1988
    %v2245 = vmul.f32 %v1833, %v1989
    %v2246 = vmul.f32 %v1838, %v1990
    %v2247 = vmul.f32 %v1841, %v1991
    %v2248 = vmul.f32 %v1830, %v1992
    %v2249 = vmul.f32 %v1833, %v1993
    %v2250 = vmul.f32 %v1838, %v1994
    %v2251 = vmul.f32 %v1841, %v1995
    %v2252 = vmul.f32 %v1830, %v1996
    %v2253 = vmul.f32 %v1833, %v1997
    %v2254 = vmul.f32 %v1838, %v1998
    %v2255 = vmul.f32 %v1841, %v1999
    %v2256 = vmul.f32 %v1830, %v2000
    %v2257 = vmul.f32 %v1833, %v2001
    %v2258 = vmul.f32 %v1838, %v2002
    %v2259 = vmul.f32 %v1841, %v2003
    %v2260 = vmul.f32 %v1830, %v2004
    %v2261 = vmul.f32 %v1833, %v2005
    %v2262 = vmul.f32 %v1838, %v2006
    %v2263 = vmul.f32 %v1841, %v2007
    %v2264 = vmul.f32 %v1830, %v2008
    %v2265 = vmul.f32 %v1833, %v2009
    %v2266 = vmul.f32 %v1838, %v2010
    %v2267 = vmul.f32 %v1841, %v2011
    %v2268 = vmul.f32 %v1830, %v2012
    %v2269 = vmul.f32 %v1833, %v2013
    %v2270 = vmul.f32 %v1838, %v2014
    %v2271 = vmul.f32 %v1841, %v2015
    %v2272 = vmul.f32 %v1830, %v2016
    %v2273 = vmul.f32 %v1833, %v2017
    %v2274 = vmul.f32 %v1838, %v2018
    %v2275 = vmul.f32 %v1841, %v2019
    %v2276 = vmul.f32 %v1830, %v2020
    %v2277 = vmul.f32 %v1833, %v2021
    %v2278 = vmul.f32 %v1838, %v2022
    %v2279 = vmul.f32 %v1841, %v2023
    %v2280 = vmul.f32 %v1830, %v2024
    %v2281 = vmul.f32 %v1833, %v2025
    %v2282 = vmul.f32 %v1838, %v2026
    %v2283 = vmul.f32 %v1841, %v2027
    %v2284 = vmul.f32 %v1830, %v2028
    %v2285 = vmul.f32 %v1833, %v2029
    %v2286 = vmul.f32 %v1838, %v2030
    %v2287 = vmul.f32 %v1841, %v2031
    %v2288 = vmul.f32 %v1830, %v2032
    %v2289 = vmul.f32 %v1833, %v2033
    %v2290 = vmul.f32 %v1838, %v2034
    %v2291 = vmul.f32 %v1841, %v2035
    %v2292 = vmul.f32 %v1830, %v2036
    %v2293 = vmul.f32 %v1833, %v2037
    %v2294 = vmul.f32 %v1838, %v2038
    %v2295 = vmul.f32 %v1841, %v2039
    %v2296 = vmul.f32 %v1830, %v2040
    %v2297 = vmul.f32 %v1833, %v2041
    %v2298 = vmul.f32 %v1838, %v2042
    %v2299 = vmul.f32 %v1841, %v2043
    %v2300 = vmul.f32 %v1830, %v2044
    %v2301 = vmul.f32 %v1833, %v2045
    %v2302 = vmul.f32 %v1838, %v2046
    %v2303 = vmul.f32 %v1841, %v2047
    %v2304 = vmul.f32 %v1830, %v2048
    %v2305 = vmul.f32 %v1833, %v2049
    %v2306 = vmul.f32 %v1838, %v2050
    %v2307 = vmul.f32 %v1841, %v2051
    %v2308 = vmul.f32 %v1830, %v2052
    %v2309 = vmul.f32 %v1833, %v2053
    %v2310 = vmul.f32 %v1838, %v2054
    %v2311 = vmul.f32 %v1841, %v2055
    %v2312 = vmul.f32 %v1830, %v2056
    %v2313 = vmul.f32 %v1833, %v2057
    %v2314 = vmul.f32 %v1838, %v2058
    %v2315 = vmul.f32 %v1841, %v2059
    %v2316 = vmul.f32 %v1830, %v2060
    %v2317 = vmul.f32 %v1833, %v2061
    %v2318 = vmul.f32 %v1838, %v2062
    %v2319 = vmul.f32 %v1841, %v2063
    %v2320 = vmul.f32 %v1830, %v2064
    %v2321 = vmul.f32 %v1833, %v2065
    %v2322 = vmul.f32 %v1838, %v2066
    %v2323 = vmul.f32 %v1841, %v2067
    %v2324 = vmul.f32 %v1830, %v2068
    %v2325 = vmul.f32 %v1833, %v2069
    %v2326 = vmul.f32 %v1838, %v2070
    %v2327 = vmul.f32 %v1841, %v2071
    %v2328 = vmul.f32 %v1830, %v2072
    %v2329 = vmul.f32 %v1833, %v2073
    %v2330 = vmul.f32 %v1838, %v2074
    %v2331 = vmul.f32 %v1841, %v2075
    %v2332 = vmul.f32 %v1830, %v2076
    %v2333 = vmul.f32 %v1833, %v2077
    %v2334 = vmul.f32 %v1838, %v2078
    %v2335 = vmul.f32 %v1841, %v2079
    %v2336 = vmul.f32 %v1830, %v2080
    %v2337 = vmul.f32 %v1833, %v2081
    %v2338 = vmul.f32 %v1838, %v2082
    %v2339 = vmul.f32 %v1841, %v2083
    %v2340 = vmul.f32 %v1830, %v2084
    %v2341 = vmul.f32 %v1833, %v2085
    %v2342 = vmul.f32 %v1838, %v2086
    %v2343 = vmul.f32 %v1841, %v2087
    %v2344 = vmul.f32 %v1830, %v2088
    %v2345 = vmul.f32 %v1833, %v2089
    %v2346 = vmul.f32 %v1838, %v2090
    %v2347 = vmul.f32 %v1841, %v2091
    %v2348 = vmul.f32 %v1830, %v2092
    %v2349 = vmul.f32 %v1833, %v2093
    %v2350 = vmul.f32 %v1838, %v2094
    %v2351 = vmul.f32 %v1841, %v2095
    %v2352 = vmul.f32 %v1830, %v2096
    %v2353 = vmul.f32 %v1833, %v2097
    %v2354 = vmul.f32 %v1838, %v2098
    %v2355 = vmul.f32 %v1841, %v2099
    %v2356 = vmul.f32 %v1830, %v2100
    %v2357 = vmul.f32 %v1833, %v2101
    %v2358 = vmul.f32 %v1838, %v2102
    %v2359 = vmul.f32 %v1841, %v2103
    %v2360 = vmul.f32 %v1830, %v2104
    %v2361 = vmul.f32 %v1833, %v2105
    %v2362 = vmul.f32 %v1838, %v2106
    %v2363 = vmul.f32 %v1841, %v2107
    %v2364 = vmul.f32 %v1830, %v2108
    %v2365 = vmul.f32 %v1833, %v2109
    %v2366 = vmul.f32 %v1838, %v2110
    %v2367 = vmul.f32 %v1841, %v2111
    %v2368 = vmul.f32 %v1830, %v2112
    %v2369 = vmul.f32 %v1833, %v2113
    %v2370 = vmul.f32 %v1838, %v2114
    %v2371 = vmul.f32 %v1841, %v2115
    %v2372 = vmul.f32 %v1846, %v1860
    %v2373 = vmul.f32 %v1849, %v1861
    %v2374 = vmul.f32 %v1854, %v1862
    %v2375 = vmul.f32 %v1857, %v1863
    %v2376 = vmul.f32 %v1846, %v1864
    %v2377 = vmul.f32 %v1849, %v1865
    %v2378 = vmul.f32 %v1854, %v1866
    %v2379 = vmul.f32 %v1857, %v1867
    %v2380 = vmul.f32 %v1846, %v1868
    %v2381 = vmul.f32 %v1849, %v1869
    %v2382 = vmul.f32 %v1854, %v1870
    %v2383 = vmul.f32 %v1857, %v1871
    %v2384 = vmul.f32 %v1846, %v1872
    %v2385 = vmul.f32 %v1849, %v1873
    %v2386 = vmul.f32 %v1854, %v1874
    %v2387 = vmul.f32 %v1857, %v1875
    %v2388 = vmul.f32 %v1846, %v1876
    %v2389 = vmul.f32 %v1849, %v1877
    %v2390 = vmul.f32 %v1854, %v1878
    %v2391 = vmul.f32 %v1857, %v1879
    %v2392 = vmul.f32 %v1846, %v1880
    %v2393 = vmul.f32 %v1849, %v1881
    %v2394 = vmul.f32 %v1854, %v1882
    %v2395 = vmul.f32 %v1857, %v1883
    %v2396 = vmul.f32 %v1846, %v1884
    %v2397 = vmul.f32 %v1849, %v1885
    %v2398 = vmul.f32 %v1854, %v1886
    %v2399 = vmul.f32 %v1857, %v1887
    %v2400 = vmul.f32 %v1846, %v1888
    %v2401 = vmul.f32 %v1849, %v1889
    %v2402 = vmul.f32 %v1854, %v1890
    %v2403 = vmul.f32 %v1857, %v1891
    %v2404 = vmul.f32 %v1846, %v1892
    %v2405 = vmul.f32 %v1849, %v1893
    %v2406 = vmul.f32 %v1854, %v1894
    %v2407 = vmul.f32 %v1857, %v1895
    %v2408 = vmul.f32 %v1846, %v1896
    %v2409 = vmul.f32 %v1849, %v1897
    %v2410 = vmul.f32 %v1854, %v1898
    %v2411 = vmul.f32 %v1857, %v1899
    %v2412 = vmul.f32 %v1846, %v1900
    %v2413 = vmul.f32 %v1849, %v1901
    %v2414 = vmul.f32 %v1854, %v1902
    %v2415 = vmul.f32 %v1857, %v1903
    %v2416 = vmul.f32 %v1846, %v1904
    %v2417 = vmul.f32 %v1849, %v1905
    %v2418 = vmul.f32 %v1854, %v1906
    %v2419 = vmul.f32 %v1857, %v1907
    %v2420 = vmul.f32 %v1846, %v1908
    %v2421 = vmul.f32 %v1849, %v1909
    %v2422 = vmul.f32 %v1854, %v1910
    %v2423 = vmul.f32 %v1857, %v1911
    %v2424 = vmul.f32 %v1846, %v1912
    %v2425 = vmul.f32 %v1849, %v1913
    %v2426 = vmul.f32 %v1854, %v1914
    %v2427 = vmul.f32 %v1857, %v1915
    %v2428 = vmul.f32 %v1846, %v1916
    %v2429 = vmul.f32 %v1849, %v1917
    %v2430 = vmul.f32 %v1854, %v1918
    %v2431 = vmul.f32 %v1857, %v1919
    %v2432 = vmul.f32 %v1846, %v1920
    %v2433 = vmul.f32 %v1849, %v1921
    %v2434 = vmul.f32 %v1854, %v1922
    %v2435 = vmul.f32 %v1857, %v1923
    %v2436 = vmul.f32 %v1846, %v1924
    %v2437 = vmul.f32 %v1849, %v1925
    %v2438 = vmul.f32 %v1854, %v1926
    %v2439 = vmul.f32 %v1857, %v1927
    %v2440 = vmul.f32 %v1846, %v1928
    %v2441 = vmul.f32 %v1849, %v1929
    %v2442 = vmul.f32 %v1854, %v1930
    %v2443 = vmul.f32 %v1857, %v1931
    %v2444 = vmul.f32 %v1846, %v1932
    %v2445 = vmul.f32 %v1849, %v1933
    %v2446 = vmul.f32 %v1854, %v1934
    %v2447 = vmul.f32 %v1857, %v1935
    %v2448 = vmul.f32 %v1846, %v1936
    %v2449 = vmul.f32 %v1849, %v1937
    %v2450 = vmul.f32 %v1854, %v1938
    %v2451 = vmul.f32 %v1857, %v1939
    %v2452 = vmul.f32 %v1846, %v1940
    %v2453 = vmul.f32 %v1849, %v1941
    %v2454 = vmul.f32 %v1854, %v1942
    %v2455 = vmul.f32 %v1857, %v1943
    %v2456 = vmul.f32 %v1846, %v1944
    %v2457 = vmul.f32 %v1849, %v1945
    %v2458 = vmul.f32 %v1854, %v1946
    %v2459 = vmul.f32 %v1857, %v1947
    %v2460 = vmul.f32 %v1846, %v1948
    %v2461 = vmul.f32 %v1849, %v1949
    %v2462 = vmul.f32 %v1854, %v1950
    %v2463 = vmul.f32 %v1857, %v1951
    %v2464 = vmul.f32 %v1846, %v1952
    %v2465 = vmul.f32 %v1849, %v1953
    %v2466 = vmul.f32 %v1854, %v1954
    %v2467 = vmul.f32 %v1857, %v1955
    %v2468 = vmul.f32 %v1846, %v1956
    %v2469 = vmul.f32 %v1849, %v1957
    %v2470 = vmul.f32 %v1854, %v1958
    %v2471 = vmul.f32 %v1857, %v1959
    %v2472 = vmul.f32 %v1846, %v1960
    %v2473 = vmul.f32 %v1849, %v1961
    %v2474 = vmul.f32 %v1854, %v1962
    %v2475 = vmul.f32 %v1857, %v1963
    %v2476 = vmul.f32 %v1846, %v1964
    %v2477 = vmul.f32 %v1849, %v1965
    %v2478 = vmul.f32 %v1854, %v1966
    %v2479 = vmul.f32 %v1857, %v1967
    %v2480 = vmul.f32 %v1846, %v1968
    %v2481 = vmul.f32 %v1849, %v1969
    %v2482 = vmul.f32 %v1854, %v1970
    %v2483 = vmul.f32 %v1857, %v1971
    %v2484 = vmul.f32 %v1846, %v1972
    %v2485 = vmul.f32 %v1849, %v1973
    %v2486 = vmul.f32 %v1854, %v1974
    %v2487 = vmul.f32 %v1857, %v1975
    %v2488 = vmul.f32 %v1846, %v1976
    %v2489 = vmul.f32 %v1849, %v1977
    %v2490 = vmul.f32 %v1854, %v1978
    %v2491 = vmul.f32 %v1857, %v1979
    %v2492 = vmul.f32 %v1846, %v1980
    %v2493 = vmul.f32 %v1849, %v1981
    %v2494 = vmul.f32 %v1854, %v1982
    %v2495 = vmul.f32 %v1857, %v1983
    %v2496 = vmul.f32 %v1846, %v1984
    %v2497 = vmul.f32 %v1849, %v1985
    %v2498 = vmul.f32 %v1854, %v1986
    %v2499 = vmul.f32 %v1857, %v1987
    %v2500 = vmul.f32 %v1846, %v1988
    %v2501 = vmul.f32 %v1849, %v1989
    %v2502 = vmul.f32 %v1854, %v1990
    %v2503 = vmul.f32 %v1857, %v1991
    %v2504 = vmul.f32 %v1846, %v1992
    %v2505 = vmul.f32 %v1849, %v1993
    %v2506 = vmul.f32 %v1854, %v1994
    %v2507 = vmul.f32 %v1857, %v1995
    %v2508 = vmul.f32 %v1846, %v1996
    %v2509 = vmul.f32 %v1849, %v1997
    %v2510 = vmul.f32 %v1854, %v1998
    %v2511 = vmul.f32 %v1857, %v1999
    %v2512 = vmul.f32 %v1846, %v2000
    %v2513 = vmul.f32 %v1849, %v2001
    %v2514 = vmul.f32 %v1854, %v2002
    %v2515 = vmul.f32 %v1857, %v2003
    %v2516 = vmul.f32 %v1846, %v2004
    %v2517 = vmul.f32 %v1849, %v2005
    %v2518 = vmul.f32 %v1854, %v2006
    %v2519 = vmul.f32 %v1857, %v2007
    %v2520 = vmul.f32 %v1846, %v2008
    %v2521 = vmul.f32 %v1849, %v2009
    %v2522 = vmul.f32 %v1854, %v2010
    %v2523 = vmul.f32 %v1857, %v2011
    %v2524 = vmul.f32 %v1846, %v2012
    %v2525 = vmul.f32 %v1849, %v2013
    %v2526 = vmul.f32 %v1854, %v2014
    %v2527 = vmul.f32 %v1857, %v2015
    %v2528 = vmul.f32 %v1846, %v2016
    %v2529 = vmul.f32 %v1849, %v2017
    %v2530 = vmul.f32 %v1854, %v2018
    %v2531 = vmul.f32 %v1857, %v2019
    %v2532 = vmul.f32 %v1846, %v2020
    %v2533 = vmul.f32 %v1849, %v2021
    %v2534 = vmul.f32 %v1854, %v2022
    %v2535 = vmul.f32 %v1857, %v2023
    %v2536 = vmul.f32 %v1846, %v2024
    %v2537 = vmul.f32 %v1849, %v2025
    %v2538 = vmul.f32 %v1854, %v2026
    %v2539 = vmul.f32 %v1857, %v2027
    %v2540 = vmul.f32 %v1846, %v2028
    %v2541 = vmul.f32 %v1849, %v2029
    %v2542 = vmul.f32 %v1854, %v2030
    %v2543 = vmul.f32 %v1857, %v2031
    %v2544 = vmul.f32 %v1846, %v2032
    %v2545 = vmul.f32 %v1849, %v2033
    %v2546 = vmul.f32 %v1854, %v2034
    %v2547 = vmul.f32 %v1857, %v2035
    %v2548 = vmul.f32 %v1846, %v2036
    %v2549 = vmul.f32 %v1849, %v2037
    %v2550 = vmul.f32 %v1854, %v2038
    %v2551 = vmul.f32 %v1857, %v2039
    %v2552 = vmul.f32 %v1846, %v2040
    %v2553 = vmul.f32 %v1849, %v2041
    %v2554 = vmul.f32 %v1854, %v2042
    %v2555 = vmul.f32 %v1857, %v2043
    %v2556 = vmul.f32 %v1846, %v2044
    %v2557 = vmul.f32 %v1849, %v2045
    %v2558 = vmul.f32 %v1854, %v2046
    %v2559 = vmul.f32 %v1857, %v2047
    %v2560 = vmul.f32 %v1846, %v2048
    %v2561 = vmul.f32 %v1849, %v2049
    %v2562 = vmul.f32 %v1854, %v2050
    %v2563 = vmul.f32 %v1857, %v2051
    %v2564 = vmul.f32 %v1846, %v2052
    %v2565 = vmul.f32 %v1849, %v2053
    %v2566 = vmul.f32 %v1854, %v2054
    %v2567 = vmul.f32 %v1857, %v2055
    %v2568 = vmul.f32 %v1846, %v2056
    %v2569 = vmul.f32 %v1849, %v2057
    %v2570 = vmul.f32 %v1854, %v2058
    %v2571 = vmul.f32 %v1857, %v2059
    %v2572 = vmul.f32 %v1846, %v2060
    %v2573 = vmul.f32 %v1849, %v2061
    %v2574 = vmul.f32 %v1854, %v2062
    %v2575 = vmul.f32 %v1857, %v2063
    %v2576 = vmul.f32 %v1846, %v2064
    %v2577 = vmul.f32 %v1849, %v2065
    %v2578 = vmul.f32 %v1854, %v2066
    %v2579 = vmul.f32 %v1857, %v2067
    %v2580 = vmul.f32 %v1846, %v2068
    %v2581 = vmul.f32 %v1849, %v2069
    %v2582 = vmul.f32 %v1854, %v2070
    %v2583 = vmul.f32 %v1857, %v2071
    %v2584 = vmul.f32 %v1846, %v2072
    %v2585 = vmul.f32 %v1849, %v2073
    %v2586 = vmul.f32 %v1854, %v2074
    %v2587 = vmul.f32 %v1857, %v2075
    %v2588 = vmul.f32 %v1846, %v2076
    %v2589 = vmul.f32 %v1849, %v2077
    %v2590 = vmul.f32 %v1854, %v2078
    %v2591 = vmul.f32 %v1857, %v2079
    %v2592 = vmul.f32 %v1846, %v2080
    %v2593 = vmul.f32 %v1849, %v2081
    %v2594 = vmul.f32 %v1854, %v2082
    %v2595 = vmul.f32 %v1857, %v2083
    %v2596 = vmul.f32 %v1846, %v2084
    %v2597 = vmul.f32 %v1849, %v2085
    %v2598 = vmul.f32 %v1854, %v2086
    %v2599 = vmul.f32 %v1857, %v2087
    %v2600 = vmul.f32 %v1846, %v2088
    %v2601 = vmul.f32 %v1849, %v2089
    %v2602 = vmul.f32 %v1854, %v2090
    %v2603 = vmul.f32 %v1857, %v2091
    %v2604 = vmul.f32 %v1846, %v2092
    %v2605 = vmul.f32 %v1849, %v2093
    %v2606 = vmul.f32 %v1854, %v2094
    %v2607 = vmul.f32 %v1857, %v2095
    %v2608 = vmul.f32 %v1846, %v2096
    %v2609 = vmul.f32 %v1849, %v2097
    %v2610 = vmul.f32 %v1854, %v2098
    %v2611 = vmul.f32 %v1857, %v2099
    %v2612 = vmul.f32 %v1846, %v2100
    %v2613 = vmul.f32 %v1849, %v2101
    %v2614 = vmul.f32 %v1854, %v2102
    %v2615 = vmul.f32 %v1857, %v2103
    %v2616 = vmul.f32 %v1846, %v2104
    %v2617 = vmul.f32 %v1849, %v2105
    %v2618 = vmul.f32 %v1854, %v2106
    %v2619 = vmul.f32 %v1857, %v2107
    %v2620 = vmul.f32 %v1846, %v2108
    %v2621 = vmul.f32 %v1849, %v2109
    %v2622 = vmul.f32 %v1854, %v2110
    %v2623 = vmul.f32 %v1857, %v2111
    %v2624 = vmul.f32 %v1846, %v2112
    %v2625 = vmul.f32 %v1849, %v2113
    %v2626 = vmul.f32 %v1854, %v2114
    %v2627 = vmul.f32 %v1857, %v2115
    %v2628 = vadd.f32 %v2116, %v2117
    %v2629 = vadd.f32 %v2628, %v2118
    %v2630 = vadd.f32 %v2629, %v2119
    %v2631 = vrot.slane %v2630, 4
    %v2632 = vadd.f32 %v2630, %v2631
    %v2633 = vrot.slane %v2632, 2
    %v2634 = vadd.f32 %v2632, %v2633
    %v2635 = vrot.slane %v2634, 1
    %v2636 = vadd.f32 %v2634, %v2635
    %v2637 = vadd.f32 %v2120, %v2121
    %v2638 = vadd.f32 %v2637, %v2122
    %v2639 = vadd.f32 %v2638, %v2123
    %v2640 = vrot.slane %v2639, 4
    %v2641 = vadd.f32 %v2639, %v2640
    %v2642 = vrot.slane %v2641, 2
    %v2643 = vadd.f32 %v2641, %v2642
    %v2644 = vrot.slane %v2643, 1
    %v2645 = vadd.f32 %v2643, %v2644
    %v2646 = vadd.f32 %v2124, %v2125
    %v2647 = vadd.f32 %v2646, %v2126
    %v2648 = vadd.f32 %v2647, %v2127
    %v2649 = vrot.slane %v2648, 4
    %v2650 = vadd.f32 %v2648, %v2649
    %v2651 = vrot.slane %v2650, 2
    %v2652 = vadd.f32 %v2650, %v2651
    %v2653 = vrot.slane %v2652, 1
    %v2654 = vadd.f32 %v2652, %v2653
    %v2655 = vadd.f32 %v2128, %v2129
    %v2656 = vadd.f32 %v2655, %v2130
    %v2657 = vadd.f32 %v2656, %v2131
    %v2658 = vrot.slane %v2657, 4
    %v2659 = vadd.f32 %v2657, %v2658
    %v2660 = vrot.slane %v2659, 2
    %v2661 = vadd.f32 %v2659, %v2660
    %v2662 = vrot.slane %v2661, 1
    %v2663 = vadd.f32 %v2661, %v2662
    %v2664 = vadd.f32 %v2132, %v2133
    %v2665 = vadd.f32 %v2664, %v2134
    %v2666 = vadd.f32 %v2665, %v2135
    %v2667 = vrot.slane %v2666, 4
    %v2668 = vadd.f32 %v2666, %v2667
    %v2669 = vrot.slane %v2668, 2
    %v2670 = vadd.f32 %v2668, %v2669
    %v2671 = vrot.slane %v2670, 1
    %v2672 = vadd.f32 %v2670, %v2671
    %v2673 = vadd.f32 %v2136, %v2137
    %v2674 = vadd.f32 %v2673, %v2138
    %v2675 = vadd.f32 %v2674, %v2139
    %v2676 = vrot.slane %v2675, 4
    %v2677 = vadd.f32 %v2675, %v2676
    %v2678 = vrot.slane %v2677, 2
    %v2679 = vadd.f32 %v2677, %v2678
    %v2680 = vrot.slane %v2679, 1
    %v2681 = vadd.f32 %v2679, %v2680
    %v2682 = vadd.f32 %v2140, %v2141
    %v2683 = vadd.f32 %v2682, %v2142
    %v2684 = vadd.f32 %v2683, %v2143
    %v2685 = vrot.slane %v2684, 4
    %v2686 = vadd.f32 %v2684, %v2685
    %v2687 = vrot.slane %v2686, 2
    %v2688 = vadd.f32 %v2686, %v2687
    %v2689 = vrot.slane %v2688, 1
    %v2690 = vadd.f32 %v2688, %v2689
    %v2691 = vadd.f32 %v2144, %v2145
    %v2692 = vadd.f32 %v2691, %v2146
    %v2693 = vadd.f32 %v2692, %v2147
    %v2694 = vrot.slane %v2693, 4
    %v2695 = vadd.f32 %v2693, %v2694
    %v2696 = vrot.slane %v2695, 2
    %v2697 = vadd.f32 %v2695, %v2696
    %v2698 = vrot.slane %v2697, 1
    %v2699 = vadd.f32 %v2697, %v2698
    %v2700 = vadd.f32 %v2148, %v2149
    %v2701 = vadd.f32 %v2700, %v2150
    %v2702 = vadd.f32 %v2701, %v2151
    %v2703 = vrot.slane %v2702, 4
    %v2704 = vadd.f32 %v2702, %v2703
    %v2705 = vrot.slane %v2704, 2
    %v2706 = vadd.f32 %v2704, %v2705
    %v2707 = vrot.slane %v2706, 1
    %v2708 = vadd.f32 %v2706, %v2707
    %v2709 = vadd.f32 %v2152, %v2153
    %v2710 = vadd.f32 %v2709, %v2154
    %v2711 = vadd.f32 %v2710, %v2155
    %v2712 = vrot.slane %v2711, 4
    %v2713 = vadd.f32 %v2711, %v2712
    %v2714 = vrot.slane %v2713, 2
    %v2715 = vadd.f32 %v2713, %v2714
    %v2716 = vrot.slane %v2715, 1
    %v2717 = vadd.f32 %v2715, %v2716
    %v2718 = vadd.f32 %v2156, %v2157
    %v2719 = vadd.f32 %v2718, %v2158
    %v2720 = vadd.f32 %v2719, %v2159
    %v2721 = vrot.slane %v2720, 4
    %v2722 = vadd.f32 %v2720, %v2721
    %v2723 = vrot.slane %v2722, 2
    %v2724 = vadd.f32 %v2722, %v2723
    %v2725 = vrot.slane %v2724, 1
    %v2726 = vadd.f32 %v2724, %v2725
    %v2727 = vadd.f32 %v2160, %v2161
    %v2728 = vadd.f32 %v2727, %v2162
    %v2729 = vadd.f32 %v2728, %v2163
    %v2730 = vrot.slane %v2729, 4
    %v2731 = vadd.f32 %v2729, %v2730
    %v2732 = vrot.slane %v2731, 2
    %v2733 = vadd.f32 %v2731, %v2732
    %v2734 = vrot.slane %v2733, 1
    %v2735 = vadd.f32 %v2733, %v2734
    %v2736 = vadd.f32 %v2164, %v2165
    %v2737 = vadd.f32 %v2736, %v2166
    %v2738 = vadd.f32 %v2737, %v2167
    %v2739 = vrot.slane %v2738, 4
    %v2740 = vadd.f32 %v2738, %v2739
    %v2741 = vrot.slane %v2740, 2
    %v2742 = vadd.f32 %v2740, %v2741
    %v2743 = vrot.slane %v2742, 1
    %v2744 = vadd.f32 %v2742, %v2743
    %v2745 = vadd.f32 %v2168, %v2169
    %v2746 = vadd.f32 %v2745, %v2170
    %v2747 = vadd.f32 %v2746, %v2171
    %v2748 = vrot.slane %v2747, 4
    %v2749 = vadd.f32 %v2747, %v2748
    %v2750 = vrot.slane %v2749, 2
    %v2751 = vadd.f32 %v2749, %v2750
    %v2752 = vrot.slane %v2751, 1
    %v2753 = vadd.f32 %v2751, %v2752
    %v2754 = vadd.f32 %v2172, %v2173
    %v2755 = vadd.f32 %v2754, %v2174
    %v2756 = vadd.f32 %v2755, %v2175
    %v2757 = vrot.slane %v2756, 4
    %v2758 = vadd.f32 %v2756, %v2757
    %v2759 = vrot.slane %v2758, 2
    %v2760 = vadd.f32 %v2758, %v2759
    %v2761 = vrot.slane %v2760, 1
    %v2762 = vadd.f32 %v2760, %v2761
    %v2763 = vadd.f32 %v2176, %v2177
    %v2764 = vadd.f32 %v2763, %v2178
    %v2765 = vadd.f32 %v2764, %v2179
    %v2766 = vrot.slane %v2765, 4
    %v2767 = vadd.f32 %v2765, %v2766
    %v2768 = vrot.slane %v2767, 2
    %v2769 = vadd.f32 %v2767, %v2768
    %v2770 = vrot.slane %v2769, 1
    %v2771 = vadd.f32 %v2769, %v2770
    %v2772 = vadd.f32 %v2180, %v2181
    %v2773 = vadd.f32 %v2772, %v2182
    %v2774 = vadd.f32 %v2773, %v2183
    %v2775 = vrot.slane %v2774, 4
    %v2776 = vadd.f32 %v2774, %v2775
    %v2777 = vrot.slane %v2776, 2
    %v2778 = vadd.f32 %v2776, %v2777
    %v2779 = vrot.slane %v2778, 1
    %v2780 = vadd.f32 %v2778, %v2779
    %v2781 = vadd.f32 %v2184, %v2185
    %v2782 = vadd.f32 %v2781, %v2186
    %v2783 = vadd.f32 %v2782, %v2187
    %v2784 = vrot.slane %v2783, 4
    %v2785 = vadd.f32 %v2783, %v2784
    %v2786 = vrot.slane %v2785, 2
    %v2787 = vadd.f32 %v2785, %v2786
    %v2788 = vrot.slane %v2787, 1
    %v2789 = vadd.f32 %v2787, %v2788
    %v2790 = vadd.f32 %v2188, %v2189
    %v2791 = vadd.f32 %v2790, %v2190
    %v2792 = vadd.f32 %v2791, %v2191
    %v2793 = vrot.slane %v2792, 4
    %v2794 = vadd.f32 %v2792, %v2793
    %v2795 = vrot.slane %v2794, 2
    %v2796 = vadd.f32 %v2794, %v2795
    %v2797 = vrot.slane %v2796, 1
    %v2798 = vadd.f32 %v2796, %v2797
    %v2799 = vadd.f32 %v2192, %v2193
    %v2800 = vadd.f32 %v2799, %v2194
    %v2801 = vadd.f32 %v2800, %v2195
    %v2802 = vrot.slane %v2801, 4
    %v2803 = vadd.f32 %v2801, %v2802
    %v2804 = vrot.slane %v2803, 2
    %v2805 = vadd.f32 %v2803, %v2804
    %v2806 = vrot.slane %v2805, 1
    %v2807 = vadd.f32 %v2805, %v2806
    %v2808 = vadd.f32 %v2196, %v2197
    %v2809 = vadd.f32 %v2808, %v2198
    %v2810 = vadd.f32 %v2809, %v2199
    %v2811 = vrot.slane %v2810, 4
    %v2812 = vadd.f32 %v2810, %v2811
    %v2813 = vrot.slane %v2812, 2
    %v2814 = vadd.f32 %v2812, %v2813
    %v2815 = vrot.slane %v2814, 1
    %v2816 = vadd.f32 %v2814, %v2815
    %v2817 = vadd.f32 %v2200, %v2201
    %v2818 = vadd.f32 %v2817, %v2202
    %v2819 = vadd.f32 %v2818, %v2203
    %v2820 = vrot.slane %v2819, 4
    %v2821 = vadd.f32 %v2819, %v2820
    %v2822 = vrot.slane %v2821, 2
    %v2823 = vadd.f32 %v2821, %v2822
    %v2824 = vrot.slane %v2823, 1
    %v2825 = vadd.f32 %v2823, %v2824
    %v2826 = vadd.f32 %v2204, %v2205
    %v2827 = vadd.f32 %v2826, %v2206
    %v2828 = vadd.f32 %v2827, %v2207
    %v2829 = vrot.slane %v2828, 4
    %v2830 = vadd.f32 %v2828, %v2829
    %v2831 = vrot.slane %v2830, 2
    %v2832 = vadd.f32 %v2830, %v2831
    %v2833 = vrot.slane %v2832, 1
    %v2834 = vadd.f32 %v2832, %v2833
    %v2835 = vadd.f32 %v2208, %v2209
    %v2836 = vadd.f32 %v2835, %v2210
    %v2837 = vadd.f32 %v2836, %v2211
    %v2838 = vrot.slane %v2837, 4
    %v2839 = vadd.f32 %v2837, %v2838
    %v2840 = vrot.slane %v2839, 2
    %v2841 = vadd.f32 %v2839, %v2840
    %v2842 = vrot.slane %v2841, 1
    %v2843 = vadd.f32 %v2841, %v2842
    %v2844 = vadd.f32 %v2212, %v2213
    %v2845 = vadd.f32 %v2844, %v2214
    %v2846 = vadd.f32 %v2845, %v2215
    %v2847 = vrot.slane %v2846, 4
    %v2848 = vadd.f32 %v2846, %v2847
    %v2849 = vrot.slane %v2848, 2
    %v2850 = vadd.f32 %v2848, %v2849
    %v2851 = vrot.slane %v2850, 1
    %v2852 = vadd.f32 %v2850, %v2851
    %v2853 = vadd.f32 %v2216, %v2217
    %v2854 = vadd.f32 %v2853, %v2218
    %v2855 = vadd.f32 %v2854, %v2219
    %v2856 = vrot.slane %v2855, 4
    %v2857 = vadd.f32 %v2855, %v2856
    %v2858 = vrot.slane %v2857, 2
    %v2859 = vadd.f32 %v2857, %v2858
    %v2860 = vrot.slane %v2859, 1
    %v2861 = vadd.f32 %v2859, %v2860
    %v2862 = vadd.f32 %v2220, %v2221
    %v2863 = vadd.f32 %v2862, %v2222
    %v2864 = vadd.f32 %v2863, %v2223
    %v2865 = vrot.slane %v2864, 4
    %v2866 = vadd.f32 %v2864, %v2865
    %v2867 = vrot.slane %v2866, 2
    %v2868 = vadd.f32 %v2866, %v2867
    %v2869 = vrot.slane %v2868, 1
    %v2870 = vadd.f32 %v2868, %v2869
    %v2871 = vadd.f32 %v2224, %v2225
    %v2872 = vadd.f32 %v2871, %v2226
    %v2873 = vadd.f32 %v2872, %v2227
    %v2874 = vrot.slane %v2873, 4
    %v2875 = vadd.f32 %v2873, %v2874
    %v2876 = vrot.slane %v2875, 2
    %v2877 = vadd.f32 %v2875, %v2876
    %v2878 = vrot.slane %v2877, 1
    %v2879 = vadd.f32 %v2877, %v2878
    %v2880 = vadd.f32 %v2228, %v2229
    %v2881 = vadd.f32 %v2880, %v2230
    %v2882 = vadd.f32 %v2881, %v2231
    %v2883 = vrot.slane %v2882, 4
    %v2884 = vadd.f32 %v2882, %v2883
    %v2885 = vrot.slane %v2884, 2
    %v2886 = vadd.f32 %v2884, %v2885
    %v2887 = vrot.slane %v2886, 1
    %v2888 = vadd.f32 %v2886, %v2887
    %v2889 = vadd.f32 %v2232, %v2233
    %v2890 = vadd.f32 %v2889, %v2234
    %v2891 = vadd.f32 %v2890, %v2235
    %v2892 = vrot.slane %v2891, 4
    %v2893 = vadd.f32 %v2891, %v2892
    %v2894 = vrot.slane %v2893, 2
    %v2895 = vadd.f32 %v2893, %v2894
    %v2896 = vrot.slane %v2895, 1
    %v2897 = vadd.f32 %v2895, %v2896
    %v2898 = vadd.f32 %v2236, %v2237
    %v2899 = vadd.f32 %v2898, %v2238
    %v2900 = vadd.f32 %v2899, %v2239
    %v2901 = vrot.slane %v2900, 4
    %v2902 = vadd.f32 %v2900, %v2901
    %v2903 = vrot.slane %v2902, 2
    %v2904 = vadd.f32 %v2902, %v2903
    %v2905 = vrot.slane %v2904, 1
    %v2906 = vadd.f32 %v2904, %v2905
    %v2907 = vadd.f32 %v2240, %v2241
    %v2908 = vadd.f32 %v2907, %v2242
    %v2909 = vadd.f32 %v2908, %v2243
    %v2910 = vrot.slane %v2909, 4
    %v2911 = vadd.f32 %v2909, %v2910
    %v2912 = vrot.slane %v2911, 2
    %v2913 = vadd.f32 %v2911, %v2912
    %v2914 = vrot.slane %v2913, 1
    %v2915 = vadd.f32 %v2913, %v2914
    %v2916 = vadd.f32 %v2244, %v2245
    %v2917 = vadd.f32 %v2916, %v2246
    %v2918 = vadd.f32 %v2917, %v2247
    %v2919 = vrot.slane %v2918, 4
    %v2920 = vadd.f32 %v2918, %v2919
    %v2921 = vrot.slane %v2920, 2
    %v2922 = vadd.f32 %v2920, %v2921
    %v2923 = vrot.slane %v2922, 1
    %v2924 = vadd.f32 %v2922, %v2923
    %v2925 = vadd.f32 %v2248, %v2249
    %v2926 = vadd.f32 %v2925, %v2250
    %v2927 = vadd.f32 %v2926, %v2251
    %v2928 = vrot.slane %v2927, 4
    %v2929 = vadd.f32 %v2927, %v2928
    %v2930 = vrot.slane %v2929, 2
    %v2931 = vadd.f32 %v2929, %v2930
    %v2932 = vrot.slane %v2931, 1
    %v2933 = vadd.f32 %v2931, %v2932
    %v2934 = vadd.f32 %v2252, %v2253
    %v2935 = vadd.f32 %v2934, %v2254
    %v2936 = vadd.f32 %v2935, %v2255
    %v2937 = vrot.slane %v2936, 4
    %v2938 = vadd.f32 %v2936, %v2937
    %v2939 = vrot.slane %v2938, 2
    %v2940 = vadd.f32 %v2938, %v2939
    %v2941 = vrot.slane %v2940, 1
    %v2942 = vadd.f32 %v2940, %v2941
    %v2943 = vadd.f32 %v2256, %v2257
    %v2944 = vadd.f32 %v2943, %v2258
    %v2945 = vadd.f32 %v2944, %v2259
    %v2946 = vrot.slane %v2945, 4
    %v2947 = vadd.f32 %v2945, %v2946
    %v2948 = vrot.slane %v2947, 2
    %v2949 = vadd.f32 %v2947, %v2948
    %v2950 = vrot.slane %v2949, 1
    %v2951 = vadd.f32 %v2949, %v2950
    %v2952 = vadd.f32 %v2260, %v2261
    %v2953 = vadd.f32 %v2952, %v2262
    %v2954 = vadd.f32 %v2953, %v2263
    %v2955 = vrot.slane %v2954, 4
    %v2956 = vadd.f32 %v2954, %v2955
    %v2957 = vrot.slane %v2956, 2
    %v2958 = vadd.f32 %v2956, %v2957
    %v2959 = vrot.slane %v2958, 1
    %v2960 = vadd.f32 %v2958, %v2959
    %v2961 = vadd.f32 %v2264, %v2265
    %v2962 = vadd.f32 %v2961, %v2266
    %v2963 = vadd.f32 %v2962, %v2267
    %v2964 = vrot.slane %v2963, 4
    %v2965 = vadd.f32 %v2963, %v2964
    %v2966 = vrot.slane %v2965, 2
    %v2967 = vadd.f32 %v2965, %v2966
    %v2968 = vrot.slane %v2967, 1
    %v2969 = vadd.f32 %v2967, %v2968
    %v2970 = vadd.f32 %v2268, %v2269
    %v2971 = vadd.f32 %v2970, %v2270
    %v2972 = vadd.f32 %v2971, %v2271
    %v2973 = vrot.slane %v2972, 4
    %v2974 = vadd.f32 %v2972, %v2973
    %v2975 = vrot.slane %v2974, 2
    %v2976 = vadd.f32 %v2974, %v2975
    %v2977 = vrot.slane %v2976, 1
    %v2978 = vadd.f32 %v2976, %v2977
    %v2979 = vadd.f32 %v2272, %v2273
    %v2980 = vadd.f32 %v2979, %v2274
    %v2981 = vadd.f32 %v2980, %v2275
    %v2982 = vrot.slane %v2981, 4
    %v2983 = vadd.f32 %v2981, %v2982
    %v2984 = vrot.slane %v2983, 2
    %v2985 = vadd.f32 %v2983, %v2984
    %v2986 = vrot.slane %v2985, 1
    %v2987 = vadd.f32 %v2985, %v2986
    %v2988 = vadd.f32 %v2276, %v2277
    %v2989 = vadd.f32 %v2988, %v2278
    %v2990 = vadd.f32 %v2989, %v2279
    %v2991 = vrot.slane %v2990, 4
    %v2992 = vadd.f32 %v2990, %v2991
    %v2993 = vrot.slane %v2992, 2
    %v2994 = vadd.f32 %v2992, %v2993
    %v2995 = vrot.slane %v2994, 1
    %v2996 = vadd.f32 %v2994, %v2995
    %v2997 = vadd.f32 %v2280, %v2281
    %v2998 = vadd.f32 %v2997, %v2282
    %v2999 = vadd.f32 %v2998, %v2283
    %v3000 = vrot.slane %v2999, 4
    %v3001 = vadd.f32 %v2999, %v3000
    %v3002 = vrot.slane %v3001, 2
    %v3003 = vadd.f32 %v3001, %v3002
    %v3004 = vrot.slane %v3003, 1
    %v3005 = vadd.f32 %v3003, %v3004
    %v3006 = vadd.f32 %v2284, %v2285
    %v3007 = vadd.f32 %v3006, %v2286
    %v3008 = vadd.f32 %v3007, %v2287
    %v3009 = vrot.slane %v3008, 4
    %v3010 = vadd.f32 %v3008, %v3009
    %v3011 = vrot.slane %v3010, 2
    %v3012 = vadd.f32 %v3010, %v3011
    %v3013 = vrot.slane %v3012, 1
    %v3014 = vadd.f32 %v3012, %v3013
    %v3015 = vadd.f32 %v2288, %v2289
    %v3016 = vadd.f32 %v3015, %v2290
    %v3017 = vadd.f32 %v3016, %v2291
    %v3018 = vrot.slane %v3017, 4
    %v3019 = vadd.f32 %v3017, %v3018
    %v3020 = vrot.slane %v3019, 2
    %v3021 = vadd.f32 %v3019, %v3020
    %v3022 = vrot.slane %v3021, 1
    %v3023 = vadd.f32 %v3021, %v3022
    %v3024 = vadd.f32 %v2292, %v2293
    %v3025 = vadd.f32 %v3024, %v2294
    %v3026 = vadd.f32 %v3025, %v2295
    %v3027 = vrot.slane %v3026, 4
    %v3028 = vadd.f32 %v3026, %v3027
    %v3029 = vrot.slane %v3028, 2
    %v3030 = vadd.f32 %v3028, %v3029
    %v3031 = vrot.slane %v3030, 1
    %v3032 = vadd.f32 %v3030, %v3031
    %v3033 = vadd.f32 %v2296, %v2297
    %v3034 = vadd.f32 %v3033, %v2298
    %v3035 = vadd.f32 %v3034, %v2299
    %v3036 = vrot.slane %v3035, 4
    %v3037 = vadd.f32 %v3035, %v3036
    %v3038 = vrot.slane %v3037, 2
    %v3039 = vadd.f32 %v3037, %v3038
    %v3040 = vrot.slane %v3039, 1
    %v3041 = vadd.f32 %v3039, %v3040
    %v3042 = vadd.f32 %v2300, %v2301
    %v3043 = vadd.f32 %v3042, %v2302
    %v3044 = vadd.f32 %v3043, %v2303
    %v3045 = vrot.slane %v3044, 4
    %v3046 = vadd.f32 %v3044, %v3045
    %v3047 = vrot.slane %v3046, 2
    %v3048 = vadd.f32 %v3046, %v3047
    %v3049 = vrot.slane %v3048, 1
    %v3050 = vadd.f32 %v3048, %v3049
    %v3051 = vadd.f32 %v2304, %v2305
    %v3052 = vadd.f32 %v3051, %v2306
    %v3053 = vadd.f32 %v3052, %v2307
    %v3054 = vrot.slane %v3053, 4
    %v3055 = vadd.f32 %v3053, %v3054
    %v3056 = vrot.slane %v3055, 2
    %v3057 = vadd.f32 %v3055, %v3056
    %v3058 = vrot.slane %v3057, 1
    %v3059 = vadd.f32 %v3057, %v3058
    %v3060 = vadd.f32 %v2308, %v2309
    %v3061 = vadd.f32 %v3060, %v2310
    %v3062 = vadd.f32 %v3061, %v2311
    %v3063 = vrot.slane %v3062, 4
    %v3064 = vadd.f32 %v3062, %v3063
    %v3065 = vrot.slane %v3064, 2
    %v3066 = vadd.f32 %v3064, %v3065
    %v3067 = vrot.slane %v3066, 1
    %v3068 = vadd.f32 %v3066, %v3067
    %v3069 = vadd.f32 %v2312, %v2313
    %v3070 = vadd.f32 %v3069, %v2314
    %v3071 = vadd.f32 %v3070, %v2315
    %v3072 = vrot.slane %v3071, 4
    %v3073 = vadd.f32 %v3071, %v3072
    %v3074 = vrot.slane %v3073, 2
    %v3075 = vadd.f32 %v3073, %v3074
    %v3076 = vrot.slane %v3075, 1
    %v3077 = vadd.f32 %v3075, %v3076
    %v3078 = vadd.f32 %v2316, %v2317
    %v3079 = vadd.f32 %v3078, %v2318
    %v3080 = vadd.f32 %v3079, %v2319
    %v3081 = vrot.slane %v3080, 4
    %v3082 = vadd.f32 %v3080, %v3081
    %v3083 = vrot.slane %v3082, 2
    %v3084 = vadd.f32 %v3082, %v3083
    %v3085 = vrot.slane %v3084, 1
    %v3086 = vadd.f32 %v3084, %v3085
    %v3087 = vadd.f32 %v2320, %v2321
    %v3088 = vadd.f32 %v3087, %v2322
    %v3089 = vadd.f32 %v3088, %v2323
    %v3090 = vrot.slane %v3089, 4
    %v3091 = vadd.f32 %v3089, %v3090
    %v3092 = vrot.slane %v3091, 2
    %v3093 = vadd.f32 %v3091, %v3092
    %v3094 = vrot.slane %v3093, 1
    %v3095 = vadd.f32 %v3093, %v3094
    %v3096 = vadd.f32 %v2324, %v2325
    %v3097 = vadd.f32 %v3096, %v2326
    %v3098 = vadd.f32 %v3097, %v2327
    %v3099 = vrot.slane %v3098, 4
    %v3100 = vadd.f32 %v3098, %v3099
    %v3101 = vrot.slane %v3100, 2
    %v3102 = vadd.f32 %v3100, %v3101
    %v3103 = vrot.slane %v3102, 1
    %v3104 = vadd.f32 %v3102, %v3103
    %v3105 = vadd.f32 %v2328, %v2329
    %v3106 = vadd.f32 %v3105, %v2330
    %v3107 = vadd.f32 %v3106, %v2331
    %v3108 = vrot.slane %v3107, 4
    %v3109 = vadd.f32 %v3107, %v3108
    %v3110 = vrot.slane %v3109, 2
    %v3111 = vadd.f32 %v3109, %v3110
    %v3112 = vrot.slane %v3111, 1
    %v3113 = vadd.f32 %v3111, %v3112
    %v3114 = vadd.f32 %v2332, %v2333
    %v3115 = vadd.f32 %v3114, %v2334
    %v3116 = vadd.f32 %v3115, %v2335
    %v3117 = vrot.slane %v3116, 4
    %v3118 = vadd.f32 %v3116, %v3117
    %v3119 = vrot.slane %v3118, 2
    %v3120 = vadd.f32 %v3118, %v3119
    %v3121 = vrot.slane %v3120, 1
    %v3122 = vadd.f32 %v3120, %v3121
    %v3123 = vadd.f32 %v2336, %v2337
    %v3124 = vadd.f32 %v3123, %v2338
    %v3125 = vadd.f32 %v3124, %v2339
    %v3126 = vrot.slane %v3125, 4
    %v3127 = vadd.f32 %v3125, %v3126
    %v3128 = vrot.slane %v3127, 2
    %v3129 = vadd.f32 %v3127, %v3128
    %v3130 = vrot.slane %v3129, 1
    %v3131 = vadd.f32 %v3129, %v3130
    %v3132 = vadd.f32 %v2340, %v2341
    %v3133 = vadd.f32 %v3132, %v2342
    %v3134 = vadd.f32 %v3133, %v2343
    %v3135 = vrot.slane %v3134, 4
    %v3136 = vadd.f32 %v3134, %v3135
    %v3137 = vrot.slane %v3136, 2
    %v3138 = vadd.f32 %v3136, %v3137
    %v3139 = vrot.slane %v3138, 1
    %v3140 = vadd.f32 %v3138, %v3139
    %v3141 = vadd.f32 %v2344, %v2345
    %v3142 = vadd.f32 %v3141, %v2346
    %v3143 = vadd.f32 %v3142, %v2347
    %v3144 = vrot.slane %v3143, 4
    %v3145 = vadd.f32 %v3143, %v3144
    %v3146 = vrot.slane %v3145, 2
    %v3147 = vadd.f32 %v3145, %v3146
    %v3148 = vrot.slane %v3147, 1
    %v3149 = vadd.f32 %v3147, %v3148
    %v3150 = vadd.f32 %v2348, %v2349
    %v3151 = vadd.f32 %v3150, %v2350
    %v3152 = vadd.f32 %v3151, %v2351
    %v3153 = vrot.slane %v3152, 4
    %v3154 = vadd.f32 %v3152, %v3153
    %v3155 = vrot.slane %v3154, 2
    %v3156 = vadd.f32 %v3154, %v3155
    %v3157 = vrot.slane %v3156, 1
    %v3158 = vadd.f32 %v3156, %v3157
    %v3159 = vadd.f32 %v2352, %v2353
    %v3160 = vadd.f32 %v3159, %v2354
    %v3161 = vadd.f32 %v3160, %v2355
    %v3162 = vrot.slane %v3161, 4
    %v3163 = vadd.f32 %v3161, %v3162
    %v3164 = vrot.slane %v3163, 2
    %v3165 = vadd.f32 %v3163, %v3164
    %v3166 = vrot.slane %v3165, 1
    %v3167 = vadd.f32 %v3165, %v3166
    %v3168 = vadd.f32 %v2356, %v2357
    %v3169 = vadd.f32 %v3168, %v2358
    %v3170 = vadd.f32 %v3169, %v2359
    %v3171 = vrot.slane %v3170, 4
    %v3172 = vadd.f32 %v3170, %v3171
    %v3173 = vrot.slane %v3172, 2
    %v3174 = vadd.f32 %v3172, %v3173
    %v3175 = vrot.slane %v3174, 1
    %v3176 = vadd.f32 %v3174, %v3175
    %v3177 = vadd.f32 %v2360, %v2361
    %v3178 = vadd.f32 %v3177, %v2362
    %v3179 = vadd.f32 %v3178, %v2363
    %v3180 = vrot.slane %v3179, 4
    %v3181 = vadd.f32 %v3179, %v3180
    %v3182 = vrot.slane %v3181, 2
    %v3183 = vadd.f32 %v3181, %v3182
    %v3184 = vrot.slane %v3183, 1
    %v3185 = vadd.f32 %v3183, %v3184
    %v3186 = vadd.f32 %v2364, %v2365
    %v3187 = vadd.f32 %v3186, %v2366
    %v3188 = vadd.f32 %v3187, %v2367
    %v3189 = vrot.slane %v3188, 4
    %v3190 = vadd.f32 %v3188, %v3189
    %v3191 = vrot.slane %v3190, 2
    %v3192 = vadd.f32 %v3190, %v3191
    %v3193 = vrot.slane %v3192, 1
    %v3194 = vadd.f32 %v3192, %v3193
    %v3195 = vadd.f32 %v2368, %v2369
    %v3196 = vadd.f32 %v3195, %v2370
    %v3197 = vadd.f32 %v3196, %v2371
    %v3198 = vrot.slane %v3197, 4
    %v3199 = vadd.f32 %v3197, %v3198
    %v3200 = vrot.slane %v3199, 2
    %v3201 = vadd.f32 %v3199, %v3200
    %v3202 = vrot.slane %v3201, 1
    %v3203 = vadd.f32 %v3201, %v3202
    %v3204 = vadd.f32 %v2372, %v2373
    %v3205 = vadd.f32 %v3204, %v2374
    %v3206 = vadd.f32 %v3205, %v2375
    %v3207 = vrot.slane %v3206, 4
    %v3208 = vadd.f32 %v3206, %v3207
    %v3209 = vrot.slane %v3208, 2
    %v3210 = vadd.f32 %v3208, %v3209
    %v3211 = vrot.slane %v3210, 1
    %v3212 = vadd.f32 %v3210, %v3211
    %v3213 = vadd.f32 %v2376, %v2377
    %v3214 = vadd.f32 %v3213, %v2378
    %v3215 = vadd.f32 %v3214, %v2379
    %v3216 = vrot.slane %v3215, 4
    %v3217 = vadd.f32 %v3215, %v3216
    %v3218 = vrot.slane %v3217, 2
    %v3219 = vadd.f32 %v3217, %v3218
    %v3220 = vrot.slane %v3219, 1
    %v3221 = vadd.f32 %v3219, %v3220
    %v3222 = vadd.f32 %v2380, %v2381
    %v3223 = vadd.f32 %v3222, %v2382
    %v3224 = vadd.f32 %v3223, %v2383
    %v3225 = vrot.slane %v3224, 4
    %v3226 = vadd.f32 %v3224, %v3225
    %v3227 = vrot.slane %v3226, 2
    %v3228 = vadd.f32 %v3226, %v3227
    %v3229 = vrot.slane %v3228, 1
    %v3230 = vadd.f32 %v3228, %v3229
    %v3231 = vadd.f32 %v2384, %v2385
    %v3232 = vadd.f32 %v3231, %v2386
    %v3233 = vadd.f32 %v3232, %v2387
    %v3234 = vrot.slane %v3233, 4
    %v3235 = vadd.f32 %v3233, %v3234
    %v3236 = vrot.slane %v3235, 2
    %v3237 = vadd.f32 %v3235, %v3236
    %v3238 = vrot.slane %v3237, 1
    %v3239 = vadd.f32 %v3237, %v3238
    %v3240 = vadd.f32 %v2388, %v2389
    %v3241 = vadd.f32 %v3240, %v2390
    %v3242 = vadd.f32 %v3241, %v2391
    %v3243 = vrot.slane %v3242, 4
    %v3244 = vadd.f32 %v3242, %v3243
    %v3245 = vrot.slane %v3244, 2
    %v3246 = vadd.f32 %v3244, %v3245
    %v3247 = vrot.slane %v3246, 1
    %v3248 = vadd.f32 %v3246, %v3247
    %v3249 = vadd.f32 %v2392, %v2393
    %v3250 = vadd.f32 %v3249, %v2394
    %v3251 = vadd.f32 %v3250, %v2395
    %v3252 = vrot.slane %v3251, 4
    %v3253 = vadd.f32 %v3251, %v3252
    %v3254 = vrot.slane %v3253, 2
    %v3255 = vadd.f32 %v3253, %v3254
    %v3256 = vrot.slane %v3255, 1
    %v3257 = vadd.f32 %v3255, %v3256
    %v3258 = vadd.f32 %v2396, %v2397
    %v3259 = vadd.f32 %v3258, %v2398
    %v3260 = vadd.f32 %v3259, %v2399
    %v3261 = vrot.slane %v3260, 4
    %v3262 = vadd.f32 %v3260, %v3261
    %v3263 = vrot.slane %v3262, 2
    %v3264 = vadd.f32 %v3262, %v3263
    %v3265 = vrot.slane %v3264, 1
    %v3266 = vadd.f32 %v3264, %v3265
    %v3267 = vadd.f32 %v2400, %v2401
    %v3268 = vadd.f32 %v3267, %v2402
    %v3269 = vadd.f32 %v3268, %v2403
    %v3270 = vrot.slane %v3269, 4
    %v3271 = vadd.f32 %v3269, %v3270
    %v3272 = vrot.slane %v3271, 2
    %v3273 = vadd.f32 %v3271, %v3272
    %v3274 = vrot.slane %v3273, 1
    %v3275 = vadd.f32 %v3273, %v3274
    %v3276 = vadd.f32 %v2404, %v2405
    %v3277 = vadd.f32 %v3276, %v2406
    %v3278 = vadd.f32 %v3277, %v2407
    %v3279 = vrot.slane %v3278, 4
    %v3280 = vadd.f32 %v3278, %v3279
    %v3281 = vrot.slane %v3280, 2
    %v3282 = vadd.f32 %v3280, %v3281
    %v3283 = vrot.slane %v3282, 1
    %v3284 = vadd.f32 %v3282, %v3283
    %v3285 = vadd.f32 %v2408, %v2409
    %v3286 = vadd.f32 %v3285, %v2410
    %v3287 = vadd.f32 %v3286, %v2411
    %v3288 = vrot.slane %v3287, 4
    %v3289 = vadd.f32 %v3287, %v3288
    %v3290 = vrot.slane %v3289, 2
    %v3291 = vadd.f32 %v3289, %v3290
    %v3292 = vrot.slane %v3291, 1
    %v3293 = vadd.f32 %v3291, %v3292
    %v3294 = vadd.f32 %v2412, %v2413
    %v3295 = vadd.f32 %v3294, %v2414
    %v3296 = vadd.f32 %v3295, %v2415
    %v3297 = vrot.slane %v3296, 4
    %v3298 = vadd.f32 %v3296, %v3297
    %v3299 = vrot.slane %v3298, 2
    %v3300 = vadd.f32 %v3298, %v3299
    %v3301 = vrot.slane %v3300, 1
    %v3302 = vadd.f32 %v3300, %v3301
    %v3303 = vadd.f32 %v2416, %v2417
    %v3304 = vadd.f32 %v3303, %v2418
    %v3305 = vadd.f32 %v3304, %v2419
    %v3306 = vrot.slane %v3305, 4
    %v3307 = vadd.f32 %v3305, %v3306
    %v3308 = vrot.slane %v3307, 2
    %v3309 = vadd.f32 %v3307, %v3308
    %v3310 = vrot.slane %v3309, 1
    %v3311 = vadd.f32 %v3309, %v3310
    %v3312 = vadd.f32 %v2420, %v2421
    %v3313 = vadd.f32 %v3312, %v2422
    %v3314 = vadd.f32 %v3313, %v2423
    %v3315 = vrot.slane %v3314, 4
    %v3316 = vadd.f32 %v3314, %v3315
    %v3317 = vrot.slane %v3316, 2
    %v3318 = vadd.f32 %v3316, %v3317
    %v3319 = vrot.slane %v3318, 1
    %v3320 = vadd.f32 %v3318, %v3319
    %v3321 = vadd.f32 %v2424, %v2425
    %v3322 = vadd.f32 %v3321, %v2426
    %v3323 = vadd.f32 %v3322, %v2427
    %v3324 = vrot.slane %v3323, 4
    %v3325 = vadd.f32 %v3323, %v3324
    %v3326 = vrot.slane %v3325, 2
    %v3327 = vadd.f32 %v3325, %v3326
    %v3328 = vrot.slane %v3327, 1
    %v3329 = vadd.f32 %v3327, %v3328
    %v3330 = vadd.f32 %v2428, %v2429
    %v3331 = vadd.f32 %v3330, %v2430
    %v3332 = vadd.f32 %v3331, %v2431
    %v3333 = vrot.slane %v3332, 4
    %v3334 = vadd.f32 %v3332, %v3333
    %v3335 = vrot.slane %v3334, 2
    %v3336 = vadd.f32 %v3334, %v3335
    %v3337 = vrot.slane %v3336, 1
    %v3338 = vadd.f32 %v3336, %v3337
    %v3339 = vadd.f32 %v2432, %v2433
    %v3340 = vadd.f32 %v3339, %v2434
    %v3341 = vadd.f32 %v3340, %v2435
    %v3342 = vrot.slane %v3341, 4
    %v3343 = vadd.f32 %v3341, %v3342
    %v3344 = vrot.slane %v3343, 2
    %v3345 = vadd.f32 %v3343, %v3344
    %v3346 = vrot.slane %v3345, 1
    %v3347 = vadd.f32 %v3345, %v3346
    %v3348 = vadd.f32 %v2436, %v2437
    %v3349 = vadd.f32 %v3348, %v2438
    %v3350 = vadd.f32 %v3349, %v2439
    %v3351 = vrot.slane %v3350, 4
    %v3352 = vadd.f32 %v3350, %v3351
    %v3353 = vrot.slane %v3352, 2
    %v3354 = vadd.f32 %v3352, %v3353
    %v3355 = vrot.slane %v3354, 1
    %v3356 = vadd.f32 %v3354, %v3355
    %v3357 = vadd.f32 %v2440, %v2441
    %v3358 = vadd.f32 %v3357, %v2442
    %v3359 = vadd.f32 %v3358, %v2443
    %v3360 = vrot.slane %v3359, 4
    %v3361 = vadd.f32 %v3359, %v3360
    %v3362 = vrot.slane %v3361, 2
    %v3363 = vadd.f32 %v3361, %v3362
    %v3364 = vrot.slane %v3363, 1
    %v3365 = vadd.f32 %v3363, %v3364
    %v3366 = vadd.f32 %v2444, %v2445
    %v3367 = vadd.f32 %v3366, %v2446
    %v3368 = vadd.f32 %v3367, %v2447
    %v3369 = vrot.slane %v3368, 4
    %v3370 = vadd.f32 %v3368, %v3369
    %v3371 = vrot.slane %v3370, 2
    %v3372 = vadd.f32 %v3370, %v3371
    %v3373 = vrot.slane %v3372, 1
    %v3374 = vadd.f32 %v3372, %v3373
    %v3375 = vadd.f32 %v2448, %v2449
    %v3376 = vadd.f32 %v3375, %v2450
    %v3377 = vadd.f32 %v3376, %v2451
    %v3378 = vrot.slane %v3377, 4
    %v3379 = vadd.f32 %v3377, %v3378
    %v3380 = vrot.slane %v3379, 2
    %v3381 = vadd.f32 %v3379, %v3380
    %v3382 = vrot.slane %v3381, 1
    %v3383 = vadd.f32 %v3381, %v3382
    %v3384 = vadd.f32 %v2452, %v2453
    %v3385 = vadd.f32 %v3384, %v2454
    %v3386 = vadd.f32 %v3385, %v2455
    %v3387 = vrot.slane %v3386, 4
    %v3388 = vadd.f32 %v3386, %v3387
    %v3389 = vrot.slane %v3388, 2
    %v3390 = vadd.f32 %v3388, %v3389
    %v3391 = vrot.slane %v3390, 1
    %v3392 = vadd.f32 %v3390, %v3391
    %v3393 = vadd.f32 %v2456, %v2457
    %v3394 = vadd.f32 %v3393, %v2458
    %v3395 = vadd.f32 %v3394, %v2459
    %v3396 = vrot.slane %v3395, 4
    %v3397 = vadd.f32 %v3395, %v3396
    %v3398 = vrot.slane %v3397, 2
    %v3399 = vadd.f32 %v3397, %v3398
    %v3400 = vrot.slane %v3399, 1
    %v3401 = vadd.f32 %v3399, %v3400
    %v3402 = vadd.f32 %v2460, %v2461
    %v3403 = vadd.f32 %v3402, %v2462
    %v3404 = vadd.f32 %v3403, %v2463
    %v3405 = vrot.slane %v3404, 4
    %v3406 = vadd.f32 %v3404, %v3405
    %v3407 = vrot.slane %v3406, 2
    %v3408 = vadd.f32 %v3406, %v3407
    %v3409 = vrot.slane %v3408, 1
    %v3410 = vadd.f32 %v3408, %v3409
    %v3411 = vadd.f32 %v2464, %v2465
    %v3412 = vadd.f32 %v3411, %v2466
    %v3413 = vadd.f32 %v3412, %v2467
    %v3414 = vrot.slane %v3413, 4
    %v3415 = vadd.f32 %v3413, %v3414
    %v3416 = vrot.slane %v3415, 2
    %v3417 = vadd.f32 %v3415, %v3416
    %v3418 = vrot.slane %v3417, 1
    %v3419 = vadd.f32 %v3417, %v3418
    %v3420 = vadd.f32 %v2468, %v2469
    %v3421 = vadd.f32 %v3420, %v2470
    %v3422 = vadd.f32 %v3421, %v2471
    %v3423 = vrot.slane %v3422, 4
    %v3424 = vadd.f32 %v3422, %v3423
    %v3425 = vrot.slane %v3424, 2
    %v3426 = vadd.f32 %v3424, %v3425
    %v3427 = vrot.slane %v3426, 1
    %v3428 = vadd.f32 %v3426, %v3427
    %v3429 = vadd.f32 %v2472, %v2473
    %v3430 = vadd.f32 %v3429, %v2474
    %v3431 = vadd.f32 %v3430, %v2475
    %v3432 = vrot.slane %v3431, 4
    %v3433 = vadd.f32 %v3431, %v3432
    %v3434 = vrot.slane %v3433, 2
    %v3435 = vadd.f32 %v3433, %v3434
    %v3436 = vrot.slane %v3435, 1
    %v3437 = vadd.f32 %v3435, %v3436
    %v3438 = vadd.f32 %v2476, %v2477
    %v3439 = vadd.f32 %v3438, %v2478
    %v3440 = vadd.f32 %v3439, %v2479
    %v3441 = vrot.slane %v3440, 4
    %v3442 = vadd.f32 %v3440, %v3441
    %v3443 = vrot.slane %v3442, 2
    %v3444 = vadd.f32 %v3442, %v3443
    %v3445 = vrot.slane %v3444, 1
    %v3446 = vadd.f32 %v3444, %v3445
    %v3447 = vadd.f32 %v2480, %v2481
    %v3448 = vadd.f32 %v3447, %v2482
    %v3449 = vadd.f32 %v3448, %v2483
    %v3450 = vrot.slane %v3449, 4
    %v3451 = vadd.f32 %v3449, %v3450
    %v3452 = vrot.slane %v3451, 2
    %v3453 = vadd.f32 %v3451, %v3452
    %v3454 = vrot.slane %v3453, 1
    %v3455 = vadd.f32 %v3453, %v3454
    %v3456 = vadd.f32 %v2484, %v2485
    %v3457 = vadd.f32 %v3456, %v2486
    %v3458 = vadd.f32 %v3457, %v2487
    %v3459 = vrot.slane %v3458, 4
    %v3460 = vadd.f32 %v3458, %v3459
    %v3461 = vrot.slane %v3460, 2
    %v3462 = vadd.f32 %v3460, %v3461
    %v3463 = vrot.slane %v3462, 1
    %v3464 = vadd.f32 %v3462, %v3463
    %v3465 = vadd.f32 %v2488, %v2489
    %v3466 = vadd.f32 %v3465, %v2490
    %v3467 = vadd.f32 %v3466, %v2491
    %v3468 = vrot.slane %v3467, 4
    %v3469 = vadd.f32 %v3467, %v3468
    %v3470 = vrot.slane %v3469, 2
    %v3471 = vadd.f32 %v3469, %v3470
    %v3472 = vrot.slane %v3471, 1
    %v3473 = vadd.f32 %v3471, %v3472
    %v3474 = vadd.f32 %v2492, %v2493
    %v3475 = vadd.f32 %v3474, %v2494
    %v3476 = vadd.f32 %v3475, %v2495
    %v3477 = vrot.slane %v3476, 4
    %v3478 = vadd.f32 %v3476, %v3477
    %v3479 = vrot.slane %v3478, 2
    %v3480 = vadd.f32 %v3478, %v3479
    %v3481 = vrot.slane %v3480, 1
    %v3482 = vadd.f32 %v3480, %v3481
    %v3483 = vadd.f32 %v2496, %v2497
    %v3484 = vadd.f32 %v3483, %v2498
    %v3485 = vadd.f32 %v3484, %v2499
    %v3486 = vrot.slane %v3485, 4
    %v3487 = vadd.f32 %v3485, %v3486
    %v3488 = vrot.slane %v3487, 2
    %v3489 = vadd.f32 %v3487, %v3488
    %v3490 = vrot.slane %v3489, 1
    %v3491 = vadd.f32 %v3489, %v3490
    %v3492 = vadd.f32 %v2500, %v2501
    %v3493 = vadd.f32 %v3492, %v2502
    %v3494 = vadd.f32 %v3493, %v2503
    %v3495 = vrot.slane %v3494, 4
    %v3496 = vadd.f32 %v3494, %v3495
    %v3497 = vrot.slane %v3496, 2
    %v3498 = vadd.f32 %v3496, %v3497
    %v3499 = vrot.slane %v3498, 1
    %v3500 = vadd.f32 %v3498, %v3499
    %v3501 = vadd.f32 %v2504, %v2505
    %v3502 = vadd.f32 %v3501, %v2506
    %v3503 = vadd.f32 %v3502, %v2507
    %v3504 = vrot.slane %v3503, 4
    %v3505 = vadd.f32 %v3503, %v3504
    %v3506 = vrot.slane %v3505, 2
    %v3507 = vadd.f32 %v3505, %v3506
    %v3508 = vrot.slane %v3507, 1
    %v3509 = vadd.f32 %v3507, %v3508
    %v3510 = vadd.f32 %v2508, %v2509
    %v3511 = vadd.f32 %v3510, %v2510
    %v3512 = vadd.f32 %v3511, %v2511
    %v3513 = vrot.slane %v3512, 4
    %v3514 = vadd.f32 %v3512, %v3513
    %v3515 = vrot.slane %v3514, 2
    %v3516 = vadd.f32 %v3514, %v3515
    %v3517 = vrot.slane %v3516, 1
    %v3518 = vadd.f32 %v3516, %v3517
    %v3519 = vadd.f32 %v2512, %v2513
    %v3520 = vadd.f32 %v3519, %v2514
    %v3521 = vadd.f32 %v3520, %v2515
    %v3522 = vrot.slane %v3521, 4
    %v3523 = vadd.f32 %v3521, %v3522
    %v3524 = vrot.slane %v3523, 2
    %v3525 = vadd.f32 %v3523, %v3524
    %v3526 = vrot.slane %v3525, 1
    %v3527 = vadd.f32 %v3525, %v3526
    %v3528 = vadd.f32 %v2516, %v2517
    %v3529 = vadd.f32 %v3528, %v2518
    %v3530 = vadd.f32 %v3529, %v2519
    %v3531 = vrot.slane %v3530, 4
    %v3532 = vadd.f32 %v3530, %v3531
    %v3533 = vrot.slane %v3532, 2
    %v3534 = vadd.f32 %v3532, %v3533
    %v3535 = vrot.slane %v3534, 1
    %v3536 = vadd.f32 %v3534, %v3535
    %v3537 = vadd.f32 %v2520, %v2521
    %v3538 = vadd.f32 %v3537, %v2522
    %v3539 = vadd.f32 %v3538, %v2523
    %v3540 = vrot.slane %v3539, 4
    %v3541 = vadd.f32 %v3539, %v3540
    %v3542 = vrot.slane %v3541, 2
    %v3543 = vadd.f32 %v3541, %v3542
    %v3544 = vrot.slane %v3543, 1
    %v3545 = vadd.f32 %v3543, %v3544
    %v3546 = vadd.f32 %v2524, %v2525
    %v3547 = vadd.f32 %v3546, %v2526
    %v3548 = vadd.f32 %v3547, %v2527
    %v3549 = vrot.slane %v3548, 4
    %v3550 = vadd.f32 %v3548, %v3549
    %v3551 = vrot.slane %v3550, 2
    %v3552 = vadd.f32 %v3550, %v3551
    %v3553 = vrot.slane %v3552, 1
    %v3554 = vadd.f32 %v3552, %v3553
    %v3555 = vadd.f32 %v2528, %v2529
    %v3556 = vadd.f32 %v3555, %v2530
    %v3557 = vadd.f32 %v3556, %v2531
    %v3558 = vrot.slane %v3557, 4
    %v3559 = vadd.f32 %v3557, %v3558
    %v3560 = vrot.slane %v3559, 2
    %v3561 = vadd.f32 %v3559, %v3560
    %v3562 = vrot.slane %v3561, 1
    %v3563 = vadd.f32 %v3561, %v3562
    %v3564 = vadd.f32 %v2532, %v2533
    %v3565 = vadd.f32 %v3564, %v2534
    %v3566 = vadd.f32 %v3565, %v2535
    %v3567 = vrot.slane %v3566, 4
    %v3568 = vadd.f32 %v3566, %v3567
    %v3569 = vrot.slane %v3568, 2
    %v3570 = vadd.f32 %v3568, %v3569
    %v3571 = vrot.slane %v3570, 1
    %v3572 = vadd.f32 %v3570, %v3571
    %v3573 = vadd.f32 %v2536, %v2537
    %v3574 = vadd.f32 %v3573, %v2538
    %v3575 = vadd.f32 %v3574, %v2539
    %v3576 = vrot.slane %v3575, 4
    %v3577 = vadd.f32 %v3575, %v3576
    %v3578 = vrot.slane %v3577, 2
    %v3579 = vadd.f32 %v3577, %v3578
    %v3580 = vrot.slane %v3579, 1
    %v3581 = vadd.f32 %v3579, %v3580
    %v3582 = vadd.f32 %v2540, %v2541
    %v3583 = vadd.f32 %v3582, %v2542
    %v3584 = vadd.f32 %v3583, %v2543
    %v3585 = vrot.slane %v3584, 4
    %v3586 = vadd.f32 %v3584, %v3585
    %v3587 = vrot.slane %v3586, 2
    %v3588 = vadd.f32 %v3586, %v3587
    %v3589 = vrot.slane %v3588, 1
    %v3590 = vadd.f32 %v3588, %v3589
    %v3591 = vadd.f32 %v2544, %v2545
    %v3592 = vadd.f32 %v3591, %v2546
    %v3593 = vadd.f32 %v3592, %v2547
    %v3594 = vrot.slane %v3593, 4
    %v3595 = vadd.f32 %v3593, %v3594
    %v3596 = vrot.slane %v3595, 2
    %v3597 = vadd.f32 %v3595, %v3596
    %v3598 = vrot.slane %v3597, 1
    %v3599 = vadd.f32 %v3597, %v3598
    %v3600 = vadd.f32 %v2548, %v2549
    %v3601 = vadd.f32 %v3600, %v2550
    %v3602 = vadd.f32 %v3601, %v2551
    %v3603 = vrot.slane %v3602, 4
    %v3604 = vadd.f32 %v3602, %v3603
    %v3605 = vrot.slane %v3604, 2
    %v3606 = vadd.f32 %v3604, %v3605
    %v3607 = vrot.slane %v3606, 1
    %v3608 = vadd.f32 %v3606, %v3607
    %v3609 = vadd.f32 %v2552, %v2553
    %v3610 = vadd.f32 %v3609, %v2554
    %v3611 = vadd.f32 %v3610, %v2555
    %v3612 = vrot.slane %v3611, 4
    %v3613 = vadd.f32 %v3611, %v3612
    %v3614 = vrot.slane %v3613, 2
    %v3615 = vadd.f32 %v3613, %v3614
    %v3616 = vrot.slane %v3615, 1
    %v3617 = vadd.f32 %v3615, %v3616
    %v3618 = vadd.f32 %v2556, %v2557
    %v3619 = vadd.f32 %v3618, %v2558
    %v3620 = vadd.f32 %v3619, %v2559
    %v3621 = vrot.slane %v3620, 4
    %v3622 = vadd.f32 %v3620, %v3621
    %v3623 = vrot.slane %v3622, 2
    %v3624 = vadd.f32 %v3622, %v3623
    %v3625 = vrot.slane %v3624, 1
    %v3626 = vadd.f32 %v3624, %v3625
    %v3627 = vadd.f32 %v2560, %v2561
    %v3628 = vadd.f32 %v3627, %v2562
    %v3629 = vadd.f32 %v3628, %v2563
    %v3630 = vrot.slane %v3629, 4
    %v3631 = vadd.f32 %v3629, %v3630
    %v3632 = vrot.slane %v3631, 2
    %v3633 = vadd.f32 %v3631, %v3632
    %v3634 = vrot.slane %v3633, 1
    %v3635 = vadd.f32 %v3633, %v3634
    %v3636 = vadd.f32 %v2564, %v2565
    %v3637 = vadd.f32 %v3636, %v2566
    %v3638 = vadd.f32 %v3637, %v2567
    %v3639 = vrot.slane %v3638, 4
    %v3640 = vadd.f32 %v3638, %v3639
    %v3641 = vrot.slane %v3640, 2
    %v3642 = vadd.f32 %v3640, %v3641
    %v3643 = vrot.slane %v3642, 1
    %v3644 = vadd.f32 %v3642, %v3643
    %v3645 = vadd.f32 %v2568, %v2569
    %v3646 = vadd.f32 %v3645, %v2570
    %v3647 = vadd.f32 %v3646, %v2571
    %v3648 = vrot.slane %v3647, 4
    %v3649 = vadd.f32 %v3647, %v3648
    %v3650 = vrot.slane %v3649, 2
    %v3651 = vadd.f32 %v3649, %v3650
    %v3652 = vrot.slane %v3651, 1
    %v3653 = vadd.f32 %v3651, %v3652
    %v3654 = vadd.f32 %v2572, %v2573
    %v3655 = vadd.f32 %v3654, %v2574
    %v3656 = vadd.f32 %v3655, %v2575
    %v3657 = vrot.slane %v3656, 4
    %v3658 = vadd.f32 %v3656, %v3657
    %v3659 = vrot.slane %v3658, 2
    %v3660 = vadd.f32 %v3658, %v3659
    %v3661 = vrot.slane %v3660, 1
    %v3662 = vadd.f32 %v3660, %v3661
    %v3663 = vadd.f32 %v2576, %v2577
    %v3664 = vadd.f32 %v3663, %v2578
    %v3665 = vadd.f32 %v3664, %v2579
    %v3666 = vrot.slane %v3665, 4
    %v3667 = vadd.f32 %v3665, %v3666
    %v3668 = vrot.slane %v3667, 2
    %v3669 = vadd.f32 %v3667, %v3668
    %v3670 = vrot.slane %v3669, 1
    %v3671 = vadd.f32 %v3669, %v3670
    %v3672 = vadd.f32 %v2580, %v2581
    %v3673 = vadd.f32 %v3672, %v2582
    %v3674 = vadd.f32 %v3673, %v2583
    %v3675 = vrot.slane %v3674, 4
    %v3676 = vadd.f32 %v3674, %v3675
    %v3677 = vrot.slane %v3676, 2
    %v3678 = vadd.f32 %v3676, %v3677
    %v3679 = vrot.slane %v3678, 1
    %v3680 = vadd.f32 %v3678, %v3679
    %v3681 = vadd.f32 %v2584, %v2585
    %v3682 = vadd.f32 %v3681, %v2586
    %v3683 = vadd.f32 %v3682, %v2587
    %v3684 = vrot.slane %v3683, 4
    %v3685 = vadd.f32 %v3683, %v3684
    %v3686 = vrot.slane %v3685, 2
    %v3687 = vadd.f32 %v3685, %v3686
    %v3688 = vrot.slane %v3687, 1
    %v3689 = vadd.f32 %v3687, %v3688
    %v3690 = vadd.f32 %v2588, %v2589
    %v3691 = vadd.f32 %v3690, %v2590
    %v3692 = vadd.f32 %v3691, %v2591
    %v3693 = vrot.slane %v3692, 4
    %v3694 = vadd.f32 %v3692, %v3693
    %v3695 = vrot.slane %v3694, 2
    %v3696 = vadd.f32 %v3694, %v3695
    %v3697 = vrot.slane %v3696, 1
    %v3698 = vadd.f32 %v3696, %v3697
    %v3699 = vadd.f32 %v2592, %v2593
    %v3700 = vadd.f32 %v3699, %v2594
    %v3701 = vadd.f32 %v3700, %v2595
    %v3702 = vrot.slane %v3701, 4
    %v3703 = vadd.f32 %v3701, %v3702
    %v3704 = vrot.slane %v3703, 2
    %v3705 = vadd.f32 %v3703, %v3704
    %v3706 = vrot.slane %v3705, 1
    %v3707 = vadd.f32 %v3705, %v3706
    %v3708 = vadd.f32 %v2596, %v2597
    %v3709 = vadd.f32 %v3708, %v2598
    %v3710 = vadd.f32 %v3709, %v2599
    %v3711 = vrot.slane %v3710, 4
    %v3712 = vadd.f32 %v3710, %v3711
    %v3713 = vrot.slane %v3712, 2
    %v3714 = vadd.f32 %v3712, %v3713
    %v3715 = vrot.slane %v3714, 1
    %v3716 = vadd.f32 %v3714, %v3715
    %v3717 = vadd.f32 %v2600, %v2601
    %v3718 = vadd.f32 %v3717, %v2602
    %v3719 = vadd.f32 %v3718, %v2603
    %v3720 = vrot.slane %v3719, 4
    %v3721 = vadd.f32 %v3719, %v3720
    %v3722 = vrot.slane %v3721, 2
    %v3723 = vadd.f32 %v3721, %v3722
    %v3724 = vrot.slane %v3723, 1
    %v3725 = vadd.f32 %v3723, %v3724
    %v3726 = vadd.f32 %v2604, %v2605
    %v3727 = vadd.f32 %v3726, %v2606
    %v3728 = vadd.f32 %v3727, %v2607
    %v3729 = vrot.slane %v3728, 4
    %v3730 = vadd.f32 %v3728, %v3729
    %v3731 = vrot.slane %v3730, 2
    %v3732 = vadd.f32 %v3730, %v3731
    %v3733 = vrot.slane %v3732, 1
    %v3734 = vadd.f32 %v3732, %v3733
    %v3735 = vadd.f32 %v2608, %v2609
    %v3736 = vadd.f32 %v3735, %v2610
    %v3737 = vadd.f32 %v3736, %v2611
    %v3738 = vrot.slane %v3737, 4
    %v3739 = vadd.f32 %v3737, %v3738
    %v3740 = vrot.slane %v3739, 2
    %v3741 = vadd.f32 %v3739, %v3740
    %v3742 = vrot.slane %v3741, 1
    %v3743 = vadd.f32 %v3741, %v3742
    %v3744 = vadd.f32 %v2612, %v2613
    %v3745 = vadd.f32 %v3744, %v2614
    %v3746 = vadd.f32 %v3745, %v2615
    %v3747 = vrot.slane %v3746, 4
    %v3748 = vadd.f32 %v3746, %v3747
    %v3749 = vrot.slane %v3748, 2
    %v3750 = vadd.f32 %v3748, %v3749
    %v3751 = vrot.slane %v3750, 1
    %v3752 = vadd.f32 %v3750, %v3751
    %v3753 = vadd.f32 %v2616, %v2617
    %v3754 = vadd.f32 %v3753, %v2618
    %v3755 = vadd.f32 %v3754, %v2619
    %v3756 = vrot.slane %v3755, 4
    %v3757 = vadd.f32 %v3755, %v3756
    %v3758 = vrot.slane %v3757, 2
    %v3759 = vadd.f32 %v3757, %v3758
    %v3760 = vrot.slane %v3759, 1
    %v3761 = vadd.f32 %v3759, %v3760
    %v3762 = vadd.f32 %v2620, %v2621
    %v3763 = vadd.f32 %v3762, %v2622
    %v3764 = vadd.f32 %v3763, %v2623
    %v3765 = vrot.slane %v3764, 4
    %v3766 = vadd.f32 %v3764, %v3765
    %v3767 = vrot.slane %v3766, 2
    %v3768 = vadd.f32 %v3766, %v3767
    %v3769 = vrot.slane %v3768, 1
    %v3770 = vadd.f32 %v3768, %v3769
    %v3771 = vadd.f32 %v2624, %v2625
    %v3772 = vadd.f32 %v3771, %v2626
    %v3773 = vadd.f32 %v3772, %v2627
    %v3774 = vrot.slane %v3773, 4
    %v3775 = vadd.f32 %v3773, %v3774
    %v3776 = vrot.slane %v3775, 2
    %v3777 = vadd.f32 %v3775, %v3776
    %v3778 = vrot.slane %v3777, 1
    %v3779 = vadd.f32 %v3777, %v3778
    %v3780 = vpack.c.bf16 %v2636, %v2636
    %v3781 = vpack.c.bf16 %v2645, %v2645
    %v3782 = vpack.c.bf16 %v2654, %v2654
    %v3783 = vpack.c.bf16 %v2663, %v2663
    %v3784 = vpack.c.bf16 %v2672, %v2672
    %v3785 = vpack.c.bf16 %v2681, %v2681
    %v3786 = vpack.c.bf16 %v2690, %v2690
    %v3787 = vpack.c.bf16 %v2699, %v2699
    %v3788 = vpack.c.bf16 %v2708, %v2708
    %v3789 = vpack.c.bf16 %v2717, %v2717
    %v3790 = vpack.c.bf16 %v2726, %v2726
    %v3791 = vpack.c.bf16 %v2735, %v2735
    %v3792 = vpack.c.bf16 %v2744, %v2744
    %v3793 = vpack.c.bf16 %v2753, %v2753
    %v3794 = vpack.c.bf16 %v2762, %v2762
    %v3795 = vpack.c.bf16 %v2771, %v2771
    %v3796 = vpack.c.bf16 %v2780, %v2780
    %v3797 = vpack.c.bf16 %v2789, %v2789
    %v3798 = vpack.c.bf16 %v2798, %v2798
    %v3799 = vpack.c.bf16 %v2807, %v2807
    %v3800 = vpack.c.bf16 %v2816, %v2816
    %v3801 = vpack.c.bf16 %v2825, %v2825
    %v3802 = vpack.c.bf16 %v2834, %v2834
    %v3803 = vpack.c.bf16 %v2843, %v2843
    %v3804 = vpack.c.bf16 %v2852, %v2852
    %v3805 = vpack.c.bf16 %v2861, %v2861
    %v3806 = vpack.c.bf16 %v2870, %v2870
    %v3807 = vpack.c.bf16 %v2879, %v2879
    %v3808 = vpack.c.bf16 %v2888, %v2888
    %v3809 = vpack.c.bf16 %v2897, %v2897
    %v3810 = vpack.c.bf16 %v2906, %v2906
    %v3811 = vpack.c.bf16 %v2915, %v2915
    %v3812 = vpack.c.bf16 %v2924, %v2924
    %v3813 = vpack.c.bf16 %v2933, %v2933
    %v3814 = vpack.c.bf16 %v2942, %v2942
    %v3815 = vpack.c.bf16 %v2951, %v2951
    %v3816 = vpack.c.bf16 %v2960, %v2960
    %v3817 = vpack.c.bf16 %v2969, %v2969
    %v3818 = vpack.c.bf16 %v2978, %v2978
    %v3819 = vpack.c.bf16 %v2987, %v2987
    %v3820 = vpack.c.bf16 %v2996, %v2996
    %v3821 = vpack.c.bf16 %v3005, %v3005
    %v3822 = vpack.c.bf16 %v3014, %v3014
    %v3823 = vpack.c.bf16 %v3023, %v3023
    %v3824 = vpack.c.bf16 %v3032, %v3032
    %v3825 = vpack.c.bf16 %v3041, %v3041
    %v3826 = vpack.c.bf16 %v3050, %v3050
    %v3827 = vpack.c.bf16 %v3059, %v3059
    %v3828 = vpack.c.bf16 %v3068, %v3068
    %v3829 = vpack.c.bf16 %v3077, %v3077
    %v3830 = vpack.c.bf16 %v3086, %v3086
    %v3831 = vpack.c.bf16 %v3095, %v3095
    %v3832 = vpack.c.bf16 %v3104, %v3104
    %v3833 = vpack.c.bf16 %v3113, %v3113
    %v3834 = vpack.c.bf16 %v3122, %v3122
    %v3835 = vpack.c.bf16 %v3131, %v3131
    %v3836 = vpack.c.bf16 %v3140, %v3140
    %v3837 = vpack.c.bf16 %v3149, %v3149
    %v3838 = vpack.c.bf16 %v3158, %v3158
    %v3839 = vpack.c.bf16 %v3167, %v3167
    %v3840 = vpack.c.bf16 %v3176, %v3176
    %v3841 = vpack.c.bf16 %v3185, %v3185
    %v3842 = vpack.c.bf16 %v3194, %v3194
    %v3843 = vpack.c.bf16 %v3203, %v3203
    %v3844 = vpack.c.bf16 %v3212, %v3212
    %v3845 = vpack.c.bf16 %v3221, %v3221
    %v3846 = vpack.c.bf16 %v3230, %v3230
    %v3847 = vpack.c.bf16 %v3239, %v3239
    %v3848 = vpack.c.bf16 %v3248, %v3248
    %v3849 = vpack.c.bf16 %v3257, %v3257
    %v3850 = vpack.c.bf16 %v3266, %v3266
    %v3851 = vpack.c.bf16 %v3275, %v3275
    %v3852 = vpack.c.bf16 %v3284, %v3284
    %v3853 = vpack.c.bf16 %v3293, %v3293
    %v3854 = vpack.c.bf16 %v3302, %v3302
    %v3855 = vpack.c.bf16 %v3311, %v3311
    %v3856 = vpack.c.bf16 %v3320, %v3320
    %v3857 = vpack.c.bf16 %v3329, %v3329
    %v3858 = vpack.c.bf16 %v3338, %v3338
    %v3859 = vpack.c.bf16 %v3347, %v3347
    %v3860 = vpack.c.bf16 %v3356, %v3356
    %v3861 = vpack.c.bf16 %v3365, %v3365
    %v3862 = vpack.c.bf16 %v3374, %v3374
    %v3863 = vpack.c.bf16 %v3383, %v3383
    %v3864 = vpack.c.bf16 %v3392, %v3392
    %v3865 = vpack.c.bf16 %v3401, %v3401
    %v3866 = vpack.c.bf16 %v3410, %v3410
    %v3867 = vpack.c.bf16 %v3419, %v3419
    %v3868 = vpack.c.bf16 %v3428, %v3428
    %v3869 = vpack.c.bf16 %v3437, %v3437
    %v3870 = vpack.c.bf16 %v3446, %v3446
    %v3871 = vpack.c.bf16 %v3455, %v3455
    %v3872 = vpack.c.bf16 %v3464, %v3464
    %v3873 = vpack.c.bf16 %v3473, %v3473
    %v3874 = vpack.c.bf16 %v3482, %v3482
    %v3875 = vpack.c.bf16 %v3491, %v3491
    %v3876 = vpack.c.bf16 %v3500, %v3500
    %v3877 = vpack.c.bf16 %v3509, %v3509
    %v3878 = vpack.c.bf16 %v3518, %v3518
    %v3879 = vpack.c.bf16 %v3527, %v3527
    %v3880 = vpack.c.bf16 %v3536, %v3536
    %v3881 = vpack.c.bf16 %v3545, %v3545
    %v3882 = vpack.c.bf16 %v3554, %v3554
    %v3883 = vpack.c.bf16 %v3563, %v3563
    %v3884 = vpack.c.bf16 %v3572, %v3572
    %v3885 = vpack.c.bf16 %v3581, %v3581
    %v3886 = vpack.c.bf16 %v3590, %v3590
    %v3887 = vpack.c.bf16 %v3599, %v3599
    %v3888 = vpack.c.bf16 %v3608, %v3608
    %v3889 = vpack.c.bf16 %v3617, %v3617
    %v3890 = vpack.c.bf16 %v3626, %v3626
    %v3891 = vpack.c.bf16 %v3635, %v3635
    %v3892 = vpack.c.bf16 %v3644, %v3644
    %v3893 = vpack.c.bf16 %v3653, %v3653
    %v3894 = vpack.c.bf16 %v3662, %v3662
    %v3895 = vpack.c.bf16 %v3671, %v3671
    %v3896 = vpack.c.bf16 %v3680, %v3680
    %v3897 = vpack.c.bf16 %v3689, %v3689
    %v3898 = vpack.c.bf16 %v3698, %v3698
    %v3899 = vpack.c.bf16 %v3707, %v3707
    %v3900 = vpack.c.bf16 %v3716, %v3716
    %v3901 = vpack.c.bf16 %v3725, %v3725
    %v3902 = vpack.c.bf16 %v3734, %v3734
    %v3903 = vpack.c.bf16 %v3743, %v3743
    %v3904 = vpack.c.bf16 %v3752, %v3752
    %v3905 = vpack.c.bf16 %v3761, %v3761
    %v3906 = vpack.c.bf16 %v3770, %v3770
    %v3907 = vpack.c.bf16 %v3779, %v3779
    %v4036 = vunpack.c.l.b16 %v3780
    %v4037 = vunpack.c.l.b16 %v3781
    %v4038 = vunpack.c.l.b16 %v3782
    %v4039 = vunpack.c.l.b16 %v3783
    %v4040 = vunpack.c.l.b16 %v3784
    %v4041 = vunpack.c.l.b16 %v3785
    %v4042 = vunpack.c.l.b16 %v3786
    %v4043 = vunpack.c.l.b16 %v3787
    %v4044 = vunpack.c.l.b16 %v3788
    %v4045 = vunpack.c.l.b16 %v3789
    %v4046 = vunpack.c.l.b16 %v3790
    %v4047 = vunpack.c.l.b16 %v3791
    %v4048 = vunpack.c.l.b16 %v3792
    %v4049 = vunpack.c.l.b16 %v3793
    %v4050 = vunpack.c.l.b16 %v3794
    %v4051 = vunpack.c.l.b16 %v3795
    %v4052 = vunpack.c.l.b16 %v3796
    %v4053 = vunpack.c.l.b16 %v3797
    %v4054 = vunpack.c.l.b16 %v3798
    %v4055 = vunpack.c.l.b16 %v3799
    %v4056 = vunpack.c.l.b16 %v3800
    %v4057 = vunpack.c.l.b16 %v3801
    %v4058 = vunpack.c.l.b16 %v3802
    %v4059 = vunpack.c.l.b16 %v3803
    %v4060 = vunpack.c.l.b16 %v3804
    %v4061 = vunpack.c.l.b16 %v3805
    %v4062 = vunpack.c.l.b16 %v3806
    %v4063 = vunpack.c.l.b16 %v3807
    %v4064 = vunpack.c.l.b16 %v3808
    %v4065 = vunpack.c.l.b16 %v3809
    %v4066 = vunpack.c.l.b16 %v3810
    %v4067 = vunpack.c.l.b16 %v3811
    %v4068 = vunpack.c.l.b16 %v3812
    %v4069 = vunpack.c.l.b16 %v3813
    %v4070 = vunpack.c.l.b16 %v3814
    %v4071 = vunpack.c.l.b16 %v3815
    %v4072 = vunpack.c.l.b16 %v3816
    %v4073 = vunpack.c.l.b16 %v3817
    %v4074 = vunpack.c.l.b16 %v3818
    %v4075 = vunpack.c.l.b16 %v3819
    %v4076 = vunpack.c.l.b16 %v3820
    %v4077 = vunpack.c.l.b16 %v3821
    %v4078 = vunpack.c.l.b16 %v3822
    %v4079 = vunpack.c.l.b16 %v3823
    %v4080 = vunpack.c.l.b16 %v3824
    %v4081 = vunpack.c.l.b16 %v3825
    %v4082 = vunpack.c.l.b16 %v3826
    %v4083 = vunpack.c.l.b16 %v3827
    %v4084 = vunpack.c.l.b16 %v3828
    %v4085 = vunpack.c.l.b16 %v3829
    %v4086 = vunpack.c.l.b16 %v3830
    %v4087 = vunpack.c.l.b16 %v3831
    %v4088 = vunpack.c.l.b16 %v3832
    %v4089 = vunpack.c.l.b16 %v3833
    %v4090 = vunpack.c.l.b16 %v3834
    %v4091 = vunpack.c.l.b16 %v3835
    %v4092 = vunpack.c.l.b16 %v3836
    %v4093 = vunpack.c.l.b16 %v3837
    %v4094 = vunpack.c.l.b16 %v3838
    %v4095 = vunpack.c.l.b16 %v3839
    %v4096 = vunpack.c.l.b16 %v3840
    %v4097 = vunpack.c.l.b16 %v3841
    %v4098 = vunpack.c.l.b16 %v3842
    %v4099 = vunpack.c.l.b16 %v3843
    %v4100 = vunpack.c.l.b16 %v3844
    %v4101 = vunpack.c.l.b16 %v3845
    %v4102 = vunpack.c.l.b16 %v3846
    %v4103 = vunpack.c.l.b16 %v3847
    %v4104 = vunpack.c.l.b16 %v3848
    %v4105 = vunpack.c.l.b16 %v3849
    %v4106 = vunpack.c.l.b16 %v3850
    %v4107 = vunpack.c.l.b16 %v3851
    %v4108 = vunpack.c.l.b16 %v3852
    %v4109 = vunpack.c.l.b16 %v3853
    %v4110 = vunpack.c.l.b16 %v3854
    %v4111 = vunpack.c.l.b16 %v3855
    %v4112 = vunpack.c.l.b16 %v3856
    %v4113 = vunpack.c.l.b16 %v3857
    %v4114 = vunpack.c.l.b16 %v3858
    %v4115 = vunpack.c.l.b16 %v3859
    %v4116 = vunpack.c.l.b16 %v3860
    %v4117 = vunpack.c.l.b16 %v3861
    %v4118 = vunpack.c.l.b16 %v3862
    %v4119 = vunpack.c.l.b16 %v3863
    %v4120 = vunpack.c.l.b16 %v3864
    %v4121 = vunpack.c.l.b16 %v3865
    %v4122 = vunpack.c.l.b16 %v3866
    %v4123 = vunpack.c.l.b16 %v3867
    %v4124 = vunpack.c.l.b16 %v3868
    %v4125 = vunpack.c.l.b16 %v3869
    %v4126 = vunpack.c.l.b16 %v3870
    %v4127 = vunpack.c.l.b16 %v3871
    %v4128 = vunpack.c.l.b16 %v3872
    %v4129 = vunpack.c.l.b16 %v3873
    %v4130 = vunpack.c.l.b16 %v3874
    %v4131 = vunpack.c.l.b16 %v3875
    %v4132 = vunpack.c.l.b16 %v3876
    %v4133 = vunpack.c.l.b16 %v3877
    %v4134 = vunpack.c.l.b16 %v3878
    %v4135 = vunpack.c.l.b16 %v3879
    %v4136 = vunpack.c.l.b16 %v3880
    %v4137 = vunpack.c.l.b16 %v3881
    %v4138 = vunpack.c.l.b16 %v3882
    %v4139 = vunpack.c.l.b16 %v3883
    %v4140 = vunpack.c.l.b16 %v3884
    %v4141 = vunpack.c.l.b16 %v3885
    %v4142 = vunpack.c.l.b16 %v3886
    %v4143 = vunpack.c.l.b16 %v3887
    %v4144 = vunpack.c.l.b16 %v3888
    %v4145 = vunpack.c.l.b16 %v3889
    %v4146 = vunpack.c.l.b16 %v3890
    %v4147 = vunpack.c.l.b16 %v3891
    %v4148 = vunpack.c.l.b16 %v3892
    %v4149 = vunpack.c.l.b16 %v3893
    %v4150 = vunpack.c.l.b16 %v3894
    %v4151 = vunpack.c.l.b16 %v3895
    %v4152 = vunpack.c.l.b16 %v3896
    %v4153 = vunpack.c.l.b16 %v3897
    %v4154 = vunpack.c.l.b16 %v3898
    %v4155 = vunpack.c.l.b16 %v3899
    %v4156 = vunpack.c.l.b16 %v3900
    %v4157 = vunpack.c.l.b16 %v3901
    %v4158 = vunpack.c.l.b16 %v3902
    %v4159 = vunpack.c.l.b16 %v3903
    %v4160 = vunpack.c.l.b16 %v3904
    %v4161 = vunpack.c.l.b16 %v3905
    %v4162 = vunpack.c.l.b16 %v3906
    %v4163 = vunpack.c.l.b16 %v3907
    %v4164 = vsel %vm583, %v4037, %v4036
    %v4165 = vsel %vm585, %v4038, %v4164
    %v4166 = vsel %vm587, %v4039, %v4165
    %v4167 = vsel %vm589, %v4040, %v4166
    %v4168 = vsel %vm591, %v4041, %v4167
    %v4169 = vsel %vm593, %v4042, %v4168
    %v4170 = vsel %vm595, %v4043, %v4169
    %v4171 = vsel %vm583, %v4045, %v4044
    %v4172 = vsel %vm585, %v4046, %v4171
    %v4173 = vsel %vm587, %v4047, %v4172
    %v4174 = vsel %vm589, %v4048, %v4173
    %v4175 = vsel %vm591, %v4049, %v4174
    %v4176 = vsel %vm593, %v4050, %v4175
    %v4177 = vsel %vm595, %v4051, %v4176
    %v4178 = vsel %vm583, %v4053, %v4052
    %v4179 = vsel %vm585, %v4054, %v4178
    %v4180 = vsel %vm587, %v4055, %v4179
    %v4181 = vsel %vm589, %v4056, %v4180
    %v4182 = vsel %vm591, %v4057, %v4181
    %v4183 = vsel %vm593, %v4058, %v4182
    %v4184 = vsel %vm595, %v4059, %v4183
    %v4185 = vsel %vm583, %v4061, %v4060
    %v4186 = vsel %vm585, %v4062, %v4185
    %v4187 = vsel %vm587, %v4063, %v4186
    %v4188 = vsel %vm589, %v4064, %v4187
    %v4189 = vsel %vm591, %v4065, %v4188
    %v4190 = vsel %vm593, %v4066, %v4189
    %v4191 = vsel %vm595, %v4067, %v4190
    %v4192 = vsel %vm583, %v4069, %v4068
    %v4193 = vsel %vm585, %v4070, %v4192
    %v4194 = vsel %vm587, %v4071, %v4193
    %v4195 = vsel %vm589, %v4072, %v4194
    %v4196 = vsel %vm591, %v4073, %v4195
    %v4197 = vsel %vm593, %v4074, %v4196
    %v4198 = vsel %vm595, %v4075, %v4197
    %v4199 = vsel %vm583, %v4077, %v4076
    %v4200 = vsel %vm585, %v4078, %v4199
    %v4201 = vsel %vm587, %v4079, %v4200
    %v4202 = vsel %vm589, %v4080, %v4201
    %v4203 = vsel %vm591, %v4081, %v4202
    %v4204 = vsel %vm593, %v4082, %v4203
    %v4205 = vsel %vm595, %v4083, %v4204
    %v4206 = vsel %vm583, %v4085, %v4084
    %v4207 = vsel %vm585, %v4086, %v4206
    %v4208 = vsel %vm587, %v4087, %v4207
    %v4209 = vsel %vm589, %v4088, %v4208
    %v4210 = vsel %vm591, %v4089, %v4209
    %v4211 = vsel %vm593, %v4090, %v4210
    %v4212 = vsel %vm595, %v4091, %v4211
    %v4213 = vsel %vm583, %v4093, %v4092
    %v4214 = vsel %vm585, %v4094, %v4213
    %v4215 = vsel %vm587, %v4095, %v4214
    %v4216 = vsel %vm589, %v4096, %v4215
    %v4217 = vsel %vm591, %v4097, %v4216
    %v4218 = vsel %vm593, %v4098, %v4217
    %v4219 = vsel %vm595, %v4099, %v4218
    %v4220 = vsel %vm583, %v4101, %v4100
    %v4221 = vsel %vm585, %v4102, %v4220
    %v4222 = vsel %vm587, %v4103, %v4221
    %v4223 = vsel %vm589, %v4104, %v4222
    %v4224 = vsel %vm591, %v4105, %v4223
    %v4225 = vsel %vm593, %v4106, %v4224
    %v4226 = vsel %vm595, %v4107, %v4225
    %v4227 = vsel %vm583, %v4109, %v4108
    %v4228 = vsel %vm585, %v4110, %v4227
    %v4229 = vsel %vm587, %v4111, %v4228
    %v4230 = vsel %vm589, %v4112, %v4229
    %v4231 = vsel %vm591, %v4113, %v4230
    %v4232 = vsel %vm593, %v4114, %v4231
    %v4233 = vsel %vm595, %v4115, %v4232
    %v4234 = vsel %vm583, %v4117, %v4116
    %v4235 = vsel %vm585, %v4118, %v4234
    %v4236 = vsel %vm587, %v4119, %v4235
    %v4237 = vsel %vm589, %v4120, %v4236
    %v4238 = vsel %vm591, %v4121, %v4237
    %v4239 = vsel %vm593, %v4122, %v4238
    %v4240 = vsel %vm595, %v4123, %v4239
    %v4241 = vsel %vm583, %v4125, %v4124
    %v4242 = vsel %vm585, %v4126, %v4241
    %v4243 = vsel %vm587, %v4127, %v4242
    %v4244 = vsel %vm589, %v4128, %v4243
    %v4245 = vsel %vm591, %v4129, %v4244
    %v4246 = vsel %vm593, %v4130, %v4245
    %v4247 = vsel %vm595, %v4131, %v4246
    %v4248 = vsel %vm583, %v4133, %v4132
    %v4249 = vsel %vm585, %v4134, %v4248
    %v4250 = vsel %vm587, %v4135, %v4249
    %v4251 = vsel %vm589, %v4136, %v4250
    %v4252 = vsel %vm591, %v4137, %v4251
    %v4253 = vsel %vm593, %v4138, %v4252
    %v4254 = vsel %vm595, %v4139, %v4253
    %v4255 = vsel %vm583, %v4141, %v4140
    %v4256 = vsel %vm585, %v4142, %v4255
    %v4257 = vsel %vm587, %v4143, %v4256
    %v4258 = vsel %vm589, %v4144, %v4257
    %v4259 = vsel %vm591, %v4145, %v4258
    %v4260 = vsel %vm593, %v4146, %v4259
    %v4261 = vsel %vm595, %v4147, %v4260
    %v4262 = vsel %vm583, %v4149, %v4148
    %v4263 = vsel %vm585, %v4150, %v4262
    %v4264 = vsel %vm587, %v4151, %v4263
    %v4265 = vsel %vm589, %v4152, %v4264
    %v4266 = vsel %vm591, %v4153, %v4265
    %v4267 = vsel %vm593, %v4154, %v4266
    %v4268 = vsel %vm595, %v4155, %v4267
    %v4269 = vsel %vm583, %v4157, %v4156
    %v4270 = vsel %vm585, %v4158, %v4269
    %v4271 = vsel %vm587, %v4159, %v4270
    %v4272 = vsel %vm589, %v4160, %v4271
    %v4273 = vsel %vm591, %v4161, %v4272
    %v4274 = vsel %vm593, %v4162, %v4273
    %v4275 = vsel %vm595, %v4163, %v4274
    %v4276 = vpack.c.b16 %v4177, %v4170
    %v4277 = vpack.c.b16 %v4191, %v4184
    %v4278 = vpack.c.b16 %v4205, %v4198
    %v4279 = vpack.c.b16 %v4219, %v4212
    %v4280 = vpack.c.b16 %v4233, %v4226
    %v4281 = vpack.c.b16 %v4247, %v4240
    %v4282 = vpack.c.b16 %v4261, %v4254
    %v4283 = vpack.c.b16 %v4275, %v4268
    %4292 = vmatprep.subr.bf16.mxu0 0
    %4293 = vmatpush1.bf16.msra.mxu0 %v654
    %4294 = vmatprep.subr.bf16.mxu0 0
    %4295 = vmatpush1.bf16.msra.mxu0 %v655
    %4296 = vmatprep.subr.bf16.mxu0 0
    %4297 = vmatpush1.bf16.msra.mxu0 %v656
    %4298 = vmatprep.subr.bf16.mxu0 0
    %4299 = vmatpush1.bf16.msra.mxu0 %v657
    %4300 = vmatprep.subr.bf16.mxu0 0
    %4301 = vmatpush1.bf16.msra.mxu0 %v658
    %4302 = vmatprep.subr.bf16.mxu0 0
    %4303 = vmatpush1.bf16.msra.mxu0 %v659
    %4304 = vmatprep.subr.bf16.mxu0 0
    %4305 = vmatpush1.bf16.msra.mxu0 %v660
    %4306 = vmatprep.subr.bf16.mxu0 0
    %4307 = vmatpush1.bf16.msra.mxu0 %v661
    %4308 = vmatprep.subr.bf16.mxu0 0
    %4309 = vmatpush1.bf16.msra.mxu0 0
    %4310 = vmatprep.subr.bf16.mxu0 0
    %4311 = vmatpush1.bf16.msra.mxu0 0
    %4312 = vmatprep.subr.bf16.mxu0 0
    %4313 = vmatpush1.bf16.msra.mxu0 0
    %4314 = vmatprep.subr.bf16.mxu0 0
    %4315 = vmatpush1.bf16.msra.mxu0 0
    %4316 = vmatprep.subr.bf16.mxu0 0
    %4317 = vmatpush1.bf16.msra.mxu0 0
    %4318 = vmatprep.subr.bf16.mxu0 0
    %4319 = vmatpush1.bf16.msra.mxu0 0
    %4320 = vmatprep.subr.bf16.mxu0 0
    %4321 = vmatpush1.bf16.msra.mxu0 0
    %4322 = vmatprep.subr.bf16.mxu0 0
    %4323 = vmatpush1.bf16.msra.mxu0 0
    %4324 = vmatprep.mubr.bf16.mxu0 0
    %4325 = vmatmul.mubr.bf16.gmra.mrb[0].mxu0 %v4276
    %v4326 = vpop.f32.mrb[0].mxu0
    %v4327 = vadd.f32 0.0, %v4326
    %v4328 = vpop.f32.mrb[0].mxu0
    %v4329 = vpop.f32.mrb[0].mxu0
    %v4330 = vadd.f32 0.0, %v4329
    %v4331 = vpop.f32.mrb[0].mxu0
    %4332 = vmatprep.mubr.bf16.mxu0 0
    %4333 = vmatmul.mubr.bf16.gmra.mrb[0].mxu0 %v4277
    %v4334 = vpop.f32.mrb[0].mxu0
    %v4335 = vadd.f32 0.0, %v4334
    %v4336 = vpop.f32.mrb[0].mxu0
    %v4337 = vpop.f32.mrb[0].mxu0
    %v4338 = vadd.f32 0.0, %v4337
    %v4339 = vpop.f32.mrb[0].mxu0
    %4340 = vmatprep.mubr.bf16.mxu0 0
    %4341 = vmatmul.mubr.bf16.gmra.mrb[0].mxu0 %v4278
    %v4342 = vpop.f32.mrb[0].mxu0
    %v4343 = vadd.f32 0.0, %v4342
    %v4344 = vpop.f32.mrb[0].mxu0
    %v4345 = vpop.f32.mrb[0].mxu0
    %v4346 = vadd.f32 0.0, %v4345
    %v4347 = vpop.f32.mrb[0].mxu0
    %4348 = vmatprep.mubr.bf16.mxu0 0
    %4349 = vmatmul.mubr.bf16.gmra.mrb[0].mxu0 %v4279
    %v4350 = vpop.f32.mrb[0].mxu0
    %v4351 = vadd.f32 0.0, %v4350
    %v4352 = vpop.f32.mrb[0].mxu0
    %v4353 = vpop.f32.mrb[0].mxu0
    %v4354 = vadd.f32 0.0, %v4353
    %v4355 = vpop.f32.mrb[0].mxu0
    %4356 = vmatprep.mubr.bf16.mxu0 0
    %4357 = vmatmul.mubr.bf16.gmra.mrb[0].mxu0 %v4280
    %v4358 = vpop.f32.mrb[0].mxu0
    %v4359 = vadd.f32 0.0, %v4358
    %v4360 = vpop.f32.mrb[0].mxu0
    %v4361 = vpop.f32.mrb[0].mxu0
    %v4362 = vadd.f32 0.0, %v4361
    %v4363 = vpop.f32.mrb[0].mxu0
    %4364 = vmatprep.mubr.bf16.mxu0 0
    %4365 = vmatmul.mubr.bf16.gmra.mrb[0].mxu0 %v4281
    %v4366 = vpop.f32.mrb[0].mxu0
    %v4367 = vadd.f32 0.0, %v4366
    %v4368 = vpop.f32.mrb[0].mxu0
    %v4369 = vpop.f32.mrb[0].mxu0
    %v4370 = vadd.f32 0.0, %v4369
    %v4371 = vpop.f32.mrb[0].mxu0
    %4372 = vmatprep.mubr.bf16.mxu0 0
    %4373 = vmatmul.mubr.bf16.gmra.mrb[0].mxu0 %v4282
    %v4374 = vpop.f32.mrb[0].mxu0
    %v4375 = vadd.f32 0.0, %v4374
    %v4376 = vpop.f32.mrb[0].mxu0
    %v4377 = vpop.f32.mrb[0].mxu0
    %v4378 = vadd.f32 0.0, %v4377
    %v4379 = vpop.f32.mrb[0].mxu0
    %4380 = vmatprep.mubr.bf16.mxu0 0
    %4381 = vmatmul.mubr.bf16.gmra.mrb[0].mxu0 %v4283
    %v4382 = vpop.f32.mrb[0].mxu0
    %v4383 = vadd.f32 0.0, %v4382
    %v4384 = vpop.f32.mrb[0].mxu0
    %v4385 = vpop.f32.mrb[0].mxu0
    %v4386 = vadd.f32 0.0, %v4385
    %v4387 = vpop.f32.mrb[0].mxu0
    %4388 = vdwg.mxu0
    %v4389 = vmax.f32 %v4327, 0.0
    %v4390 = vmax.f32 %v4330, 0.0
    %v4391 = vmax.f32 %v4335, 0.0
    %v4392 = vmax.f32 %v4338, 0.0
    %v4393 = vmax.f32 %v4343, 0.0
    %v4394 = vmax.f32 %v4346, 0.0
    %v4395 = vmax.f32 %v4351, 0.0
    %v4396 = vmax.f32 %v4354, 0.0
    %v4397 = vmax.f32 %v4359, 0.0
    %v4398 = vmax.f32 %v4362, 0.0
    %v4399 = vmax.f32 %v4367, 0.0
    %v4400 = vmax.f32 %v4370, 0.0
    %v4401 = vmax.f32 %v4375, 0.0
    %v4402 = vmax.f32 %v4378, 0.0
    %v4403 = vmax.f32 %v4383, 0.0
    %v4404 = vmax.f32 %v4386, 0.0
    %v4405 = vpack.c.bf16 %v4390, %v4389
    %v4406 = vpack.c.bf16 %v4392, %v4391
    %v4407 = vpack.c.bf16 %v4394, %v4393
    %v4408 = vpack.c.bf16 %v4396, %v4395
    %v4409 = vpack.c.bf16 %v4398, %v4397
    %v4410 = vpack.c.bf16 %v4400, %v4399
    %v4411 = vpack.c.bf16 %v4402, %v4401
    %v4412 = vpack.c.bf16 %v4404, %v4403
    %4413 = vmatprep.subr.bf16.mxu0 0
    %4414 = vmatpush1.bf16.msra.mxu0 %v757
    %4415 = vmatprep.subr.bf16.mxu0 0
    %4416 = vmatpush1.bf16.msra.mxu0 %v758
    %4417 = vmatprep.subr.bf16.mxu0 0
    %4418 = vmatpush1.bf16.msra.mxu0 %v759
    %4419 = vmatprep.subr.bf16.mxu0 0
    %4420 = vmatpush1.bf16.msra.mxu0 %v760
    %4421 = vmatprep.subr.bf16.mxu0 0
    %4422 = vmatpush1.bf16.msra.mxu0 %v761
    %4423 = vmatprep.subr.bf16.mxu0 0
    %4424 = vmatpush1.bf16.msra.mxu0 %v762
    %4425 = vmatprep.subr.bf16.mxu0 0
    %4426 = vmatpush1.bf16.msra.mxu0 %v763
    %4427 = vmatprep.subr.bf16.mxu0 0
    %4428 = vmatpush1.bf16.msra.mxu0 %v764
    %4429 = vmatprep.subr.bf16.mxu0 0
    %4430 = vmatpush1.bf16.msra.mxu0 0
    %4431 = vmatprep.subr.bf16.mxu0 0
    %4432 = vmatpush1.bf16.msra.mxu0 0
    %4433 = vmatprep.subr.bf16.mxu0 0
    %4434 = vmatpush1.bf16.msra.mxu0 0
    %4435 = vmatprep.subr.bf16.mxu0 0
    %4436 = vmatpush1.bf16.msra.mxu0 0
    %4437 = vmatprep.subr.bf16.mxu0 0
    %4438 = vmatpush1.bf16.msra.mxu0 0
    %4439 = vmatprep.subr.bf16.mxu0 0
    %4440 = vmatpush1.bf16.msra.mxu0 0
    %4441 = vmatprep.subr.bf16.mxu0 0
    %4442 = vmatpush1.bf16.msra.mxu0 0
    %4443 = vmatprep.subr.bf16.mxu0 0
    %4444 = vmatpush1.bf16.msra.mxu0 0
    %4445 = vmatprep.mubr.bf16.mxu0 0
    %4446 = vmatmul.mubr.bf16.gmra.mrb[0].mxu0 %v4405
    %v4447 = vpop.f32.mrb[0].mxu0
    %v4448 = vadd.f32 0.0, %v4447
    %v4449 = vpop.f32.mrb[0].mxu0
    %v4450 = vpop.f32.mrb[0].mxu0
    %v4451 = vadd.f32 0.0, %v4450
    %v4452 = vpop.f32.mrb[0].mxu0
    %4453 = vmatprep.mubr.bf16.mxu0 0
    %4454 = vmatmul.mubr.bf16.gmra.mrb[0].mxu0 %v4406
    %v4455 = vpop.f32.mrb[0].mxu0
    %v4456 = vadd.f32 0.0, %v4455
    %v4457 = vpop.f32.mrb[0].mxu0
    %v4458 = vpop.f32.mrb[0].mxu0
    %v4459 = vadd.f32 0.0, %v4458
    %v4460 = vpop.f32.mrb[0].mxu0
    %4461 = vmatprep.mubr.bf16.mxu0 0
    %4462 = vmatmul.mubr.bf16.gmra.mrb[0].mxu0 %v4407
    %v4463 = vpop.f32.mrb[0].mxu0
    %v4464 = vadd.f32 0.0, %v4463
    %v4465 = vpop.f32.mrb[0].mxu0
    %v4466 = vpop.f32.mrb[0].mxu0
    %v4467 = vadd.f32 0.0, %v4466
    %v4468 = vpop.f32.mrb[0].mxu0
    %4469 = vmatprep.mubr.bf16.mxu0 0
    %4470 = vmatmul.mubr.bf16.gmra.mrb[0].mxu0 %v4408
    %v4471 = vpop.f32.mrb[0].mxu0
    %v4472 = vadd.f32 0.0, %v4471
    %v4473 = vpop.f32.mrb[0].mxu0
    %v4474 = vpop.f32.mrb[0].mxu0
    %v4475 = vadd.f32 0.0, %v4474
    %v4476 = vpop.f32.mrb[0].mxu0
    %4477 = vmatprep.mubr.bf16.mxu0 0
    %4478 = vmatmul.mubr.bf16.gmra.mrb[0].mxu0 %v4409
    %v4479 = vpop.f32.mrb[0].mxu0
    %v4480 = vadd.f32 0.0, %v4479
    %v4481 = vpop.f32.mrb[0].mxu0
    %v4482 = vpop.f32.mrb[0].mxu0
    %v4483 = vadd.f32 0.0, %v4482
    %v4484 = vpop.f32.mrb[0].mxu0
    %4485 = vmatprep.mubr.bf16.mxu0 0
    %4486 = vmatmul.mubr.bf16.gmra.mrb[0].mxu0 %v4410
    %v4487 = vpop.f32.mrb[0].mxu0
    %v4488 = vadd.f32 0.0, %v4487
    %v4489 = vpop.f32.mrb[0].mxu0
    %v4490 = vpop.f32.mrb[0].mxu0
    %v4491 = vadd.f32 0.0, %v4490
    %v4492 = vpop.f32.mrb[0].mxu0
    %4493 = vmatprep.mubr.bf16.mxu0 0
    %4494 = vmatmul.mubr.bf16.gmra.mrb[0].mxu0 %v4411
    %v4495 = vpop.f32.mrb[0].mxu0
    %v4496 = vadd.f32 0.0, %v4495
    %v4497 = vpop.f32.mrb[0].mxu0
    %v4498 = vpop.f32.mrb[0].mxu0
    %v4499 = vadd.f32 0.0, %v4498
    %v4500 = vpop.f32.mrb[0].mxu0
    %4501 = vmatprep.mubr.bf16.mxu0 0
    %4502 = vmatmul.mubr.bf16.gmra.mrb[0].mxu0 %v4412
    %v4503 = vpop.f32.mrb[0].mxu0
    %v4504 = vadd.f32 0.0, %v4503
    %v4505 = vpop.f32.mrb[0].mxu0
    %v4506 = vpop.f32.mrb[0].mxu0
    %v4507 = vadd.f32 0.0, %v4506
    %v4508 = vpop.f32.mrb[0].mxu0
    %4509 = vdwg.mxu0
    %v4510 = vld [vmem:[%s6] sm:$0x1]
    %v4512 = vlaneseq
    %v4513 = vshrl.u32 %v4512, 7
    %v4514 = vsub.s32 0, %v4513
    %v4515 = vrot.slane %v4510, %v4514
    %v4517 = vmul.f32 %v4448, %v4515
    %v4518 = vmul.f32 %v4451, %v4515
    %v4519 = vmul.f32 %v4456, %v4515
    %v4520 = vmul.f32 %v4459, %v4515
    %v4521 = vmul.f32 %v4464, %v4515
    %v4522 = vmul.f32 %v4467, %v4515
    %v4523 = vmul.f32 %v4472, %v4515
    %v4524 = vmul.f32 %v4475, %v4515
    %v4525 = vmul.f32 %v4480, %v4515
    %v4526 = vmul.f32 %v4483, %v4515
    %v4527 = vmul.f32 %v4488, %v4515
    %v4528 = vmul.f32 %v4491, %v4515
    %v4529 = vmul.f32 %v4496, %v4515
    %v4530 = vmul.f32 %v4499, %v4515
    %v4531 = vmul.f32 %v4504, %v4515
    %v4532 = vmul.f32 %v4507, %v4515
    %4533 = vadd.xlane.f32.xlu0 %v4517
    %v4534 = vpop.xlane.xlu0 %4533
    %4535 = vadd.xlane.f32.xlu0 %v4518
    %v4536 = vpop.xlane.xlu0 %4535
    %4537 = vadd.xlane.f32.xlu0 %v4519
    %v4538 = vpop.xlane.xlu0 %4537
    %4539 = vadd.xlane.f32.xlu0 %v4520
    %v4540 = vpop.xlane.xlu0 %4539
    %4541 = vadd.xlane.f32.xlu0 %v4521
    %v4542 = vpop.xlane.xlu0 %4541
    %4543 = vadd.xlane.f32.xlu0 %v4522
    %v4544 = vpop.xlane.xlu0 %4543
    %4545 = vadd.xlane.f32.xlu0 %v4523
    %v4546 = vpop.xlane.xlu0 %4545
    %4547 = vadd.xlane.f32.xlu0 %v4524
    %v4548 = vpop.xlane.xlu0 %4547
    %4549 = vadd.xlane.f32.xlu0 %v4525
    %v4550 = vpop.xlane.xlu0 %4549
    %4551 = vadd.xlane.f32.xlu0 %v4526
    %v4552 = vpop.xlane.xlu0 %4551
    %4553 = vadd.xlane.f32.xlu0 %v4527
    %v4554 = vpop.xlane.xlu0 %4553
    %4555 = vadd.xlane.f32.xlu0 %v4528
    %v4556 = vpop.xlane.xlu0 %4555
    %4557 = vadd.xlane.f32.xlu0 %v4529
    %v4558 = vpop.xlane.xlu0 %4557
    %4559 = vadd.xlane.f32.xlu0 %v4530
    %v4560 = vpop.xlane.xlu0 %4559
    %4561 = vadd.xlane.f32.xlu0 %v4531
    %v4562 = vpop.xlane.xlu0 %4561
    %4563 = vadd.xlane.f32.xlu0 %v4532
    %v4564 = vpop.xlane.xlu0 %4563
    %v4565 = vpack.c.bf16 %v4536, %v4534
    %v4566 = vpack.c.bf16 %v4540, %v4538
    %v4567 = vpack.c.bf16 %v4544, %v4542
    %v4568 = vpack.c.bf16 %v4548, %v4546
    %v4569 = vpack.c.bf16 %v4552, %v4550
    %v4570 = vpack.c.bf16 %v4556, %v4554
    %v4571 = vpack.c.bf16 %v4560, %v4558
    %v4572 = vpack.c.bf16 %v4564, %v4562
    %v4573 = vld [vmem:[#allocation13] sm:$0xf]
    %v4574 = vld [vmem:[#allocation13 + $0x4] sm:$0xf]
    %v4575 = vld [vmem:[#allocation13 + $0x8] sm:$0xf]
    %v4576 = vld [vmem:[#allocation13 + $0xc] sm:$0xf]
    %v4577 = vld [vmem:[#allocation13 + $0x10] sm:$0xf]
    %v4578 = vld [vmem:[#allocation13 + $0x14] sm:$0xf]
    %v4579 = vld [vmem:[#allocation13 + $0x18] sm:$0xf]
    %v4580 = vld [vmem:[#allocation13 + $0x1c] sm:$0xf]
    %v4581 = vld [vmem:[%s8] sm:$0x1]
    %v4583 = vlaneseq
    %v4584 = vshrl.u32 %v4583, 7
    %v4585 = vsub.s32 0, %v4584
    %v4586 = vrot.slane %v4581, %v4585
    %v4596 = vunpack.c.l.b16 %v4565
    %v4597 = vunpack.c.h.b16 %v4565
    %v4598 = vunpack.c.l.b16 %v4566
    %v4599 = vunpack.c.h.b16 %v4566
    %v4600 = vunpack.c.l.b16 %v4567
    %v4601 = vunpack.c.h.b16 %v4567
    %v4602 = vunpack.c.l.b16 %v4568
    %v4603 = vunpack.c.h.b16 %v4568
    %v4604 = vunpack.c.l.b16 %v4569
    %v4605 = vunpack.c.h.b16 %v4569
    %v4606 = vunpack.c.l.b16 %v4570
    %v4607 = vunpack.c.h.b16 %v4570
    %v4608 = vunpack.c.l.b16 %v4571
    %v4609 = vunpack.c.h.b16 %v4571
    %v4610 = vunpack.c.l.b16 %v4572
    %v4611 = vunpack.c.h.b16 %v4572
    %v4612 = vlaneseq
    %v4613 = vand.u32 %v4612, 127
    %v4614 = vlaneseq
    %v4615 = vshrl.u32 %v4614, 7
    %v4616 = vsub.s32 %v4613, %v4615
    %v4617 = vrot.slane %v4596, %v4616
    %v4618 = vadd.s32 %v4613, 4294967288
    %v4619 = vlaneseq
    %v4620 = vshrl.u32 %v4619, 7
    %v4621 = vsub.s32 %v4618, %v4620
    %v4622 = vrot.slane %v4597, %v4621
    %vm4623 = vcmask 130112
    %v4624 = vsel %vm4623, %v4622, %v4617
    %v4625 = vadd.s32 %v4613, 4294967280
    %v4626 = vlaneseq
    %v4627 = vshrl.u32 %v4626, 7
    %v4628 = vsub.s32 %v4625, %v4627
    %v4629 = vrot.slane %v4598, %v4628
    %vm4630 = vcmask 195712
    %v4631 = vsel %vm4630, %v4629, %v4624
    %v4632 = vadd.s32 %v4613, 4294967272
    %v4633 = vlaneseq
    %v4634 = vshrl.u32 %v4633, 7
    %v4635 = vsub.s32 %v4632, %v4634
    %v4636 = vrot.slane %v4599, %v4635
    %vm4637 = vcmask 261312
    %v4638 = vsel %vm4637, %v4636, %v4631
    %v4639 = vadd.s32 %v4613, 4294967264
    %v4640 = vlaneseq
    %v4641 = vshrl.u32 %v4640, 7
    %v4642 = vsub.s32 %v4639, %v4641
    %v4643 = vrot.slane %v4600, %v4642
    %vm4644 = vcmask 326912
    %v4645 = vsel %vm4644, %v4643, %v4638
    %v4646 = vadd.s32 %v4613, 4294967256
    %v4647 = vlaneseq
    %v4648 = vshrl.u32 %v4647, 7
    %v4649 = vsub.s32 %v4646, %v4648
    %v4650 = vrot.slane %v4601, %v4649
    %vm4651 = vcmask 392512
    %v4652 = vsel %vm4651, %v4650, %v4645
    %v4653 = vadd.s32 %v4613, 4294967248
    %v4654 = vlaneseq
    %v4655 = vshrl.u32 %v4654, 7
    %v4656 = vsub.s32 %v4653, %v4655
    %v4657 = vrot.slane %v4602, %v4656
    %vm4658 = vcmask 458112
    %v4659 = vsel %vm4658, %v4657, %v4652
    %v4660 = vadd.s32 %v4613, 4294967240
    %v4661 = vlaneseq
    %v4662 = vshrl.u32 %v4661, 7
    %v4663 = vsub.s32 %v4660, %v4662
    %v4664 = vrot.slane %v4603, %v4663
    %vm4665 = vcmask 523712
    %v4666 = vsel %vm4665, %v4664, %v4659
    %v4667 = vlaneseq
    %v4668 = vshrl.u32 %v4667, 7
    %v4669 = vsub.s32 %v4613, %v4668
    %v4670 = vrot.slane %v4604, %v4669
    %v4671 = vlaneseq
    %v4672 = vshrl.u32 %v4671, 7
    %v4673 = vsub.s32 %v4618, %v4672
    %v4674 = vrot.slane %v4605, %v4673
    %v4675 = vsel %vm4623, %v4674, %v4670
    %v4676 = vlaneseq
    %v4677 = vshrl.u32 %v4676, 7
    %v4678 = vsub.s32 %v4625, %v4677
    %v4679 = vrot.slane %v4606, %v4678
    %v4680 = vsel %vm4630, %v4679, %v4675
    %v4681 = vlaneseq
    %v4682 = vshrl.u32 %v4681, 7
    %v4683 = vsub.s32 %v4632, %v4682
    %v4684 = vrot.slane %v4607, %v4683
    %v4685 = vsel %vm4637, %v4684, %v4680
    %v4686 = vlaneseq
    %v4687 = vshrl.u32 %v4686, 7
    %v4688 = vsub.s32 %v4639, %v4687
    %v4689 = vrot.slane %v4608, %v4688
    %v4690 = vsel %vm4644, %v4689, %v4685
    %v4691 = vlaneseq
    %v4692 = vshrl.u32 %v4691, 7
    %v4693 = vsub.s32 %v4646, %v4692
    %v4694 = vrot.slane %v4609, %v4693
    %v4695 = vsel %vm4651, %v4694, %v4690
    %v4696 = vlaneseq
    %v4697 = vshrl.u32 %v4696, 7
    %v4698 = vsub.s32 %v4653, %v4697
    %v4699 = vrot.slane %v4610, %v4698
    %v4700 = vsel %vm4658, %v4699, %v4695
    %v4701 = vlaneseq
    %v4702 = vshrl.u32 %v4701, 7
    %v4703 = vsub.s32 %v4660, %v4702
    %v4704 = vrot.slane %v4611, %v4703
    %v4705 = vsel %vm4665, %v4704, %v4700
    %v4706 = vsel %vm583, %v4705, %v4666
    %v4707 = vpack.c.b16 %v4706, %v4706
    %v4716 = vunpack.c.l.b16 %v4573
    %v4717 = vunpack.c.l.b16 %v4574
    %v4718 = vunpack.c.l.b16 %v4575
    %v4719 = vunpack.c.l.b16 %v4576
    %v4720 = vunpack.c.l.b16 %v4577
    %v4721 = vunpack.c.l.b16 %v4578
    %v4722 = vunpack.c.l.b16 %v4579
    %v4723 = vunpack.c.l.b16 %v4580
    %v4724 = vpack.c.b16 %v4717, %v4716
    %v4725 = vpack.c.b16 %v4719, %v4718
    %v4726 = vpack.c.b16 %v4721, %v4720
    %v4727 = vpack.c.b16 %v4723, %v4722
    %vm4732 = vcmask 523264
    %v4734 = vsel %vm4732, %v4707, 0
    %4736 = vmatprep.subr.bf16.mxu0 0
    %4737 = vmatpush1.bf16.msra.mxu0 %v4724
    %4738 = vmatprep.subr.bf16.mxu0 0
    %4739 = vmatpush1.bf16.msra.mxu0 %v4725
    %4740 = vmatprep.subr.bf16.mxu0 0
    %4741 = vmatpush1.bf16.msra.mxu0 %v4726
    %4742 = vmatprep.subr.bf16.mxu0 0
    %4743 = vmatpush1.bf16.msra.mxu0 %v4727
    %4744 = vmatprep.subr.bf16.mxu0 0
    %4745 = vmatpush1.bf16.msra.mxu0 0
    %4746 = vmatprep.subr.bf16.mxu0 0
    %4747 = vmatpush1.bf16.msra.mxu0 0
    %4748 = vmatprep.subr.bf16.mxu0 0
    %4749 = vmatpush1.bf16.msra.mxu0 0
    %4750 = vmatprep.subr.bf16.mxu0 0
    %4751 = vmatpush1.bf16.msra.mxu0 0
    %4752 = vmatprep.subr.bf16.mxu0 0
    %4753 = vmatpush1.bf16.msra.mxu0 0
    %4754 = vmatprep.subr.bf16.mxu0 0
    %4755 = vmatpush1.bf16.msra.mxu0 0
    %4756 = vmatprep.subr.bf16.mxu0 0
    %4757 = vmatpush1.bf16.msra.mxu0 0
    %4758 = vmatprep.subr.bf16.mxu0 0
    %4759 = vmatpush1.bf16.msra.mxu0 0
    %4760 = vmatprep.subr.bf16.mxu0 0
    %4761 = vmatpush1.bf16.msra.mxu0 0
    %4762 = vmatprep.subr.bf16.mxu0 0
    %4763 = vmatpush1.bf16.msra.mxu0 0
    %4764 = vmatprep.subr.bf16.mxu0 0
    %4765 = vmatpush1.bf16.msra.mxu0 0
    %4766 = vmatprep.subr.bf16.mxu0 0
    %4767 = vmatpush1.bf16.msra.mxu0 0
    %4768 = vmatprep.mubr.bf16.mxu0 0
    %4769 = vmatmul.mubr.bf16.gmra.mrb[0].mxu0 %v4734
    %v4770 = vpop.f32.mrb[0].mxu0
    %v4771 = vadd.f32 %v4586, %v4770
    %v4772 = vpop.f32.mrb[0].mxu0
    %v4773 = vpop.f32.mrb[0].mxu0
    %v4774 = vpop.f32.mrb[0].mxu0
    %4775 = vdwg.mxu0
    %v4776 = vld [vmem:[%s9] sm:$0x1]
    %v4777 = vld [vmem:[%s10] sm:$0x1]
    %vm4778 = vcmask 1041408
    %v4779 = vsel %vm4778, %v4771, 0.0
    %v4780 = vrot.slane %v4779, 4
    %v4781 = vadd.f32 %v4779, %v4780
    %v4782 = vrot.slane %v4781, 2
    %v4783 = vadd.f32 %v4781, %v4782
    %v4784 = vrot.slane %v4783, 1
    %v4785 = vadd.f32 %v4783, %v4784
    %v4786 = vrcp.pop 2.0
    %v4787 = vmul.f32 %v4785, %v4786
    %v4788 = vsub.f32 %v4771, %v4787
    %v4789 = vmul.f32 %v4788, %v4788
    %v4790 = vsel %vm4778, %v4789, 0.0
    %v4791 = vrot.slane %v4790, 4
    %v4792 = vadd.f32 %v4790, %v4791
    %v4793 = vrot.slane %v4792, 2
    %v4794 = vadd.f32 %v4792, %v4793
    %v4795 = vrot.slane %v4794, 1
    %v4796 = vadd.f32 %v4794, %v4795
    %v4797 = vmul.f32 %v4796, %v4786
    %v4798 = vadd.f32 %v4797, 1e-05
    %v4799 = vrsqrt.pop %v4798
    %v4800 = vmul.f32 %v4788, %v4799
    %v4802 = vlaneseq
    %v4803 = vshrl.u32 %v4802, 7
    %v4804 = vsub.s32 0, %v4803
    %v4805 = vrot.slane %v4776, %v4804
    %v4807 = vmul.f32 %v4800, %v4805
    %v4809 = vlaneseq
    %v4810 = vshrl.u32 %v4809, 7
    %v4811 = vsub.s32 0, %v4810
    %v4812 = vrot.slane %v4777, %v4811
    %v4814 = vadd.f32 %v4807, %v4812
    %v4815 = vmax.f32 %v4814, 0.0
    %v4816 = vpack.c.bf16 %v4815, %v4815
    %v4817 = vld [vmem:[#allocation14] sm:$0xf]
    %v4818 = vld [vmem:[#allocation14 + $0x4] sm:$0xf]
    %v4819 = vld [vmem:[#allocation14 + $0x8] sm:$0xf]
    %v4820 = vld [vmem:[#allocation14 + $0xc] sm:$0xf]
    %v4821 = vld [vmem:[#allocation14 + $0x10] sm:$0xf]
    %v4822 = vld [vmem:[#allocation14 + $0x14] sm:$0xf]
    %v4823 = vld [vmem:[#allocation14 + $0x18] sm:$0xf]
    %v4824 = vld [vmem:[#allocation14 + $0x1c] sm:$0xf]
    %v4825 = vld [vmem:[#allocation14 + $0x20] sm:$0xf]
    %v4826 = vld [vmem:[#allocation14 + $0x24] sm:$0xf]
    %v4827 = vld [vmem:[#allocation14 + $0x28] sm:$0xf]
    %v4828 = vld [vmem:[#allocation14 + $0x2c] sm:$0xf]
    %v4829 = vld [vmem:[#allocation14 + $0x30] sm:$0xf]
    %v4830 = vld [vmem:[#allocation14 + $0x34] sm:$0xf]
    %v4831 = vld [vmem:[#allocation14 + $0x38] sm:$0xf]
    %v4832 = vld [vmem:[#allocation14 + $0x3c] sm:$0xf]
    %v4833 = vld [vmem:[%s12] sm:$0x1]
    %v4835 = vlaneseq
    %v4836 = vshrl.u32 %v4835, 7
    %v4837 = vsub.s32 0, %v4836
    %v4838 = vrot.slane %v4833, %v4837
    %v4856 = vunpack.c.l.b16 %v4817
    %v4857 = vunpack.c.l.b16 %v4818
    %v4858 = vunpack.c.l.b16 %v4819
    %v4859 = vunpack.c.l.b16 %v4820
    %v4860 = vunpack.c.l.b16 %v4821
    %v4861 = vunpack.c.l.b16 %v4822
    %v4862 = vunpack.c.l.b16 %v4823
    %v4863 = vunpack.c.l.b16 %v4824
    %v4864 = vunpack.c.l.b16 %v4825
    %v4865 = vunpack.c.l.b16 %v4826
    %v4866 = vunpack.c.l.b16 %v4827
    %v4867 = vunpack.c.l.b16 %v4828
    %v4868 = vunpack.c.l.b16 %v4829
    %v4869 = vunpack.c.l.b16 %v4830
    %v4870 = vunpack.c.l.b16 %v4831
    %v4871 = vunpack.c.l.b16 %v4832
    %v4872 = vpack.c.b16 %v4857, %v4856
    %v4873 = vpack.c.b16 %v4859, %v4858
    %v4874 = vpack.c.b16 %v4861, %v4860
    %v4875 = vpack.c.b16 %v4863, %v4862
    %v4876 = vpack.c.b16 %v4865, %v4864
    %v4877 = vpack.c.b16 %v4867, %v4866
    %v4878 = vpack.c.b16 %v4869, %v4868
    %v4879 = vpack.c.b16 %v4871, %v4870
    %4888 = vmatprep.subr.bf16.mxu0 0
    %4889 = vmatpush1.bf16.msra.mxu0 %v4872
    %4890 = vmatprep.subr.bf16.mxu0 0
    %4891 = vmatpush1.bf16.msra.mxu0 %v4873
    %4892 = vmatprep.subr.bf16.mxu0 0
    %4893 = vmatpush1.bf16.msra.mxu0 %v4874
    %4894 = vmatprep.subr.bf16.mxu0 0
    %4895 = vmatpush1.bf16.msra.mxu0 %v4875
    %4896 = vmatprep.subr.bf16.mxu0 0
    %4897 = vmatpush1.bf16.msra.mxu0 %v4876
    %4898 = vmatprep.subr.bf16.mxu0 0
    %4899 = vmatpush1.bf16.msra.mxu0 %v4877
    %4900 = vmatprep.subr.bf16.mxu0 0
    %4901 = vmatpush1.bf16.msra.mxu0 %v4878
    %4902 = vmatprep.subr.bf16.mxu0 0
    %4903 = vmatpush1.bf16.msra.mxu0 %v4879
    %4904 = vmatprep.subr.bf16.mxu0 0
    %4905 = vmatpush1.bf16.msra.mxu0 0
    %4906 = vmatprep.subr.bf16.mxu0 0
    %4907 = vmatpush1.bf16.msra.mxu0 0
    %4908 = vmatprep.subr.bf16.mxu0 0
    %4909 = vmatpush1.bf16.msra.mxu0 0
    %4910 = vmatprep.subr.bf16.mxu0 0
    %4911 = vmatpush1.bf16.msra.mxu0 0
    %4912 = vmatprep.subr.bf16.mxu0 0
    %4913 = vmatpush1.bf16.msra.mxu0 0
    %4914 = vmatprep.subr.bf16.mxu0 0
    %4915 = vmatpush1.bf16.msra.mxu0 0
    %4916 = vmatprep.subr.bf16.mxu0 0
    %4917 = vmatpush1.bf16.msra.mxu0 0
    %4918 = vmatprep.subr.bf16.mxu0 0
    %4919 = vmatpush1.bf16.msra.mxu0 0
    %4920 = vmatprep.mubr.bf16.mxu0 0
    %4921 = vmatmul.mubr.bf16.gmra.mrb[0].mxu0 %v4816
    %v4922 = vpop.f32.mrb[0].mxu0
    %v4923 = vadd.f32 %v4838, %v4922
    %v4924 = vpop.f32.mrb[0].mxu0
    %v4925 = vpop.f32.mrb[0].mxu0
    %v4926 = vpop.f32.mrb[0].mxu0
    %4927 = vdwg.mxu0
    %v4928 = vld [vmem:[%s13] sm:$0x1]
    %v4929 = vld [vmem:[%s14] sm:$0x1]
    %v4930 = vsel %vm4778, %v4923, 0.0
    %v4931 = vrot.slane %v4930, 4
    %v4932 = vadd.f32 %v4930, %v4931
    %v4933 = vrot.slane %v4932, 2
    %v4934 = vadd.f32 %v4932, %v4933
    %v4935 = vrot.slane %v4934, 1
    %v4936 = vadd.f32 %v4934, %v4935
    %v4937 = vmul.f32 %v4936, %v4786
    %v4938 = vsub.f32 %v4923, %v4937
    %v4939 = vmul.f32 %v4938, %v4938
    %v4940 = vsel %vm4778, %v4939, 0.0
    %v4941 = vrot.slane %v4940, 4
    %v4942 = vadd.f32 %v4940, %v4941
    %v4943 = vrot.slane %v4942, 2
    %v4944 = vadd.f32 %v4942, %v4943
    %v4945 = vrot.slane %v4944, 1
    %v4946 = vadd.f32 %v4944, %v4945
    %v4947 = vmul.f32 %v4946, %v4786
    %v4948 = vadd.f32 %v4947, 1e-05
    %v4949 = vrsqrt.pop %v4948
    %v4950 = vmul.f32 %v4938, %v4949
    %v4952 = vlaneseq
    %v4953 = vshrl.u32 %v4952, 7
    %v4954 = vsub.s32 0, %v4953
    %v4955 = vrot.slane %v4928, %v4954
    %v4957 = vmul.f32 %v4950, %v4955
    %v4959 = vlaneseq
    %v4960 = vshrl.u32 %v4959, 7
    %v4961 = vsub.s32 0, %v4960
    %v4962 = vrot.slane %v4929, %v4961
    %v4964 = vadd.f32 %v4957, %v4962
    %v4965 = vmax.f32 %v4964, 0.0
    %v4966 = vpack.c.bf16 %v4965, %v4965
    %v4967 = vld [vmem:[#allocation16] sm:$0xf]
    %v4968 = vld [vmem:[#allocation16 + $0x4] sm:$0xf]
    %v4969 = vld [vmem:[#allocation16 + $0x8] sm:$0xf]
    %v4970 = vld [vmem:[#allocation16 + $0xc] sm:$0xf]
    %v4971 = vld [vmem:[#allocation16 + $0x10] sm:$0xf]
    %v4972 = vld [vmem:[#allocation16 + $0x14] sm:$0xf]
    %v4973 = vld [vmem:[#allocation16 + $0x18] sm:$0xf]
    %v4974 = vld [vmem:[#allocation16 + $0x1c] sm:$0xf]
    %v4975 = vld [vmem:[#allocation16 + $0x20] sm:$0xf]
    %v4976 = vld [vmem:[#allocation16 + $0x24] sm:$0xf]
    %v4977 = vld [vmem:[#allocation16 + $0x28] sm:$0xf]
    %v4978 = vld [vmem:[#allocation16 + $0x2c] sm:$0xf]
    %v4979 = vld [vmem:[#allocation16 + $0x30] sm:$0xf]
    %v4980 = vld [vmem:[#allocation16 + $0x34] sm:$0xf]
    %v4981 = vld [vmem:[#allocation16 + $0x38] sm:$0xf]
    %v4982 = vld [vmem:[#allocation16 + $0x3c] sm:$0xf]
    %v4983 = vld [vmem:[%s16] sm:$0x1]
    %v4985 = vlaneseq
    %v4986 = vshrl.u32 %v4985, 7
    %v4987 = vsub.s32 0, %v4986
    %v4988 = vrot.slane %v4983, %v4987
    %v5006 = vunpack.c.l.b16 %v4967
    %v5007 = vunpack.c.l.b16 %v4968
    %v5008 = vunpack.c.l.b16 %v4969
    %v5009 = vunpack.c.l.b16 %v4970
    %v5010 = vunpack.c.l.b16 %v4971
    %v5011 = vunpack.c.l.b16 %v4972
    %v5012 = vunpack.c.l.b16 %v4973
    %v5013 = vunpack.c.l.b16 %v4974
    %v5014 = vunpack.c.l.b16 %v4975
    %v5015 = vunpack.c.l.b16 %v4976
    %v5016 = vunpack.c.l.b16 %v4977
    %v5017 = vunpack.c.l.b16 %v4978
    %v5018 = vunpack.c.l.b16 %v4979
    %v5019 = vunpack.c.l.b16 %v4980
    %v5020 = vunpack.c.l.b16 %v4981
    %v5021 = vunpack.c.l.b16 %v4982
    %v5022 = vpack.c.b16 %v5007, %v5006
    %v5023 = vpack.c.b16 %v5009, %v5008
    %v5024 = vpack.c.b16 %v5011, %v5010
    %v5025 = vpack.c.b16 %v5013, %v5012
    %v5026 = vpack.c.b16 %v5015, %v5014
    %v5027 = vpack.c.b16 %v5017, %v5016
    %v5028 = vpack.c.b16 %v5019, %v5018
    %v5029 = vpack.c.b16 %v5021, %v5020
    %5038 = vmatprep.subr.bf16.mxu0 0
    %5039 = vmatpush1.bf16.msra.mxu0 %v5022
    %5040 = vmatprep.subr.bf16.mxu0 0
    %5041 = vmatpush1.bf16.msra.mxu0 %v5023
    %5042 = vmatprep.subr.bf16.mxu0 0
    %5043 = vmatpush1.bf16.msra.mxu0 %v5024
    %5044 = vmatprep.subr.bf16.mxu0 0
    %5045 = vmatpush1.bf16.msra.mxu0 %v5025
    %5046 = vmatprep.subr.bf16.mxu0 0
    %5047 = vmatpush1.bf16.msra.mxu0 %v5026
    %5048 = vmatprep.subr.bf16.mxu0 0
    %5049 = vmatpush1.bf16.msra.mxu0 %v5027
    %5050 = vmatprep.subr.bf16.mxu0 0
    %5051 = vmatpush1.bf16.msra.mxu0 %v5028
    %5052 = vmatprep.subr.bf16.mxu0 0
    %5053 = vmatpush1.bf16.msra.mxu0 %v5029
    %5054 = vmatprep.subr.bf16.mxu0 0
    %5055 = vmatpush1.bf16.msra.mxu0 0
    %5056 = vmatprep.subr.bf16.mxu0 0
    %5057 = vmatpush1.bf16.msra.mxu0 0
    %5058 = vmatprep.subr.bf16.mxu0 0
    %5059 = vmatpush1.bf16.msra.mxu0 0
    %5060 = vmatprep.subr.bf16.mxu0 0
    %5061 = vmatpush1.bf16.msra.mxu0 0
    %5062 = vmatprep.subr.bf16.mxu0 0
    %5063 = vmatpush1.bf16.msra.mxu0 0
    %5064 = vmatprep.subr.bf16.mxu0 0
    %5065 = vmatpush1.bf16.msra.mxu0 0
    %5066 = vmatprep.subr.bf16.mxu0 0
    %5067 = vmatpush1.bf16.msra.mxu0 0
    %5068 = vmatprep.subr.bf16.mxu0 0
    %5069 = vmatpush1.bf16.msra.mxu0 0
    %5070 = vmatprep.mubr.bf16.mxu0 0
    %5071 = vmatmul.mubr.bf16.gmra.mrb[0].mxu0 %v4966
    %v5072 = vpop.f32.mrb[0].mxu0
    %v5073 = vadd.f32 %v4988, %v5072
    %v5074 = vpop.f32.mrb[0].mxu0
    %v5075 = vpop.f32.mrb[0].mxu0
    %v5076 = vpop.f32.mrb[0].mxu0
    %5077 = vdwg.mxu0
    %5078 = vst [vmem:[#allocation17] sm:$0x3] %v5073
    // Predicated region
    $region106: #{tpu_custom_call.1} parent=1 // pred_check
      _
    $region107: #{tpu_custom_call.1} parent=1 // pred_check_branch
      %5080 = sbr.rel (0) target = $region109
    $region108: #{tpu_custom_call.1} parent=1 // pred_region
      %s5082 = ssub.s32 32, 32
      %5083 = vsyncadd [#allocation4], %s5082
      %s5085 = sshll.u32 [#allocation17], 4
      %s5086 = int_to_ptr.vmem [resolvable:$true] %s5085
      %5088 = dma.vmem_to_hbm [thread:$0]  %s5086, 32, %s17, [#allocation4]
    $region109: #{tpu_custom_call.1} parent=1 // pred_fallthru
      _
    // Predicated region
    $region110: #{tpu_custom_call.1} parent=1 // pred_check
      _
    $region111: #{tpu_custom_call.1} parent=1 // pred_check_branch
      %5090 = sbr.rel (0) target = $region113
    $region112: #{tpu_custom_call.1} parent=1 // pred_region
      %5091 = dma.done [#allocation4], 32
    $region113: #{tpu_custom_call.1} parent=1 // pred_fallthru
      _
    %5092 = vsyncpa [#allocation3], 1
    %5093 = vsyncpa [#allocation6], 1
    %5094 = vsyncpa [#allocation9], 1
    %5095 = vsyncpa [#allocation12], 1
    %5096 = vsyncpa [#allocation15], 1
    %5097 = vsyncpa [#allocation4], 1

</llo_original>
